<compile_context>
chip_gen: v7x
topology: tpu7x:2x2x1
jax: 0.10.0
libtpu: 0.0.40
codegen_flags: <defaults>
</compile_context>

<pallas_src>
import functools

import jax
import jax.numpy as jnp
from jax.experimental import pallas as pl
from jax.experimental.pallas import tpu as pltpu

BN_EPS = 1e-5
LRELU_SLOPE = 0.2               # DCGAN 'lrelu'
LANES = 128                     # pad Cout to a multiple of this (lane-dense)
TILE_R_CAP = 512                # row tile: ~85% of HBM roofline on v5e/v6e
VMEM_LIMIT = 48 * 1024 * 1024   # demo footprint <1 MiB; keeps v7x headroom


# ---------------------------------------------------------------------------
# Pallas kernels
# ---------------------------------------------------------------------------
def conv_bn_lrelu_kernel(p_ref, w_ref, gamma_ref, beta_ref, o_ref,
                         y_scr, stats_scr, *, inv_n, tile_r, nt):
    """Fused Conv2dBlock: im2col matmul + one-pass BN stats + BN + LeakyReLU.

    Grid: (nt,) over row tiles of the im2col patch matrix ("arbitrary": the
    stats scratch and the resident output carry state across steps).

    p_ref:     (TR, K)   bf16 patch tile, K = kh*kw*Cin
    w_ref:     (K, Cp)   bf16 folded conv weight, Cp = Cout padded to 128
    gamma_ref: (1, Cp)   f32 BN weight  (padded lanes = 1)
    beta_ref:  (1, Cp)   f32 BN bias    (padded lanes = 0)
    o_ref:     (Rp, Cp)  bf16 activation output, resident across the grid
    y_scr:     (Rp, Cp)  f32 VMEM scratch holding the pre-BN conv output
    stats_scr: (2, Cp)   f32 [sum(y); sum(y*y)] over ALL rows (padded rows
                         are all-zero patches, so they contribute nothing)

    Conv bias is omitted: with batch-statistics BN it cancels exactly.
    """
    i = pl.program_id(0)

    @pl.when(i == 0)
    def _init():
        stats_scr[...] = jnp.zeros_like(stats_scr)

    # --- pass 1: conv tile (bf16 MXU, f32 accumulation) + global stats ----
    y = jnp.dot(p_ref[...], w_ref[...], preferred_element_type=jnp.float32)
    off = pl.multiple_of(i * tile_r, tile_r)
    y_scr[pl.ds(off, tile_r), :] = y
    stats_scr[...] += jnp.concatenate(
        [jnp.sum(y, axis=0, keepdims=True),
         jnp.sum(y * y, axis=0, keepdims=True)], axis=0)

    # --- pass 2 (last step only): hoisted scale/shift, BN + LReLU, bf16 ---
    @pl.when(i == nt - 1)
    def _finalize():
        stats = stats_scr[...]
        mean = stats[0:1, :] * inv_n
        var = jnp.maximum(stats[1:2, :] * inv_n - mean * mean, 0.0)  # biased
        scale = gamma_ref[...] * jax.lax.rsqrt(var + BN_EPS)
        shift = beta_ref[...] - mean * scale

        @pl.loop(0, nt)
        def _norm(t):
            toff = pl.multiple_of(t * tile_r, tile_r)
            z = y_scr[pl.ds(toff, tile_r), :] * scale + shift
            o_ref[pl.ds(toff, tile_r), :] = jnp.maximum(
                z, LRELU_SLOPE * z).astype(o_ref.dtype)


def conv_bn_lrelu_head_kernel(p_ref, w_ref, gamma_ref, beta_ref,
                              wh_ref, bh_ref, o_ref, *, inv_n, n, g):
    """Last Conv2dBlock fused with the final Conv2d(out_c, 1, k) + Flatten.

    p_ref:  (R, K)   bf16 patches of the last block, R = N*k*k (tiny)
    wh_ref: (R, Cp)  f32 head conv weight tiled per sample ((kh, kw) rows)
    bh_ref: (1, 1)   f32 head bias
    o_ref:  (N, 1)   f32 logits (== Flatten(Conv2d(out_c, 1, k)(act)))
    """
    y = jnp.dot(p_ref[...], w_ref[...], preferred_element_type=jnp.float32)
    s1 = jnp.sum(y, axis=0, keepdims=True)
    s2 = jnp.sum(y * y, axis=0, keepdims=True)
    mean = s1 * inv_n
    var = jnp.maximum(s2 * inv_n - mean * mean, 0.0)
    scale = gamma_ref[...] * jax.lax.rsqrt(var + BN_EPS)
    shift = beta_ref[...] - mean * scale
    z = y * scale + shift
    a = jnp.maximum(z, LRELU_SLOPE * z)                    # (R, Cp) f32
    prod = a * wh_ref[...]                                 # (R, Cp)

    # One-hot row->sample selection built in-kernel (no extra HBM input).
    r = prod.shape[0]
    col = jax.lax.broadcasted_iota(jnp.int32, (n, r), 1)
    row = jax.lax.broadcasted_iota(jnp.int32, (n, r), 0)
    sel = jnp.logical_and(col >= row * g, col < (row + 1) * g)
    per_sample = jnp.dot(sel.astype(jnp.float32), prod,
                         preferred_element_type=jnp.float32)   # (N, Cp)
    o_ref[...] = jnp.sum(per_sample, axis=1, keepdims=True) + bh_ref[...]


# ---------------------------------------------------------------------------
# pallas_call wrappers
# ---------------------------------------------------------------------------
def _full_spec(shape):
    return pl.BlockSpec(shape, lambda: (0,) * len(shape))


def _round_up(x, m):
    return (x + m - 1) // m * m


def _pad_cols(a, cp, value=0.0):
    pad = cp - a.shape[-1]
    if pad == 0:
        return a
    return jnp.pad(a, ((0, 0), (0, pad)), constant_values=value)


def _call_conv_block(patches, w, gamma, beta, tile_r, n_rows_real):
    """One fused pallas_call per Conv2dBlock (conv + BN stats + BN + LReLU)."""
    r_pad, k = patches.shape
    cp = w.shape[1]
    nt = r_pad // tile_r
    kern = functools.partial(conv_bn_lrelu_kernel,
                             inv_n=1.0 / n_rows_real, tile_r=tile_r, nt=nt)
    return pl.pallas_call(
        kern,
        grid=(nt,),
        in_specs=[pl.BlockSpec((tile_r, k), lambda i: (i, 0)),
                  pl.BlockSpec((k, cp), lambda i: (0, 0)),
                  pl.BlockSpec((1, cp), lambda i: (0, 0)),
                  pl.BlockSpec((1, cp), lambda i: (0, 0))],
        out_specs=pl.BlockSpec((r_pad, cp), lambda i: (0, 0)),   # resident
        out_shape=jax.ShapeDtypeStruct((r_pad, cp), jnp.bfloat16),
        scratch_shapes=[pltpu.VMEM((r_pad, cp), jnp.float32),    # pre-BN y
                        pltpu.VMEM((2, cp), jnp.float32)],       # sum / sumsq
        compiler_params=pltpu.CompilerParams(
            # stats + resident output carry state across R tiles.
            # TODO(synk): for v7x megacore, switch to per-tile partial stats
            # so this axis can be "parallel"; irrelevant at nt == 1.
            dimension_semantics=("arbitrary",),
            vmem_limit_bytes=VMEM_LIMIT),
        cost_estimate=pl.CostEstimate(
            flops=2 * r_pad * k * cp + 10 * r_pad * cp,
            transcendentals=cp,
            bytes_accessed=2 * r_pad * k + 2 * k * cp + 2 * r_pad * cp + 16 * cp),
    )(patches, w, gamma, beta)


def _call_conv_head(patches, w, gamma, beta, wh, bh, n, g):
    r, k = patches.shape
    cp = w.shape[1]
    kern = functools.partial(conv_bn_lrelu_head_kernel,
                             inv_n=1.0 / r, n=n, g=g)
    return pl.pallas_call(
        kern,
        in_specs=[_full_spec(patches.shape), _full_spec(w.shape),
                  _full_spec(gamma.shape), _full_spec(beta.shape),
                  _full_spec(wh.shape), _full_spec(bh.shape)],
        out_specs=_full_spec((n, 1)),
        out_shape=jax.ShapeDtypeStruct((n, 1), jnp.float32),
        compiler_params=pltpu.CompilerParams(vmem_limit_bytes=VMEM_LIMIT),
        cost_estimate=pl.CostEstimate(
            flops=2 * r * k * cp + 2 * n * r * cp + 12 * r * cp,
            transcendentals=cp,
            bytes_accessed=2 * r * k + 2 * k * cp + 4 * r * cp + 16 * cp + 4 * n),
    )(patches, w, gamma, beta, wh, bh)


# ---------------------------------------------------------------------------
# Glue: im2col patch extraction (pure data movement, plain JAX)
# ---------------------------------------------------------------------------
def extract_patches(x, k, s, p):
    """x: (N, H, W, C) -> (N*Ho*Wo, k*k*C), patch element order (kh, kw, Cin)."""
    if p:
        x = jnp.pad(x, ((0, 0), (p, p), (p, p), (0, 0)))
    n, h, w, c = x.shape
    ho = (h - k) // s + 1
    wo = (w - k) // s + 1
    cols = []
    for dh in range(k):
        for dw in range(k):
            cols.append(x[:, dh:dh + s * ho:s, dw:dw + s * wo:s, :])
    pat = jnp.stack(cols, axis=3)  # (N, Ho, Wo, k*k, C)
    return pat.reshape(n * ho * wo, k * k * c), (n, ho, wo)


# ---------------------------------------------------------------------------
# Discriminator: parameter init + forward
# ---------------------------------------------------------------------------
def init_params(key, n_layers=4, n_filters=16, channels=3, resolution=(32, 32)):
    params = {"blocks": []}
    in_c, out_c = channels, n_filters
    for i in range(n_layers):
        if i > 0:
            in_c = out_c
            out_c = min(2 * out_c, 1024)
        key, kw_, kg_, kb_ = jax.random.split(key, 4)
        # Weight stored as (kh, kw, Cin, Cout) folded to (kh*kw*Cin, Cout),
        # matching the (kh, kw, Cin) patch-element order of extract_patches.
        w = 0.02 * jax.random.normal(kw_, (4, 4, in_c, out_c), jnp.float32)
        gamma = 1.0 + 0.1 * jax.random.normal(kg_, (1, out_c), jnp.float32)
        beta = 0.1 * jax.random.normal(kb_, (1, out_c), jnp.float32)
        params["blocks"].append(
            {"w": w.reshape(4 * 4 * in_c, out_c), "gamma": gamma, "beta": beta})
    final_k = max(resolution[0] // (2 ** n_layers), 1)
    key, kw_, kb_ = jax.random.split(key, 3)
    wf = 0.02 * jax.random.normal(kw_, (final_k, final_k, out_c), jnp.float32)
    bf = 0.1 * jax.random.normal(kb_, (1, 1), jnp.float32)
    # Head weight kept as (kh*kw, Cout_last); the kernel size itself is
    # re-derived from static activation shapes in the forward (no Python
    # ints inside the jitted params pytree).
    params["head"] = {"w": wf.reshape(final_k * final_k, out_c), "b": bf}
    return params


@jax.jit
def discriminator_forward(params, x_nchw):
    # NCHW (PyTorch) -> NHWC; activations & patch matrices travel as bf16.
    x = jnp.transpose(x_nchw, (0, 2, 3, 1)).astype(jnp.bfloat16)
    n_blocks = len(params["blocks"])
    out = None
    for i, blk in enumerate(params["blocks"]):
        patches, (n, ho, wo) = extract_patches(x, k=4, s=2, p=1)
        r = patches.shape[0]
        c = blk["w"].shape[1]
        cp = _round_up(c, LANES)                     # lane-dense output width
        # TODO(synk): early blocks pad Cout 16/32/64 -> 128; a Wo*Cout lane
        # packing would avoid the zero-lane waste if they ever dominate.
        w = _pad_cols(blk["w"], cp).astype(jnp.bfloat16)
        gamma = _pad_cols(blk["gamma"], cp, 1.0)
        beta = _pad_cols(blk["beta"], cp, 0.0)

        if i < n_blocks - 1:
            # Pad R up to a tile multiple (zero patch rows contribute nothing
            # to the BN statistics since inv_n uses the real row count).
            tile_r = min(TILE_R_CAP, _round_up(r, 8))
            r_pad = _round_up(r, tile_r)
            if r_pad != r:
                patches = jnp.pad(patches, ((0, r_pad - r), (0, 0)))
            a = _call_conv_block(patches, w, gamma, beta, tile_r, r)
            # TODO(synk): the [:, :c] channel un-pad is an extra XLA copy; it
            # disappears once im2col is moved in-kernel.
            x = a[:r, :c].reshape(n, ho, wo, c)
        else:
            # Final Conv2d(out_c, 1, k) + Flatten fused into the last block's
            # kernel; the head spans the whole remaining spatial extent.
            # TODO(synk): assumes resolution divisible by 2**n_layers
            # (standard DCGAN setup).
            g = ho * wo
            wh = jnp.tile(params["head"]["w"].astype(jnp.float32), (n, 1))
            wh = _pad_cols(wh, cp, 0.0)              # (r, cp)
            out = _call_conv_head(patches, w, gamma, beta, wh,
                                  params["head"]["b"], n, g)
    # TODO(synk): only training-mode BatchNorm (batch statistics) is modeled;
    # eval-mode running-stat buffers are not reproduced.
    return out


if __name__ == "__main__":
    key = jax.random.PRNGKey(0)
    k_param, k_in = jax.random.split(key)

    N_LAYERS, N_FILTERS, CHANNELS, RES = 4, 16, 3, (32, 32)
    params = init_params(k_param, N_LAYERS, N_FILTERS, CHANNELS, RES)

    # Small, module-consistent input: batch=2, NCHW (2, 3, 32, 32)
    x = jax.random.normal(k_in, (2, CHANNELS, RES[0], RES[1]), jnp.float32)

    out = discriminator_forward(params, x)
    out = jax.block_until_ready(out)
    assert out.shape == (2, 1), out.shape
    print("KERNEL_OK")
</pallas_src>

<mosaic_0001>
module attributes {stable_mosaic.version = 11 : i64} {
  func.func @conv_bn_lrelu_kernel(%arg0: i32, %arg1: memref<512x48xbf16, #tpu.memory_space<vmem>>, %arg2: memref<48x128xbf16, #tpu.memory_space<vmem>>, %arg3: memref<1x128xf32, #tpu.memory_space<vmem>>, %arg4: memref<1x128xf32, #tpu.memory_space<vmem>>, %arg5: memref<512x128xbf16, #tpu.memory_space<vmem>>, %arg6: memref<512x128xf32, #tpu.memory_space<vmem>>, %arg7: memref<2x128xf32, #tpu.memory_space<vmem>>) attributes {dimension_semantics = [#tpu.dimension_semantics<arbitrary>], iteration_bounds = array<i64: 1>, scalar_prefetch = 0 : i64, scratch_operands = 2 : i64, tpu.core_type = #tpu.core_type<tc>, window_params = [{transform_indices = @transform_0, window_bounds = array<i64: 512, 48>}, {pipeline_mode = #tpu.pipeline_mode<synchronous>, transform_indices = @transform_1, window_bounds = array<i64: 48, 128>}, {pipeline_mode = #tpu.pipeline_mode<synchronous>, transform_indices = @transform_2, window_bounds = array<i64: 1, 128>}, {pipeline_mode = #tpu.pipeline_mode<synchronous>, transform_indices = @transform_3, window_bounds = array<i64: 1, 128>}, {pipeline_mode = #tpu.pipeline_mode<synchronous>, transform_indices = @transform_4, window_bounds = array<i64: 512, 128>}]} {
    %c0_i32 = arith.constant 0 : i32
    %0 = arith.cmpi eq, %arg0, %c0_i32 : i32
    %1 = arith.extui %0 : i1 to i32
    %c0_i32_0 = arith.constant 0 : i32
    %2 = arith.cmpi ne, %1, %c0_i32_0 : i32
    scf.if %2 {
      %cst_13 = arith.constant 0.000000e+00 : f32
      %22 = vector.broadcast %cst_13 : f32 to vector<2x128xf32>
      %c0_14 = arith.constant 0 : index
      %c0_15 = arith.constant 0 : index
      %23 = vector.load %arg7[%c0_14, %c0_15] : memref<2x128xf32, #tpu.memory_space<vmem>>, vector<2x128xf32>
      tpu.vector_store %arg7[%c0_14, %c0_15], %22 {strides = array<i32>} : memref<2x128xf32, #tpu.memory_space<vmem>>, vector<2x128xf32>,
    } else {
    }
    %c0 = arith.constant 0 : index
    %c0_1 = arith.constant 0 : index
    %3 = vector.load %arg1[%c0, %c0_1] : memref<512x48xbf16, #tpu.memory_space<vmem>>, vector<512x48xbf16>
    %c0_2 = arith.constant 0 : index
    %c0_3 = arith.constant 0 : index
    %4 = vector.load %arg2[%c0_2, %c0_3] : memref<48x128xbf16, #tpu.memory_space<vmem>>, vector<48x128xbf16>
    %cst = arith.constant dense<0.000000e+00> : vector<512x128xf32>
    %5 = tpu.matmul %3, %4, %cst {dimension_numbers = #tpu.dot_dimension_numbers<[1], [0], [0], [1], [0, 0, 1, 1], [], []>} : vector<512x48xbf16>, vector<48x128xbf16>, vector<512x128xf32> -> vector<512x128xf32>
    %c512_i32 = arith.constant 512 : i32
    %6 = arith.muli %arg0, %c512_i32 : i32
    %7 = tpu.assume_multiple %6, 512 : i32
    %8 = arith.index_cast %7 : i32 to index
    %c0_4 = arith.constant 0 : index
    %9 = vector.load %arg6[%8, %c0_4] : memref<512x128xf32, #tpu.memory_space<vmem>>, vector<512x128xf32>
    tpu.vector_store %arg6[%8, %c0_4], %5 {strides = array<i32>} : memref<512x128xf32, #tpu.memory_space<vmem>>, vector<512x128xf32>,
    %c0_5 = arith.constant 0 : index
    %c0_6 = arith.constant 0 : index
    %10 = vector.load %arg7[%c0_5, %c0_6] : memref<2x128xf32, #tpu.memory_space<vmem>>, vector<2x128xf32>
    %cst_7 = arith.constant dense<0.000000e+00> : vector<128xf32>
    %11 = vector.multi_reduction <add>, %5, %cst_7 [0] : vector<512x128xf32> to vector<128xf32>
    %12 = vector.shape_cast %11 : vector<128xf32> to vector<1x128xf32>
    %13 = arith.mulf %5, %5 : vector<512x128xf32>
    %cst_8 = arith.constant dense<0.000000e+00> : vector<128xf32>
    %14 = vector.multi_reduction <add>, %13, %cst_8 [0] : vector<512x128xf32> to vector<128xf32>
    %15 = vector.shape_cast %14 : vector<128xf32> to vector<1x128xf32>
    %16 = tpu.concatenate %12, %15 in 0 : vector<1x128xf32>, vector<1x128xf32> -> vector<2x128xf32>
    %17 = arith.addf %10, %16 : vector<2x128xf32>
    %c0_9 = arith.constant 0 : index
    %c0_10 = arith.constant 0 : index
    %18 = vector.load %arg7[%c0_9, %c0_10] : memref<2x128xf32, #tpu.memory_space<vmem>>, vector<2x128xf32>
    tpu.vector_store %arg7[%c0_9, %c0_10], %17 {strides = array<i32>} : memref<2x128xf32, #tpu.memory_space<vmem>>, vector<2x128xf32>,
    %c0_i32_11 = arith.constant 0 : i32
    %19 = arith.cmpi eq, %arg0, %c0_i32_11 : i32
    %20 = arith.extui %19 : i1 to i32
    %c0_i32_12 = arith.constant 0 : i32
    %21 = arith.cmpi ne, %20, %c0_i32_12 : i32
    scf.if %21 {
      %c0_13 = arith.constant 0 : index
      %c0_14 = arith.constant 0 : index
      %22 = vector.load %arg7[%c0_13, %c0_14] : memref<2x128xf32, #tpu.memory_space<vmem>>, vector<2x128xf32>
      %23 = vector.extract_strided_slice %22 {offsets = [0, 0], sizes = [1, 128], strides = [1, 1]} : vector<2x128xf32> to vector<1x128xf32>
      %cst_15 = arith.constant 0.001953125 : f32
      %24 = vector.broadcast %cst_15 : f32 to vector<1x128xf32>
      %25 = arith.mulf %23, %24 : vector<1x128xf32>
      %26 = vector.extract_strided_slice %22 {offsets = [1, 0], sizes = [1, 128], strides = [1, 1]} : vector<2x128xf32> to vector<1x128xf32>
      %cst_16 = arith.constant 0.001953125 : f32
      %27 = vector.broadcast %cst_16 : f32 to vector<1x128xf32>
      %28 = arith.mulf %26, %27 : vector<1x128xf32>
      %29 = arith.mulf %25, %25 : vector<1x128xf32>
      %30 = arith.subf %28, %29 : vector<1x128xf32>
      %cst_17 = arith.constant 0.000000e+00 : f32
      %31 = vector.broadcast %cst_17 : f32 to vector<1x128xf32>
      %32 = arith.maximumf %30, %31 : vector<1x128xf32>
      %c0_18 = arith.constant 0 : index
      %c0_19 = arith.constant 0 : index
      %33 = vector.load %arg3[%c0_18, %c0_19] : memref<1x128xf32, #tpu.memory_space<vmem>>, vector<1x128xf32>
      %cst_20 = arith.constant 9.99999974E-6 : f32
      %34 = vector.broadcast %cst_20 : f32 to vector<1x128xf32>
      %35 = arith.addf %32, %34 : vector<1x128xf32>
      %36 = math.rsqrt %35 : vector<1x128xf32>
      %37 = arith.mulf %33, %36 : vector<1x128xf32>
      %c0_21 = arith.constant 0 : index
      %c0_22 = arith.constant 0 : index
      %38 = vector.load %arg4[%c0_21, %c0_22] : memref<1x128xf32, #tpu.memory_space<vmem>>, vector<1x128xf32>
      %39 = arith.mulf %25, %37 : vector<1x128xf32>
      %40 = arith.subf %38, %39 : vector<1x128xf32>
      %c0_i32_23 = arith.constant 0 : i32
      %c1_i32 = arith.constant 1 : i32
      %41 = arith.muli %c0_i32_23, %c1_i32 : i32
      %c0_i32_24 = arith.constant 0 : i32
      %42 = arith.addi %c0_i32_24, %41 : i32
      %c512_i32_25 = arith.constant 512 : i32
      %43 = arith.muli %42, %c512_i32_25 : i32
      %44 = tpu.assume_multiple %43, 512 : i32
      %45 = arith.index_cast %44 : i32 to index
      %c0_26 = arith.constant 0 : index
      %46 = vector.load %arg6[%45, %c0_26] : memref<512x128xf32, #tpu.memory_space<vmem>>, vector<512x128xf32>
      %47 = vector.broadcast %37 : vector<1x128xf32> to vector<512x128xf32>
      %48 = arith.mulf %46, %47 : vector<512x128xf32>
      %49 = vector.broadcast %40 : vector<1x128xf32> to vector<512x128xf32>
      %50 = arith.addf %48, %49 : vector<512x128xf32>
      %cst_27 = arith.constant 2.000000e-01 : f32
      %51 = vector.broadcast %cst_27 : f32 to vector<512x128xf32>
      %52 = arith.mulf %51, %50 : vector<512x128xf32>
      %53 = arith.maximumf %50, %52 : vector<512x128xf32>
      %54 = arith.truncf %53 : vector<512x128xf32> to vector<512x128xbf16>
      %55 = arith.index_cast %44 : i32 to index
      %c0_28 = arith.constant 0 : index
      %56 = vector.load %arg5[%55, %c0_28] : memref<512x128xbf16, #tpu.memory_space<vmem>>, vector<512x128xbf16>
      tpu.vector_store %arg5[%55, %c0_28], %54 {strides = array<i32>} : memref<512x128xbf16, #tpu.memory_space<vmem>>, vector<512x128xbf16>,
      %c1_i32_29 = arith.constant 1 : i32
    } else {
    }
    return
  }
  func.func @transform_0(%arg0: i32) -> (i32, i32) {
    %c0_i32 = arith.constant 0 : i32
    %c0_i32_0 = arith.constant 0 : i32
    return %arg0, %c0_i32 : i32, i32
  }
  func.func @transform_1(%arg0: i32) -> (i32, i32) {
    %c0_i32 = arith.constant 0 : i32
    %c0_i32_0 = arith.constant 0 : i32
    %c0_i32_1 = arith.constant 0 : i32
    return %c0_i32, %c0_i32_0 : i32, i32
  }
  func.func @transform_2(%arg0: i32) -> (i32, i32) {
    %c0_i32 = arith.constant 0 : i32
    %c0_i32_0 = arith.constant 0 : i32
    %c0_i32_1 = arith.constant 0 : i32
    return %c0_i32, %c0_i32_0 : i32, i32
  }
  func.func @transform_3(%arg0: i32) -> (i32, i32) {
    %c0_i32 = arith.constant 0 : i32
    %c0_i32_0 = arith.constant 0 : i32
    %c0_i32_1 = arith.constant 0 : i32
    return %c0_i32, %c0_i32_0 : i32, i32
  }
  func.func @transform_4(%arg0: i32) -> (i32, i32) {
    %c0_i32 = arith.constant 0 : i32
    %c0_i32_0 = arith.constant 0 : i32
    %c0_i32_1 = arith.constant 0 : i32
    return %c0_i32, %c0_i32_0 : i32, i32
  }
}

module attributes {stable_mosaic.version = 11 : i64} {
  func.func @conv_bn_lrelu_kernel(%arg0: i32, %arg1: memref<128x256xbf16, #tpu.memory_space<vmem>>, %arg2: memref<256x128xbf16, #tpu.memory_space<vmem>>, %arg3: memref<1x128xf32, #tpu.memory_space<vmem>>, %arg4: memref<1x128xf32, #tpu.memory_space<vmem>>, %arg5: memref<128x128xbf16, #tpu.memory_space<vmem>>, %arg6: memref<128x128xf32, #tpu.memory_space<vmem>>, %arg7: memref<2x128xf32, #tpu.memory_space<vmem>>) attributes {dimension_semantics = [#tpu.dimension_semantics<arbitrary>], iteration_bounds = array<i64: 1>, scalar_prefetch = 0 : i64, scratch_operands = 2 : i64, tpu.core_type = #tpu.core_type<tc>, window_params = [{transform_indices = @transform_0, window_bounds = array<i64: 128, 256>}, {pipeline_mode = #tpu.pipeline_mode<synchronous>, transform_indices = @transform_1, window_bounds = array<i64: 256, 128>}, {pipeline_mode = #tpu.pipeline_mode<synchronous>, transform_indices = @transform_2, window_bounds = array<i64: 1, 128>}, {pipeline_mode = #tpu.pipeline_mode<synchronous>, transform_indices = @transform_3, window_bounds = array<i64: 1, 128>}, {pipeline_mode = #tpu.pipeline_mode<synchronous>, transform_indices = @transform_4, window_bounds = array<i64: 128, 128>}]} {
    %c0_i32 = arith.constant 0 : i32
    %0 = arith.cmpi eq, %arg0, %c0_i32 : i32
    %1 = arith.extui %0 : i1 to i32
    %c0_i32_0 = arith.constant 0 : i32
    %2 = arith.cmpi ne, %1, %c0_i32_0 : i32
    scf.if %2 {
      %cst_13 = arith.constant 0.000000e+00 : f32
      %22 = vector.broadcast %cst_13 : f32 to vector<2x128xf32>
      %c0_14 = arith.constant 0 : index
      %c0_15 = arith.constant 0 : index
      %23 = vector.load %arg7[%c0_14, %c0_15] : memref<2x128xf32, #tpu.memory_space<vmem>>, vector<2x128xf32>
      tpu.vector_store %arg7[%c0_14, %c0_15], %22 {strides = array<i32>} : memref<2x128xf32, #tpu.memory_space<vmem>>, vector<2x128xf32>,
    } else {
    }
    %c0 = arith.constant 0 : index
    %c0_1 = arith.constant 0 : index
    %3 = vector.load %arg1[%c0, %c0_1] : memref<128x256xbf16, #tpu.memory_space<vmem>>, vector<128x256xbf16>
    %c0_2 = arith.constant 0 : index
    %c0_3 = arith.constant 0 : index
    %4 = vector.load %arg2[%c0_2, %c0_3] : memref<256x128xbf16, #tpu.memory_space<vmem>>, vector<256x128xbf16>
    %cst = arith.constant dense<0.000000e+00> : vector<128x128xf32>
    %5 = tpu.matmul %3, %4, %cst {dimension_numbers = #tpu.dot_dimension_numbers<[1], [0], [0], [1], [0, 0, 1, 1], [], []>} : vector<128x256xbf16>, vector<256x128xbf16>, vector<128x128xf32> -> vector<128x128xf32>
    %c128_i32 = arith.constant 128 : i32
    %6 = arith.muli %arg0, %c128_i32 : i32
    %7 = tpu.assume_multiple %6, 128 : i32
    %8 = arith.index_cast %7 : i32 to index
    %c0_4 = arith.constant 0 : index
    %9 = vector.load %arg6[%8, %c0_4] : memref<128x128xf32, #tpu.memory_space<vmem>>, vector<128x128xf32>
    tpu.vector_store %arg6[%8, %c0_4], %5 {strides = array<i32>} : memref<128x128xf32, #tpu.memory_space<vmem>>, vector<128x128xf32>,
    %c0_5 = arith.constant 0 : index
    %c0_6 = arith.constant 0 : index
    %10 = vector.load %arg7[%c0_5, %c0_6] : memref<2x128xf32, #tpu.memory_space<vmem>>, vector<2x128xf32>
    %cst_7 = arith.constant dense<0.000000e+00> : vector<128xf32>
    %11 = vector.multi_reduction <add>, %5, %cst_7 [0] : vector<128x128xf32> to vector<128xf32>
    %12 = vector.shape_cast %11 : vector<128xf32> to vector<1x128xf32>
    %13 = arith.mulf %5, %5 : vector<128x128xf32>
    %cst_8 = arith.constant dense<0.000000e+00> : vector<128xf32>
    %14 = vector.multi_reduction <add>, %13, %cst_8 [0] : vector<128x128xf32> to vector<128xf32>
    %15 = vector.shape_cast %14 : vector<128xf32> to vector<1x128xf32>
    %16 = tpu.concatenate %12, %15 in 0 : vector<1x128xf32>, vector<1x128xf32> -> vector<2x128xf32>
    %17 = arith.addf %10, %16 : vector<2x128xf32>
    %c0_9 = arith.constant 0 : index
    %c0_10 = arith.constant 0 : index
    %18 = vector.load %arg7[%c0_9, %c0_10] : memref<2x128xf32, #tpu.memory_space<vmem>>, vector<2x128xf32>
    tpu.vector_store %arg7[%c0_9, %c0_10], %17 {strides = array<i32>} : memref<2x128xf32, #tpu.memory_space<vmem>>, vector<2x128xf32>,
    %c0_i32_11 = arith.constant 0 : i32
    %19 = arith.cmpi eq, %arg0, %c0_i32_11 : i32
    %20 = arith.extui %19 : i1 to i32
    %c0_i32_12 = arith.constant 0 : i32
    %21 = arith.cmpi ne, %20, %c0_i32_12 : i32
    scf.if %21 {
      %c0_13 = arith.constant 0 : index
      %c0_14 = arith.constant 0 : index
      %22 = vector.load %arg7[%c0_13, %c0_14] : memref<2x128xf32, #tpu.memory_space<vmem>>, vector<2x128xf32>
      %23 = vector.extract_strided_slice %22 {offsets = [0, 0], sizes = [1, 128], strides = [1, 1]} : vector<2x128xf32> to vector<1x128xf32>
      %cst_15 = arith.constant 7.812500e-03 : f32
      %24 = vector.broadcast %cst_15 : f32 to vector<1x128xf32>
      %25 = arith.mulf %23, %24 : vector<1x128xf32>
      %26 = vector.extract_strided_slice %22 {offsets = [1, 0], sizes = [1, 128], strides = [1, 1]} : vector<2x128xf32> to vector<1x128xf32>
      %cst_16 = arith.constant 7.812500e-03 : f32
      %27 = vector.broadcast %cst_16 : f32 to vector<1x128xf32>
      %28 = arith.mulf %26, %27 : vector<1x128xf32>
      %29 = arith.mulf %25, %25 : vector<1x128xf32>
      %30 = arith.subf %28, %29 : vector<1x128xf32>
      %cst_17 = arith.constant 0.000000e+00 : f32
      %31 = vector.broadcast %cst_17 : f32 to vector<1x128xf32>
      %32 = arith.maximumf %30, %31 : vector<1x128xf32>
      %c0_18 = arith.constant 0 : index
      %c0_19 = arith.constant 0 : index
      %33 = vector.load %arg3[%c0_18, %c0_19] : memref<1x128xf32, #tpu.memory_space<vmem>>, vector<1x128xf32>
      %cst_20 = arith.constant 9.99999974E-6 : f32
      %34 = vector.broadcast %cst_20 : f32 to vector<1x128xf32>
      %35 = arith.addf %32, %34 : vector<1x128xf32>
      %36 = math.rsqrt %35 : vector<1x128xf32>
      %37 = arith.mulf %33, %36 : vector<1x128xf32>
      %c0_21 = arith.constant 0 : index
      %c0_22 = arith.constant 0 : index
      %38 = vector.load %arg4[%c0_21, %c0_22] : memref<1x128xf32, #tpu.memory_space<vmem>>, vector<1x128xf32>
      %39 = arith.mulf %25, %37 : vector<1x128xf32>
      %40 = arith.subf %38, %39 : vector<1x128xf32>
      %c0_i32_23 = arith.constant 0 : i32
      %c1_i32 = arith.constant 1 : i32
      %41 = arith.muli %c0_i32_23, %c1_i32 : i32
      %c0_i32_24 = arith.constant 0 : i32
      %42 = arith.addi %c0_i32_24, %41 : i32
      %c128_i32_25 = arith.constant 128 : i32
      %43 = arith.muli %42, %c128_i32_25 : i32
      %44 = tpu.assume_multiple %43, 128 : i32
      %45 = arith.index_cast %44 : i32 to index
      %c0_26 = arith.constant 0 : index
      %46 = vector.load %arg6[%45, %c0_26] : memref<128x128xf32, #tpu.memory_space<vmem>>, vector<128x128xf32>
      %47 = vector.broadcast %37 : vector<1x128xf32> to vector<128x128xf32>
      %48 = arith.mulf %46, %47 : vector<128x128xf32>
      %49 = vector.broadcast %40 : vector<1x128xf32> to vector<128x128xf32>
      %50 = arith.addf %48, %49 : vector<128x128xf32>
      %cst_27 = arith.constant 2.000000e-01 : f32
      %51 = vector.broadcast %cst_27 : f32 to vector<128x128xf32>
      %52 = arith.mulf %51, %50 : vector<128x128xf32>
      %53 = arith.maximumf %50, %52 : vector<128x128xf32>
      %54 = arith.truncf %53 : vector<128x128xf32> to vector<128x128xbf16>
      %55 = arith.index_cast %44 : i32 to index
      %c0_28 = arith.constant 0 : index
      %56 = vector.load %arg5[%55, %c0_28] : memref<128x128xbf16, #tpu.memory_space<vmem>>, vector<128x128xbf16>
      tpu.vector_store %arg5[%55, %c0_28], %54 {strides = array<i32>} : memref<128x128xbf16, #tpu.memory_space<vmem>>, vector<128x128xbf16>,
      %c1_i32_29 = arith.constant 1 : i32
    } else {
    }
    return
  }
  func.func @transform_0(%arg0: i32) -> (i32, i32) {
    %c0_i32 = arith.constant 0 : i32
    %c0_i32_0 = arith.constant 0 : i32
    return %arg0, %c0_i32 : i32, i32
  }
  func.func @transform_1(%arg0: i32) -> (i32, i32) {
    %c0_i32 = arith.constant 0 : i32
    %c0_i32_0 = arith.constant 0 : i32
    %c0_i32_1 = arith.constant 0 : i32
    return %c0_i32, %c0_i32_0 : i32, i32
  }
  func.func @transform_2(%arg0: i32) -> (i32, i32) {
    %c0_i32 = arith.constant 0 : i32
    %c0_i32_0 = arith.constant 0 : i32
    %c0_i32_1 = arith.constant 0 : i32
    return %c0_i32, %c0_i32_0 : i32, i32
  }
  func.func @transform_3(%arg0: i32) -> (i32, i32) {
    %c0_i32 = arith.constant 0 : i32
    %c0_i32_0 = arith.constant 0 : i32
    %c0_i32_1 = arith.constant 0 : i32
    return %c0_i32, %c0_i32_0 : i32, i32
  }
  func.func @transform_4(%arg0: i32) -> (i32, i32) {
    %c0_i32 = arith.constant 0 : i32
    %c0_i32_0 = arith.constant 0 : i32
    %c0_i32_1 = arith.constant 0 : i32
    return %c0_i32, %c0_i32_0 : i32, i32
  }
}

module attributes {stable_mosaic.version = 11 : i64} {
  func.func @conv_bn_lrelu_kernel(%arg0: i32, %arg1: memref<32x512xbf16, #tpu.memory_space<vmem>>, %arg2: memref<512x128xbf16, #tpu.memory_space<vmem>>, %arg3: memref<1x128xf32, #tpu.memory_space<vmem>>, %arg4: memref<1x128xf32, #tpu.memory_space<vmem>>, %arg5: memref<32x128xbf16, #tpu.memory_space<vmem>>, %arg6: memref<32x128xf32, #tpu.memory_space<vmem>>, %arg7: memref<2x128xf32, #tpu.memory_space<vmem>>) attributes {dimension_semantics = [#tpu.dimension_semantics<arbitrary>], iteration_bounds = array<i64: 1>, scalar_prefetch = 0 : i64, scratch_operands = 2 : i64, tpu.core_type = #tpu.core_type<tc>, window_params = [{transform_indices = @transform_0, window_bounds = array<i64: 32, 512>}, {pipeline_mode = #tpu.pipeline_mode<synchronous>, transform_indices = @transform_1, window_bounds = array<i64: 512, 128>}, {pipeline_mode = #tpu.pipeline_mode<synchronous>, transform_indices = @transform_2, window_bounds = array<i64: 1, 128>}, {pipeline_mode = #tpu.pipeline_mode<synchronous>, transform_indices = @transform_3, window_bounds = array<i64: 1, 128>}, {pipeline_mode = #tpu.pipeline_mode<synchronous>, transform_indices = @transform_4, window_bounds = array<i64: 32, 128>}]} {
    %c0_i32 = arith.constant 0 : i32
    %0 = arith.cmpi eq, %arg0, %c0_i32 : i32
    %1 = arith.extui %0 : i1 to i32
    %c0_i32_0 = arith.constant 0 : i32
    %2 = arith.cmpi ne, %1, %c0_i32_0 : i32
    scf.if %2 {
      %cst_13 = arith.constant 0.000000e+00 : f32
      %22 = vector.broadcast %cst_13 : f32 to vector<2x128xf32>
      %c0_14 = arith.constant 0 : index
      %c0_15 = arith.constant 0 : index
      %23 = vector.load %arg7[%c0_14, %c0_15] : memref<2x128xf32, #tpu.memory_space<vmem>>, vector<2x128xf32>
      tpu.vector_store %arg7[%c0_14, %c0_15], %22 {strides = array<i32>} : memref<2x128xf32, #tpu.memory_space<vmem>>, vector<2x128xf32>,
    } else {
    }
    %c0 = arith.constant 0 : index
    %c0_1 = arith.constant 0 : index
    %3 = vector.load %arg1[%c0, %c0_1] : memref<32x512xbf16, #tpu.memory_space<vmem>>, vector<32x512xbf16>
    %c0_2 = arith.constant 0 : index
    %c0_3 = arith.constant 0 : index
    %4 = vector.load %arg2[%c0_2, %c0_3] : memref<512x128xbf16, #tpu.memory_space<vmem>>, vector<512x128xbf16>
    %cst = arith.constant dense<0.000000e+00> : vector<32x128xf32>
    %5 = tpu.matmul %3, %4, %cst {dimension_numbers = #tpu.dot_dimension_numbers<[1], [0], [0], [1], [0, 0, 1, 1], [], []>} : vector<32x512xbf16>, vector<512x128xbf16>, vector<32x128xf32> -> vector<32x128xf32>
    %c32_i32 = arith.constant 32 : i32
    %6 = arith.muli %arg0, %c32_i32 : i32
    %7 = tpu.assume_multiple %6, 32 : i32
    %8 = arith.index_cast %7 : i32 to index
    %c0_4 = arith.constant 0 : index
    %9 = vector.load %arg6[%8, %c0_4] : memref<32x128xf32, #tpu.memory_space<vmem>>, vector<32x128xf32>
    tpu.vector_store %arg6[%8, %c0_4], %5 {strides = array<i32>} : memref<32x128xf32, #tpu.memory_space<vmem>>, vector<32x128xf32>,
    %c0_5 = arith.constant 0 : index
    %c0_6 = arith.constant 0 : index
    %10 = vector.load %arg7[%c0_5, %c0_6] : memref<2x128xf32, #tpu.memory_space<vmem>>, vector<2x128xf32>
    %cst_7 = arith.constant dense<0.000000e+00> : vector<128xf32>
    %11 = vector.multi_reduction <add>, %5, %cst_7 [0] : vector<32x128xf32> to vector<128xf32>
    %12 = vector.shape_cast %11 : vector<128xf32> to vector<1x128xf32>
    %13 = arith.mulf %5, %5 : vector<32x128xf32>
    %cst_8 = arith.constant dense<0.000000e+00> : vector<128xf32>
    %14 = vector.multi_reduction <add>, %13, %cst_8 [0] : vector<32x128xf32> to vector<128xf32>
    %15 = vector.shape_cast %14 : vector<128xf32> to vector<1x128xf32>
    %16 = tpu.concatenate %12, %15 in 0 : vector<1x128xf32>, vector<1x128xf32> -> vector<2x128xf32>
    %17 = arith.addf %10, %16 : vector<2x128xf32>
    %c0_9 = arith.constant 0 : index
    %c0_10 = arith.constant 0 : index
    %18 = vector.load %arg7[%c0_9, %c0_10] : memref<2x128xf32, #tpu.memory_space<vmem>>, vector<2x128xf32>
    tpu.vector_store %arg7[%c0_9, %c0_10], %17 {strides = array<i32>} : memref<2x128xf32, #tpu.memory_space<vmem>>, vector<2x128xf32>,
    %c0_i32_11 = arith.constant 0 : i32
    %19 = arith.cmpi eq, %arg0, %c0_i32_11 : i32
    %20 = arith.extui %19 : i1 to i32
    %c0_i32_12 = arith.constant 0 : i32
    %21 = arith.cmpi ne, %20, %c0_i32_12 : i32
    scf.if %21 {
      %c0_13 = arith.constant 0 : index
      %c0_14 = arith.constant 0 : index
      %22 = vector.load %arg7[%c0_13, %c0_14] : memref<2x128xf32, #tpu.memory_space<vmem>>, vector<2x128xf32>
      %23 = vector.extract_strided_slice %22 {offsets = [0, 0], sizes = [1, 128], strides = [1, 1]} : vector<2x128xf32> to vector<1x128xf32>
      %cst_15 = arith.constant 3.125000e-02 : f32
      %24 = vector.broadcast %cst_15 : f32 to vector<1x128xf32>
      %25 = arith.mulf %23, %24 : vector<1x128xf32>
      %26 = vector.extract_strided_slice %22 {offsets = [1, 0], sizes = [1, 128], strides = [1, 1]} : vector<2x128xf32> to vector<1x128xf32>
      %cst_16 = arith.constant 3.125000e-02 : f32
      %27 = vector.broadcast %cst_16 : f32 to vector<1x128xf32>
      %28 = arith.mulf %26, %27 : vector<1x128xf32>
      %29 = arith.mulf %25, %25 : vector<1x128xf32>
      %30 = arith.subf %28, %29 : vector<1x128xf32>
      %cst_17 = arith.constant 0.000000e+00 : f32
      %31 = vector.broadcast %cst_17 : f32 to vector<1x128xf32>
      %32 = arith.maximumf %30, %31 : vector<1x128xf32>
      %c0_18 = arith.constant 0 : index
      %c0_19 = arith.constant 0 : index
      %33 = vector.load %arg3[%c0_18, %c0_19] : memref<1x128xf32, #tpu.memory_space<vmem>>, vector<1x128xf32>
      %cst_20 = arith.constant 9.99999974E-6 : f32
      %34 = vector.broadcast %cst_20 : f32 to vector<1x128xf32>
      %35 = arith.addf %32, %34 : vector<1x128xf32>
      %36 = math.rsqrt %35 : vector<1x128xf32>
      %37 = arith.mulf %33, %36 : vector<1x128xf32>
      %c0_21 = arith.constant 0 : index
      %c0_22 = arith.constant 0 : index
      %38 = vector.load %arg4[%c0_21, %c0_22] : memref<1x128xf32, #tpu.memory_space<vmem>>, vector<1x128xf32>
      %39 = arith.mulf %25, %37 : vector<1x128xf32>
      %40 = arith.subf %38, %39 : vector<1x128xf32>
      %c0_i32_23 = arith.constant 0 : i32
      %c1_i32 = arith.constant 1 : i32
      %41 = arith.muli %c0_i32_23, %c1_i32 : i32
      %c0_i32_24 = arith.constant 0 : i32
      %42 = arith.addi %c0_i32_24, %41 : i32
      %c32_i32_25 = arith.constant 32 : i32
      %43 = arith.muli %42, %c32_i32_25 : i32
      %44 = tpu.assume_multiple %43, 32 : i32
      %45 = arith.index_cast %44 : i32 to index
      %c0_26 = arith.constant 0 : index
      %46 = vector.load %arg6[%45, %c0_26] : memref<32x128xf32, #tpu.memory_space<vmem>>, vector<32x128xf32>
      %47 = vector.broadcast %37 : vector<1x128xf32> to vector<32x128xf32>
      %48 = arith.mulf %46, %47 : vector<32x128xf32>
      %49 = vector.broadcast %40 : vector<1x128xf32> to vector<32x128xf32>
      %50 = arith.addf %48, %49 : vector<32x128xf32>
      %cst_27 = arith.constant 2.000000e-01 : f32
      %51 = vector.broadcast %cst_27 : f32 to vector<32x128xf32>
      %52 = arith.mulf %51, %50 : vector<32x128xf32>
      %53 = arith.maximumf %50, %52 : vector<32x128xf32>
      %54 = arith.truncf %53 : vector<32x128xf32> to vector<32x128xbf16>
      %55 = arith.index_cast %44 : i32 to index
      %c0_28 = arith.constant 0 : index
      %56 = vector.load %arg5[%55, %c0_28] : memref<32x128xbf16, #tpu.memory_space<vmem>>, vector<32x128xbf16>
      tpu.vector_store %arg5[%55, %c0_28], %54 {strides = array<i32>} : memref<32x128xbf16, #tpu.memory_space<vmem>>, vector<32x128xbf16>,
      %c1_i32_29 = arith.constant 1 : i32
    } else {
    }
    return
  }
  func.func @transform_0(%arg0: i32) -> (i32, i32) {
    %c0_i32 = arith.constant 0 : i32
    %c0_i32_0 = arith.constant 0 : i32
    return %arg0, %c0_i32 : i32, i32
  }
  func.func @transform_1(%arg0: i32) -> (i32, i32) {
    %c0_i32 = arith.constant 0 : i32
    %c0_i32_0 = arith.constant 0 : i32
    %c0_i32_1 = arith.constant 0 : i32
    return %c0_i32, %c0_i32_0 : i32, i32
  }
  func.func @transform_2(%arg0: i32) -> (i32, i32) {
    %c0_i32 = arith.constant 0 : i32
    %c0_i32_0 = arith.constant 0 : i32
    %c0_i32_1 = arith.constant 0 : i32
    return %c0_i32, %c0_i32_0 : i32, i32
  }
  func.func @transform_3(%arg0: i32) -> (i32, i32) {
    %c0_i32 = arith.constant 0 : i32
    %c0_i32_0 = arith.constant 0 : i32
    %c0_i32_1 = arith.constant 0 : i32
    return %c0_i32, %c0_i32_0 : i32, i32
  }
  func.func @transform_4(%arg0: i32) -> (i32, i32) {
    %c0_i32 = arith.constant 0 : i32
    %c0_i32_0 = arith.constant 0 : i32
    %c0_i32_1 = arith.constant 0 : i32
    return %c0_i32, %c0_i32_0 : i32, i32
  }
}

module attributes {stable_mosaic.version = 11 : i64} {
  func.func @conv_bn_lrelu_head_kernel(%arg0: memref<8x1024xbf16, #tpu.memory_space<vmem>>, %arg1: memref<1024x128xbf16, #tpu.memory_space<vmem>>, %arg2: memref<1x128xf32, #tpu.memory_space<vmem>>, %arg3: memref<1x128xf32, #tpu.memory_space<vmem>>, %arg4: memref<8x128xf32, #tpu.memory_space<vmem>>, %arg5: memref<1x1xf32, #tpu.memory_space<vmem>>, %arg6: memref<2x1xf32, #tpu.memory_space<vmem>>) attributes {dimension_semantics = [], scalar_prefetch = 0 : i64, scratch_operands = 0 : i64, tpu.core_type = #tpu.core_type<tc>} {
    %c0 = arith.constant 0 : index
    %c0_0 = arith.constant 0 : index
    %0 = vector.load %arg0[%c0, %c0_0] : memref<8x1024xbf16, #tpu.memory_space<vmem>>, vector<8x1024xbf16>
    %c0_1 = arith.constant 0 : index
    %c0_2 = arith.constant 0 : index
    %1 = vector.load %arg1[%c0_1, %c0_2] : memref<1024x128xbf16, #tpu.memory_space<vmem>>, vector<1024x128xbf16>
    %cst = arith.constant dense<0.000000e+00> : vector<8x128xf32>
    %2 = tpu.matmul %0, %1, %cst {dimension_numbers = #tpu.dot_dimension_numbers<[1], [0], [0], [1], [0, 0, 1, 1], [], []>} : vector<8x1024xbf16>, vector<1024x128xbf16>, vector<8x128xf32> -> vector<8x128xf32>
    %cst_3 = arith.constant dense<0.000000e+00> : vector<128xf32>
    %3 = vector.multi_reduction <add>, %2, %cst_3 [0] : vector<8x128xf32> to vector<128xf32>
    %4 = vector.shape_cast %3 : vector<128xf32> to vector<1x128xf32>
    %5 = arith.mulf %2, %2 : vector<8x128xf32>
    %cst_4 = arith.constant dense<0.000000e+00> : vector<128xf32>
    %6 = vector.multi_reduction <add>, %5, %cst_4 [0] : vector<8x128xf32> to vector<128xf32>
    %7 = vector.shape_cast %6 : vector<128xf32> to vector<1x128xf32>
    %cst_5 = arith.constant 1.250000e-01 : f32
    %8 = vector.broadcast %cst_5 : f32 to vector<1x128xf32>
    %9 = arith.mulf %4, %8 : vector<1x128xf32>
    %cst_6 = arith.constant 1.250000e-01 : f32
    %10 = vector.broadcast %cst_6 : f32 to vector<1x128xf32>
    %11 = arith.mulf %7, %10 : vector<1x128xf32>
    %12 = arith.mulf %9, %9 : vector<1x128xf32>
    %13 = arith.subf %11, %12 : vector<1x128xf32>
    %cst_7 = arith.constant 0.000000e+00 : f32
    %14 = vector.broadcast %cst_7 : f32 to vector<1x128xf32>
    %15 = arith.maximumf %13, %14 : vector<1x128xf32>
    %c0_8 = arith.constant 0 : index
    %c0_9 = arith.constant 0 : index
    %16 = vector.load %arg2[%c0_8, %c0_9] : memref<1x128xf32, #tpu.memory_space<vmem>>, vector<1x128xf32>
    %cst_10 = arith.constant 9.99999974E-6 : f32
    %17 = vector.broadcast %cst_10 : f32 to vector<1x128xf32>
    %18 = arith.addf %15, %17 : vector<1x128xf32>
    %19 = math.rsqrt %18 : vector<1x128xf32>
    %20 = arith.mulf %16, %19 : vector<1x128xf32>
    %c0_11 = arith.constant 0 : index
    %c0_12 = arith.constant 0 : index
    %21 = vector.load %arg3[%c0_11, %c0_12] : memref<1x128xf32, #tpu.memory_space<vmem>>, vector<1x128xf32>
    %22 = arith.mulf %9, %20 : vector<1x128xf32>
    %23 = arith.subf %21, %22 : vector<1x128xf32>
    %24 = vector.broadcast %20 : vector<1x128xf32> to vector<8x128xf32>
    %25 = arith.mulf %2, %24 : vector<8x128xf32>
    %26 = vector.broadcast %23 : vector<1x128xf32> to vector<8x128xf32>
    %27 = arith.addf %25, %26 : vector<8x128xf32>
    %cst_13 = arith.constant 2.000000e-01 : f32
    %28 = vector.broadcast %cst_13 : f32 to vector<8x128xf32>
    %29 = arith.mulf %28, %27 : vector<8x128xf32>
    %30 = arith.maximumf %27, %29 : vector<8x128xf32>
    %c0_14 = arith.constant 0 : index
    %c0_15 = arith.constant 0 : index
    %31 = vector.load %arg4[%c0_14, %c0_15] : memref<8x128xf32, #tpu.memory_space<vmem>>, vector<8x128xf32>
    %32 = arith.mulf %30, %31 : vector<8x128xf32>
    %33 = tpu.iota {dimensions = array<i32: 1>} : vector<2x8xi32>
    %34 = tpu.iota {dimensions = array<i32: 0>} : vector<2x8xi32>
    %c4_i32 = arith.constant 4 : i32
    %35 = vector.broadcast %c4_i32 : i32 to vector<2x8xi32>
    %36 = arith.muli %34, %35 : vector<2x8xi32>
    %37 = arith.cmpi sge, %33, %36 : vector<2x8xi32>
    %c1_i32 = arith.constant 1 : i32
    %38 = vector.broadcast %c1_i32 : i32 to vector<2x8xi32>
    %39 = arith.addi %34, %38 : vector<2x8xi32>
    %c4_i32_16 = arith.constant 4 : i32
    %40 = vector.broadcast %c4_i32_16 : i32 to vector<2x8xi32>
    %41 = arith.muli %39, %40 : vector<2x8xi32>
    %42 = arith.cmpi slt, %33, %41 : vector<2x8xi32>
    %43 = arith.andi %37, %42 : vector<2x8xi1>
    %44 = arith.extui %43 : vector<2x8xi1> to vector<2x8xi32>
    %45 = arith.sitofp %44 : vector<2x8xi32> to vector<2x8xf32>
    %cst_17 = arith.constant dense<0.000000e+00> : vector<2x128xf32>
    %46 = tpu.matmul %45, %32, %cst_17 {dimension_numbers = #tpu.dot_dimension_numbers<[1], [0], [0], [1], [0, 0, 1, 1], [], []>} : vector<2x8xf32>, vector<8x128xf32>, vector<2x128xf32> -> vector<2x128xf32>
    %cst_18 = arith.constant dense<0.000000e+00> : vector<2xf32>
    %47 = vector.multi_reduction <add>, %46, %cst_18 [1] : vector<2x128xf32> to vector<2xf32>
    %48 = vector.shape_cast %47 : vector<2xf32> to vector<2x1xf32>
    %c0_19 = arith.constant 0 : index
    %c0_20 = arith.constant 0 : index
    %49 = vector.load %arg5[%c0_19, %c0_20] : memref<1x1xf32, #tpu.memory_space<vmem>>, vector<1x1xf32>
    %50 = vector.broadcast %49 : vector<1x1xf32> to vector<2x1xf32>
    %51 = arith.addf %48, %50 : vector<2x1xf32>
    %c0_21 = arith.constant 0 : index
    %c0_22 = arith.constant 0 : index
    %52 = vector.load %arg6[%c0_21, %c0_22] : memref<2x1xf32, #tpu.memory_space<vmem>>, vector<2x1xf32>
    tpu.vector_store %arg6[%c0_21, %c0_22], %51 {strides = array<i32>} : memref<2x1xf32, #tpu.memory_space<vmem>>, vector<2x1xf32>,
    return
  }
}

</mosaic_0001>

<llo_original>
// kernel: discriminator_forward.4
$region0: #{discriminator_forward.4}
  #allocation0 [shape = 'u32[]', space=smem, size = 0x4, offset = 0x4, fixed_abs, tag = 'smem constant byte address 0x4 - core index']
  #allocation1 [shape = 'u32[144,128]{1,0:T(1,128)}', space=vmem, size = 0x12000, scoped, tag = 'internal scratch']
  #allocation2 [shape = 'f32[512,128]{1,0:T(8,128)}', space=vmem, size = 0x40000, scoped, tag = 'scratch operand']
  #allocation3 [shape = 'f32[2,128]{1,0:T(2,128)}', space=vmem, size = 0x400, scoped, tag = 'scratch operand']
  %s0 = inlined_call_operand.vmem [shape: bf16[512,48], index: 0, kind: input, shape index: {}]
  %s1 = inlined_call_operand.vmem [shape: bf16[48,128], index: 1, kind: input, shape index: {}]
  %s2 = inlined_call_operand.vmem [shape: f32[1,128], index: 2, kind: input, shape index: {}]
  %s3 = inlined_call_operand.vmem [shape: f32[1,128], index: 3, kind: input, shape index: {}]
  %s4 = inlined_call_operand.vmem [shape: bf16[512,128], index: 4, kind: output, shape index: {}]
  %s5 = sld [smem:[#allocation0]]
  $region34: #{discriminator_forward.4} parent=0
    _
  %s7 = ssub.s32 1, %s5
  %s8 = scalar_select 0, %s7, %s5
  // Predicated region
  $region2: #{discriminator_forward.4} parent=0 // pred_check
    _
  $region3: #{discriminator_forward.4} parent=0 // pred_check_branch
    %10 = sbr.rel (0) target = $region5
  $region4: #{discriminator_forward.4} parent=0 // pred_region
    _
  $region5: #{discriminator_forward.4} parent=0 // pred_fallthru
    _
  // Predicated region
  $region6: #{discriminator_forward.4} parent=0 // pred_check
    _
  $region7: #{discriminator_forward.4} parent=0 // pred_check_branch
    %12 = sbr.rel (0) target = $region9
  $region8: #{discriminator_forward.4} parent=0 // pred_region
    _
  $region9: #{discriminator_forward.4} parent=0 // pred_fallthru
    _
  // Predicated region
  $region10: #{discriminator_forward.4} parent=0 // pred_check
    _
  $region11: #{discriminator_forward.4} parent=0 // pred_check_branch
    %14 = sbr.rel (0) target = $region13
  $region12: #{discriminator_forward.4} parent=0 // pred_region
    _
  $region13: #{discriminator_forward.4} parent=0 // pred_fallthru
    _
  // Predicated region
  $region14: #{discriminator_forward.4} parent=0 // pred_check
    _
  $region15: #{discriminator_forward.4} parent=0 // pred_check_branch
    %16 = sbr.rel (0) target = $region17
  $region16: #{discriminator_forward.4} parent=0 // pred_region
    _
  $region17: #{discriminator_forward.4} parent=0 // pred_fallthru
    _
  %p18 = scmp.eq.s32.totalorder 0, 0
  // Predicated region
  $region18: #{discriminator_forward.4} parent=0 // pred_check
    %p19 = pneg %p18
  $region19: #{discriminator_forward.4} parent=0 // pred_check_branch
    %21 = sbr.rel (%p19) target = $region21
  $region20: #{discriminator_forward.4} parent=0 // pred_region
    %22 = vst [vmem:[#allocation3] sm:$0x3] 0.0
  $region21: #{discriminator_forward.4} parent=0 // pred_fallthru
    _
  %v23 = vld [vmem:[%s0] sm:$0xf]
  %v24 = vld [vmem:[%s0 + $0x4] sm:$0xf]
  %v25 = vld [vmem:[%s0 + $0x8] sm:$0xf]
  %v26 = vld [vmem:[%s0 + $0xc] sm:$0xf]
  %v27 = vld [vmem:[%s0 + $0x10] sm:$0xf]
  %v28 = vld [vmem:[%s0 + $0x14] sm:$0xf]
  %v29 = vld [vmem:[%s0 + $0x18] sm:$0xf]
  %v30 = vld [vmem:[%s0 + $0x1c] sm:$0xf]
  %v31 = vld [vmem:[%s0 + $0x20] sm:$0xf]
  %v32 = vld [vmem:[%s0 + $0x24] sm:$0xf]
  %v33 = vld [vmem:[%s0 + $0x28] sm:$0xf]
  %v34 = vld [vmem:[%s0 + $0x2c] sm:$0xf]
  %v35 = vld [vmem:[%s0 + $0x30] sm:$0xf]
  %v36 = vld [vmem:[%s0 + $0x34] sm:$0xf]
  %v37 = vld [vmem:[%s0 + $0x38] sm:$0xf]
  %v38 = vld [vmem:[%s0 + $0x3c] sm:$0xf]
  %v39 = vld [vmem:[%s0 + $0x40] sm:$0xf]
  %v40 = vld [vmem:[%s0 + $0x44] sm:$0xf]
  %v41 = vld [vmem:[%s0 + $0x48] sm:$0xf]
  %v42 = vld [vmem:[%s0 + $0x4c] sm:$0xf]
  %v43 = vld [vmem:[%s0 + $0x50] sm:$0xf]
  %v44 = vld [vmem:[%s0 + $0x54] sm:$0xf]
  %v45 = vld [vmem:[%s0 + $0x58] sm:$0xf]
  %v46 = vld [vmem:[%s0 + $0x5c] sm:$0xf]
  %v47 = vld [vmem:[%s0 + $0x60] sm:$0xf]
  %v48 = vld [vmem:[%s0 + $0x64] sm:$0xf]
  %v49 = vld [vmem:[%s0 + $0x68] sm:$0xf]
  %v50 = vld [vmem:[%s0 + $0x6c] sm:$0xf]
  %v51 = vld [vmem:[%s0 + $0x70] sm:$0xf]
  %v52 = vld [vmem:[%s0 + $0x74] sm:$0xf]
  %v53 = vld [vmem:[%s0 + $0x78] sm:$0xf]
  %v54 = vld [vmem:[%s0 + $0x7c] sm:$0xf]
  %v55 = vld [vmem:[%s0 + $0x80] sm:$0xf]
  %v56 = vld [vmem:[%s0 + $0x84] sm:$0xf]
  %v57 = vld [vmem:[%s0 + $0x88] sm:$0xf]
  %v58 = vld [vmem:[%s0 + $0x8c] sm:$0xf]
  %v59 = vld [vmem:[%s0 + $0x90] sm:$0xf]
  %v60 = vld [vmem:[%s0 + $0x94] sm:$0xf]
  %v61 = vld [vmem:[%s0 + $0x98] sm:$0xf]
  %v62 = vld [vmem:[%s0 + $0x9c] sm:$0xf]
  %v63 = vld [vmem:[%s0 + $0xa0] sm:$0xf]
  %v64 = vld [vmem:[%s0 + $0xa4] sm:$0xf]
  %v65 = vld [vmem:[%s0 + $0xa8] sm:$0xf]
  %v66 = vld [vmem:[%s0 + $0xac] sm:$0xf]
  %v67 = vld [vmem:[%s0 + $0xb0] sm:$0xf]
  %v68 = vld [vmem:[%s0 + $0xb4] sm:$0xf]
  %v69 = vld [vmem:[%s0 + $0xb8] sm:$0xf]
  %v70 = vld [vmem:[%s0 + $0xbc] sm:$0xf]
  %v71 = vld [vmem:[%s0 + $0xc0] sm:$0xf]
  %v72 = vld [vmem:[%s0 + $0xc4] sm:$0xf]
  %v73 = vld [vmem:[%s0 + $0xc8] sm:$0xf]
  %v74 = vld [vmem:[%s0 + $0xcc] sm:$0xf]
  %v75 = vld [vmem:[%s0 + $0xd0] sm:$0xf]
  %v76 = vld [vmem:[%s0 + $0xd4] sm:$0xf]
  %v77 = vld [vmem:[%s0 + $0xd8] sm:$0xf]
  %v78 = vld [vmem:[%s0 + $0xdc] sm:$0xf]
  %v79 = vld [vmem:[%s0 + $0xe0] sm:$0xf]
  %v80 = vld [vmem:[%s0 + $0xe4] sm:$0xf]
  %v81 = vld [vmem:[%s0 + $0xe8] sm:$0xf]
  %v82 = vld [vmem:[%s0 + $0xec] sm:$0xf]
  %v83 = vld [vmem:[%s0 + $0xf0] sm:$0xf]
  %v84 = vld [vmem:[%s0 + $0xf4] sm:$0xf]
  %v85 = vld [vmem:[%s0 + $0xf8] sm:$0xf]
  %v86 = vld [vmem:[%s0 + $0xfc] sm:$0xf]
  %v87 = vld [vmem:[%s1] sm:$0xf]
  %v88 = vld [vmem:[%s1 + $0x4] sm:$0xf]
  %v89 = vld [vmem:[%s1 + $0x8] sm:$0xf]
  %v90 = vld [vmem:[%s1 + $0xc] sm:$0xf]
  %v91 = vld [vmem:[%s1 + $0x10] sm:$0xf]
  %v92 = vld [vmem:[%s1 + $0x14] sm:$0xf]
  %v157 = vunpack.c.l.b16 %v23
  %v158 = vunpack.c.l.b16 %v24
  %v159 = vunpack.c.l.b16 %v25
  %v160 = vunpack.c.l.b16 %v26
  %v161 = vunpack.c.l.b16 %v27
  %v162 = vunpack.c.l.b16 %v28
  %v163 = vunpack.c.l.b16 %v29
  %v164 = vunpack.c.l.b16 %v30
  %v165 = vunpack.c.l.b16 %v31
  %v166 = vunpack.c.l.b16 %v32
  %v167 = vunpack.c.l.b16 %v33
  %v168 = vunpack.c.l.b16 %v34
  %v169 = vunpack.c.l.b16 %v35
  %v170 = vunpack.c.l.b16 %v36
  %v171 = vunpack.c.l.b16 %v37
  %v172 = vunpack.c.l.b16 %v38
  %v173 = vunpack.c.l.b16 %v39
  %v174 = vunpack.c.l.b16 %v40
  %v175 = vunpack.c.l.b16 %v41
  %v176 = vunpack.c.l.b16 %v42
  %v177 = vunpack.c.l.b16 %v43
  %v178 = vunpack.c.l.b16 %v44
  %v179 = vunpack.c.l.b16 %v45
  %v180 = vunpack.c.l.b16 %v46
  %v181 = vunpack.c.l.b16 %v47
  %v182 = vunpack.c.l.b16 %v48
  %v183 = vunpack.c.l.b16 %v49
  %v184 = vunpack.c.l.b16 %v50
  %v185 = vunpack.c.l.b16 %v51
  %v186 = vunpack.c.l.b16 %v52
  %v187 = vunpack.c.l.b16 %v53
  %v188 = vunpack.c.l.b16 %v54
  %v189 = vunpack.c.l.b16 %v55
  %v190 = vunpack.c.l.b16 %v56
  %v191 = vunpack.c.l.b16 %v57
  %v192 = vunpack.c.l.b16 %v58
  %v193 = vunpack.c.l.b16 %v59
  %v194 = vunpack.c.l.b16 %v60
  %v195 = vunpack.c.l.b16 %v61
  %v196 = vunpack.c.l.b16 %v62
  %v197 = vunpack.c.l.b16 %v63
  %v198 = vunpack.c.l.b16 %v64
  %v199 = vunpack.c.l.b16 %v65
  %v200 = vunpack.c.l.b16 %v66
  %v201 = vunpack.c.l.b16 %v67
  %v202 = vunpack.c.l.b16 %v68
  %v203 = vunpack.c.l.b16 %v69
  %v204 = vunpack.c.l.b16 %v70
  %v205 = vunpack.c.l.b16 %v71
  %v206 = vunpack.c.l.b16 %v72
  %v207 = vunpack.c.l.b16 %v73
  %v208 = vunpack.c.l.b16 %v74
  %v209 = vunpack.c.l.b16 %v75
  %v210 = vunpack.c.l.b16 %v76
  %v211 = vunpack.c.l.b16 %v77
  %v212 = vunpack.c.l.b16 %v78
  %v213 = vunpack.c.l.b16 %v79
  %v214 = vunpack.c.l.b16 %v80
  %v215 = vunpack.c.l.b16 %v81
  %v216 = vunpack.c.l.b16 %v82
  %v217 = vunpack.c.l.b16 %v83
  %v218 = vunpack.c.l.b16 %v84
  %v219 = vunpack.c.l.b16 %v85
  %v220 = vunpack.c.l.b16 %v86
  %v221 = vpack.c.b16 %v158, %v157
  %v222 = vpack.c.b16 %v160, %v159
  %v223 = vpack.c.b16 %v162, %v161
  %v224 = vpack.c.b16 %v164, %v163
  %v225 = vpack.c.b16 %v166, %v165
  %v226 = vpack.c.b16 %v168, %v167
  %v227 = vpack.c.b16 %v170, %v169
  %v228 = vpack.c.b16 %v172, %v171
  %v229 = vpack.c.b16 %v174, %v173
  %v230 = vpack.c.b16 %v176, %v175
  %v231 = vpack.c.b16 %v178, %v177
  %v232 = vpack.c.b16 %v180, %v179
  %v233 = vpack.c.b16 %v182, %v181
  %v234 = vpack.c.b16 %v184, %v183
  %v235 = vpack.c.b16 %v186, %v185
  %v236 = vpack.c.b16 %v188, %v187
  %v237 = vpack.c.b16 %v190, %v189
  %v238 = vpack.c.b16 %v192, %v191
  %v239 = vpack.c.b16 %v194, %v193
  %v240 = vpack.c.b16 %v196, %v195
  %v241 = vpack.c.b16 %v198, %v197
  %v242 = vpack.c.b16 %v200, %v199
  %v243 = vpack.c.b16 %v202, %v201
  %v244 = vpack.c.b16 %v204, %v203
  %v245 = vpack.c.b16 %v206, %v205
  %v246 = vpack.c.b16 %v208, %v207
  %v247 = vpack.c.b16 %v210, %v209
  %v248 = vpack.c.b16 %v212, %v211
  %v249 = vpack.c.b16 %v214, %v213
  %v250 = vpack.c.b16 %v216, %v215
  %v251 = vpack.c.b16 %v218, %v217
  %v252 = vpack.c.b16 %v220, %v219
  %v259 = vunpack.c.l.b16 %v87
  %v260 = vunpack.c.l.b16 %v88
  %v261 = vunpack.c.l.b16 %v89
  %v262 = vunpack.c.l.b16 %v90
  %v263 = vunpack.c.l.b16 %v91
  %v264 = vunpack.c.l.b16 %v92
  %v265 = vpack.c.b16 %v260, %v259
  %v266 = vpack.c.b16 %v262, %v261
  %v267 = vpack.c.b16 %v264, %v263
  %vm271 = vcmask 392192
  %v273 = vsel %vm271, %v221, 0
  %v276 = vsel %vm271, %v222, 0
  %v279 = vsel %vm271, %v223, 0
  %v282 = vsel %vm271, %v224, 0
  %v285 = vsel %vm271, %v225, 0
  %v288 = vsel %vm271, %v226, 0
  %v291 = vsel %vm271, %v227, 0
  %v294 = vsel %vm271, %v228, 0
  %v297 = vsel %vm271, %v229, 0
  %v300 = vsel %vm271, %v230, 0
  %v303 = vsel %vm271, %v231, 0
  %v306 = vsel %vm271, %v232, 0
  %v309 = vsel %vm271, %v233, 0
  %v312 = vsel %vm271, %v234, 0
  %v315 = vsel %vm271, %v235, 0
  %v318 = vsel %vm271, %v236, 0
  %v321 = vsel %vm271, %v237, 0
  %v324 = vsel %vm271, %v238, 0
  %v327 = vsel %vm271, %v239, 0
  %v330 = vsel %vm271, %v240, 0
  %v333 = vsel %vm271, %v241, 0
  %v336 = vsel %vm271, %v242, 0
  %v339 = vsel %vm271, %v243, 0
  %v342 = vsel %vm271, %v244, 0
  %v345 = vsel %vm271, %v245, 0
  %v348 = vsel %vm271, %v246, 0
  %v351 = vsel %vm271, %v247, 0
  %v354 = vsel %vm271, %v248, 0
  %v357 = vsel %vm271, %v249, 0
  %v360 = vsel %vm271, %v250, 0
  %v363 = vsel %vm271, %v251, 0
  %v366 = vsel %vm271, %v252, 0
  %368 = vmatprep.subr.bf16.mxu0 0
  %369 = vmatpush1.bf16.msra.mxu0 %v265
  %370 = vmatprep.subr.bf16.mxu0 0
  %371 = vmatpush1.bf16.msra.mxu0 %v266
  %372 = vmatprep.subr.bf16.mxu0 0
  %373 = vmatpush1.bf16.msra.mxu0 %v267
  %374 = vmatprep.subr.bf16.mxu0 0
  %375 = vmatpush1.bf16.msra.mxu0 0
  %376 = vmatprep.subr.bf16.mxu0 0
  %377 = vmatpush1.bf16.msra.mxu0 0
  %378 = vmatprep.subr.bf16.mxu0 0
  %379 = vmatpush1.bf16.msra.mxu0 0
  %380 = vmatprep.subr.bf16.mxu0 0
  %381 = vmatpush1.bf16.msra.mxu0 0
  %382 = vmatprep.subr.bf16.mxu0 0
  %383 = vmatpush1.bf16.msra.mxu0 0
  %384 = vmatprep.subr.bf16.mxu0 0
  %385 = vmatpush1.bf16.msra.mxu0 0
  %386 = vmatprep.subr.bf16.mxu0 0
  %387 = vmatpush1.bf16.msra.mxu0 0
  %388 = vmatprep.subr.bf16.mxu0 0
  %389 = vmatpush1.bf16.msra.mxu0 0
  %390 = vmatprep.subr.bf16.mxu0 0
  %391 = vmatpush1.bf16.msra.mxu0 0
  %392 = vmatprep.subr.bf16.mxu0 0
  %393 = vmatpush1.bf16.msra.mxu0 0
  %394 = vmatprep.subr.bf16.mxu0 0
  %395 = vmatpush1.bf16.msra.mxu0 0
  %396 = vmatprep.subr.bf16.mxu0 0
  %397 = vmatpush1.bf16.msra.mxu0 0
  %398 = vmatprep.subr.bf16.mxu0 0
  %399 = vmatpush1.bf16.msra.mxu0 0
  %400 = vmatprep.mubr.bf16.mxu0 0
  %401 = vmatmul.mubr.bf16.gmra.mrb[0].mxu0 %v273
  %v402 = vpop.f32.mrb[0].mxu0
  %v403 = vadd.f32 0.0, %v402
  %v404 = vpop.f32.mrb[0].mxu0
  %v405 = vpop.f32.mrb[0].mxu0
  %v406 = vadd.f32 0.0, %v405
  %v407 = vpop.f32.mrb[0].mxu0
  %408 = vmatprep.mubr.bf16.mxu0 0
  %409 = vmatmul.mubr.bf16.gmra.mrb[0].mxu0 %v276
  %v410 = vpop.f32.mrb[0].mxu0
  %v411 = vadd.f32 0.0, %v410
  %v412 = vpop.f32.mrb[0].mxu0
  %v413 = vpop.f32.mrb[0].mxu0
  %v414 = vadd.f32 0.0, %v413
  %v415 = vpop.f32.mrb[0].mxu0
  %416 = vmatprep.mubr.bf16.mxu0 0
  %417 = vmatmul.mubr.bf16.gmra.mrb[0].mxu0 %v279
  %v418 = vpop.f32.mrb[0].mxu0
  %v419 = vadd.f32 0.0, %v418
  %v420 = vpop.f32.mrb[0].mxu0
  %v421 = vpop.f32.mrb[0].mxu0
  %v422 = vadd.f32 0.0, %v421
  %v423 = vpop.f32.mrb[0].mxu0
  %424 = vmatprep.mubr.bf16.mxu0 0
  %425 = vmatmul.mubr.bf16.gmra.mrb[0].mxu0 %v282
  %v426 = vpop.f32.mrb[0].mxu0
  %v427 = vadd.f32 0.0, %v426
  %v428 = vpop.f32.mrb[0].mxu0
  %v429 = vpop.f32.mrb[0].mxu0
  %v430 = vadd.f32 0.0, %v429
  %v431 = vpop.f32.mrb[0].mxu0
  %432 = vmatprep.mubr.bf16.mxu0 0
  %433 = vmatmul.mubr.bf16.gmra.mrb[0].mxu0 %v285
  %v434 = vpop.f32.mrb[0].mxu0
  %v435 = vadd.f32 0.0, %v434
  %v436 = vpop.f32.mrb[0].mxu0
  %v437 = vpop.f32.mrb[0].mxu0
  %v438 = vadd.f32 0.0, %v437
  %v439 = vpop.f32.mrb[0].mxu0
  %440 = vmatprep.mubr.bf16.mxu0 0
  %441 = vmatmul.mubr.bf16.gmra.mrb[0].mxu0 %v288
  %v442 = vpop.f32.mrb[0].mxu0
  %v443 = vadd.f32 0.0, %v442
  %v444 = vpop.f32.mrb[0].mxu0
  %v445 = vpop.f32.mrb[0].mxu0
  %v446 = vadd.f32 0.0, %v445
  %v447 = vpop.f32.mrb[0].mxu0
  %448 = vmatprep.mubr.bf16.mxu0 0
  %449 = vmatmul.mubr.bf16.gmra.mrb[0].mxu0 %v291
  %v450 = vpop.f32.mrb[0].mxu0
  %v451 = vadd.f32 0.0, %v450
  %v452 = vpop.f32.mrb[0].mxu0
  %v453 = vpop.f32.mrb[0].mxu0
  %v454 = vadd.f32 0.0, %v453
  %v455 = vpop.f32.mrb[0].mxu0
  %456 = vmatprep.mubr.bf16.mxu0 0
  %457 = vmatmul.mubr.bf16.gmra.mrb[0].mxu0 %v294
  %v458 = vpop.f32.mrb[0].mxu0
  %v459 = vadd.f32 0.0, %v458
  %v460 = vpop.f32.mrb[0].mxu0
  %v461 = vpop.f32.mrb[0].mxu0
  %v462 = vadd.f32 0.0, %v461
  %v463 = vpop.f32.mrb[0].mxu0
  %464 = vmatprep.mubr.bf16.mxu0 0
  %465 = vmatmul.mubr.bf16.gmra.mrb[0].mxu0 %v297
  %v466 = vpop.f32.mrb[0].mxu0
  %v467 = vadd.f32 0.0, %v466
  %v468 = vpop.f32.mrb[0].mxu0
  %v469 = vpop.f32.mrb[0].mxu0
  %v470 = vadd.f32 0.0, %v469
  %v471 = vpop.f32.mrb[0].mxu0
  %472 = vmatprep.mubr.bf16.mxu0 0
  %473 = vmatmul.mubr.bf16.gmra.mrb[0].mxu0 %v300
  %v474 = vpop.f32.mrb[0].mxu0
  %v475 = vadd.f32 0.0, %v474
  %v476 = vpop.f32.mrb[0].mxu0
  %v477 = vpop.f32.mrb[0].mxu0
  %v478 = vadd.f32 0.0, %v477
  %v479 = vpop.f32.mrb[0].mxu0
  %480 = vmatprep.mubr.bf16.mxu0 0
  %481 = vmatmul.mubr.bf16.gmra.mrb[0].mxu0 %v303
  %v482 = vpop.f32.mrb[0].mxu0
  %v483 = vadd.f32 0.0, %v482
  %v484 = vpop.f32.mrb[0].mxu0
  %v485 = vpop.f32.mrb[0].mxu0
  %v486 = vadd.f32 0.0, %v485
  %v487 = vpop.f32.mrb[0].mxu0
  %488 = vmatprep.mubr.bf16.mxu0 0
  %489 = vmatmul.mubr.bf16.gmra.mrb[0].mxu0 %v306
  %v490 = vpop.f32.mrb[0].mxu0
  %v491 = vadd.f32 0.0, %v490
  %v492 = vpop.f32.mrb[0].mxu0
  %v493 = vpop.f32.mrb[0].mxu0
  %v494 = vadd.f32 0.0, %v493
  %v495 = vpop.f32.mrb[0].mxu0
  %496 = vmatprep.mubr.bf16.mxu0 0
  %497 = vmatmul.mubr.bf16.gmra.mrb[0].mxu0 %v309
  %v498 = vpop.f32.mrb[0].mxu0
  %v499 = vadd.f32 0.0, %v498
  %v500 = vpop.f32.mrb[0].mxu0
  %v501 = vpop.f32.mrb[0].mxu0
  %v502 = vadd.f32 0.0, %v501
  %v503 = vpop.f32.mrb[0].mxu0
  %504 = vmatprep.mubr.bf16.mxu0 0
  %505 = vmatmul.mubr.bf16.gmra.mrb[0].mxu0 %v312
  %v506 = vpop.f32.mrb[0].mxu0
  %v507 = vadd.f32 0.0, %v506
  %v508 = vpop.f32.mrb[0].mxu0
  %v509 = vpop.f32.mrb[0].mxu0
  %v510 = vadd.f32 0.0, %v509
  %v511 = vpop.f32.mrb[0].mxu0
  %512 = vmatprep.mubr.bf16.mxu0 0
  %513 = vmatmul.mubr.bf16.gmra.mrb[0].mxu0 %v315
  %v514 = vpop.f32.mrb[0].mxu0
  %v515 = vadd.f32 0.0, %v514
  %v516 = vpop.f32.mrb[0].mxu0
  %v517 = vpop.f32.mrb[0].mxu0
  %v518 = vadd.f32 0.0, %v517
  %v519 = vpop.f32.mrb[0].mxu0
  %520 = vmatprep.mubr.bf16.mxu0 0
  %521 = vmatmul.mubr.bf16.gmra.mrb[0].mxu0 %v318
  %v522 = vpop.f32.mrb[0].mxu0
  %v523 = vadd.f32 0.0, %v522
  %v524 = vpop.f32.mrb[0].mxu0
  %v525 = vpop.f32.mrb[0].mxu0
  %v526 = vadd.f32 0.0, %v525
  %v527 = vpop.f32.mrb[0].mxu0
  %528 = vmatprep.mubr.bf16.mxu0 0
  %529 = vmatmul.mubr.bf16.gmra.mrb[0].mxu0 %v321
  %v530 = vpop.f32.mrb[0].mxu0
  %v531 = vadd.f32 0.0, %v530
  %v532 = vpop.f32.mrb[0].mxu0
  %v533 = vpop.f32.mrb[0].mxu0
  %v534 = vadd.f32 0.0, %v533
  %v535 = vpop.f32.mrb[0].mxu0
  %536 = vmatprep.mubr.bf16.mxu0 0
  %537 = vmatmul.mubr.bf16.gmra.mrb[0].mxu0 %v324
  %v538 = vpop.f32.mrb[0].mxu0
  %v539 = vadd.f32 0.0, %v538
  %v540 = vpop.f32.mrb[0].mxu0
  %v541 = vpop.f32.mrb[0].mxu0
  %v542 = vadd.f32 0.0, %v541
  %v543 = vpop.f32.mrb[0].mxu0
  %544 = vmatprep.mubr.bf16.mxu0 0
  %545 = vmatmul.mubr.bf16.gmra.mrb[0].mxu0 %v327
  %v546 = vpop.f32.mrb[0].mxu0
  %v547 = vadd.f32 0.0, %v546
  %v548 = vpop.f32.mrb[0].mxu0
  %v549 = vpop.f32.mrb[0].mxu0
  %v550 = vadd.f32 0.0, %v549
  %v551 = vpop.f32.mrb[0].mxu0
  %552 = vmatprep.mubr.bf16.mxu0 0
  %553 = vmatmul.mubr.bf16.gmra.mrb[0].mxu0 %v330
  %v554 = vpop.f32.mrb[0].mxu0
  %v555 = vadd.f32 0.0, %v554
  %v556 = vpop.f32.mrb[0].mxu0
  %v557 = vpop.f32.mrb[0].mxu0
  %v558 = vadd.f32 0.0, %v557
  %v559 = vpop.f32.mrb[0].mxu0
  %560 = vmatprep.mubr.bf16.mxu0 0
  %561 = vmatmul.mubr.bf16.gmra.mrb[0].mxu0 %v333
  %v562 = vpop.f32.mrb[0].mxu0
  %v563 = vadd.f32 0.0, %v562
  %v564 = vpop.f32.mrb[0].mxu0
  %v565 = vpop.f32.mrb[0].mxu0
  %v566 = vadd.f32 0.0, %v565
  %v567 = vpop.f32.mrb[0].mxu0
  %568 = vmatprep.mubr.bf16.mxu0 0
  %569 = vmatmul.mubr.bf16.gmra.mrb[0].mxu0 %v336
  %v570 = vpop.f32.mrb[0].mxu0
  %v571 = vadd.f32 0.0, %v570
  %v572 = vpop.f32.mrb[0].mxu0
  %v573 = vpop.f32.mrb[0].mxu0
  %v574 = vadd.f32 0.0, %v573
  %v575 = vpop.f32.mrb[0].mxu0
  %576 = vmatprep.mubr.bf16.mxu0 0
  %577 = vmatmul.mubr.bf16.gmra.mrb[0].mxu0 %v339
  %v578 = vpop.f32.mrb[0].mxu0
  %v579 = vadd.f32 0.0, %v578
  %v580 = vpop.f32.mrb[0].mxu0
  %v581 = vpop.f32.mrb[0].mxu0
  %v582 = vadd.f32 0.0, %v581
  %v583 = vpop.f32.mrb[0].mxu0
  %584 = vmatprep.mubr.bf16.mxu0 0
  %585 = vmatmul.mubr.bf16.gmra.mrb[0].mxu0 %v342
  %v586 = vpop.f32.mrb[0].mxu0
  %v587 = vadd.f32 0.0, %v586
  %v588 = vpop.f32.mrb[0].mxu0
  %v589 = vpop.f32.mrb[0].mxu0
  %v590 = vadd.f32 0.0, %v589
  %v591 = vpop.f32.mrb[0].mxu0
  %592 = vmatprep.mubr.bf16.mxu0 0
  %593 = vmatmul.mubr.bf16.gmra.mrb[0].mxu0 %v345
  %v594 = vpop.f32.mrb[0].mxu0
  %v595 = vadd.f32 0.0, %v594
  %v596 = vpop.f32.mrb[0].mxu0
  %v597 = vpop.f32.mrb[0].mxu0
  %v598 = vadd.f32 0.0, %v597
  %v599 = vpop.f32.mrb[0].mxu0
  %600 = vmatprep.mubr.bf16.mxu0 0
  %601 = vmatmul.mubr.bf16.gmra.mrb[0].mxu0 %v348
  %v602 = vpop.f32.mrb[0].mxu0
  %v603 = vadd.f32 0.0, %v602
  %v604 = vpop.f32.mrb[0].mxu0
  %v605 = vpop.f32.mrb[0].mxu0
  %v606 = vadd.f32 0.0, %v605
  %v607 = vpop.f32.mrb[0].mxu0
  %608 = vmatprep.mubr.bf16.mxu0 0
  %609 = vmatmul.mubr.bf16.gmra.mrb[0].mxu0 %v351
  %v610 = vpop.f32.mrb[0].mxu0
  %v611 = vadd.f32 0.0, %v610
  %v612 = vpop.f32.mrb[0].mxu0
  %v613 = vpop.f32.mrb[0].mxu0
  %v614 = vadd.f32 0.0, %v613
  %v615 = vpop.f32.mrb[0].mxu0
  %616 = vmatprep.mubr.bf16.mxu0 0
  %617 = vmatmul.mubr.bf16.gmra.mrb[0].mxu0 %v354
  %v618 = vpop.f32.mrb[0].mxu0
  %v619 = vadd.f32 0.0, %v618
  %v620 = vpop.f32.mrb[0].mxu0
  %v621 = vpop.f32.mrb[0].mxu0
  %v622 = vadd.f32 0.0, %v621
  %v623 = vpop.f32.mrb[0].mxu0
  %624 = vmatprep.mubr.bf16.mxu0 0
  %625 = vmatmul.mubr.bf16.gmra.mrb[0].mxu0 %v357
  %v626 = vpop.f32.mrb[0].mxu0
  %v627 = vadd.f32 0.0, %v626
  %v628 = vpop.f32.mrb[0].mxu0
  %v629 = vpop.f32.mrb[0].mxu0
  %v630 = vadd.f32 0.0, %v629
  %v631 = vpop.f32.mrb[0].mxu0
  %632 = vmatprep.mubr.bf16.mxu0 0
  %633 = vmatmul.mubr.bf16.gmra.mrb[0].mxu0 %v360
  %v634 = vpop.f32.mrb[0].mxu0
  %v635 = vadd.f32 0.0, %v634
  %v636 = vpop.f32.mrb[0].mxu0
  %v637 = vpop.f32.mrb[0].mxu0
  %v638 = vadd.f32 0.0, %v637
  %v639 = vpop.f32.mrb[0].mxu0
  %640 = vmatprep.mubr.bf16.mxu0 0
  %641 = vmatmul.mubr.bf16.gmra.mrb[0].mxu0 %v363
  %v642 = vpop.f32.mrb[0].mxu0
  %v643 = vadd.f32 0.0, %v642
  %v644 = vpop.f32.mrb[0].mxu0
  %v645 = vpop.f32.mrb[0].mxu0
  %v646 = vadd.f32 0.0, %v645
  %v647 = vpop.f32.mrb[0].mxu0
  %648 = vmatprep.mubr.bf16.mxu0 0
  %649 = vmatmul.mubr.bf16.gmra.mrb[0].mxu0 %v366
  %v650 = vpop.f32.mrb[0].mxu0
  %v651 = vadd.f32 0.0, %v650
  %v652 = vpop.f32.mrb[0].mxu0
  %v653 = vpop.f32.mrb[0].mxu0
  %v654 = vadd.f32 0.0, %v653
  %v655 = vpop.f32.mrb[0].mxu0
  %656 = vdwg.mxu0
  %s657 = smul.u32 0, 512
  %s658 = scalar_lea.vmem [#allocation2], %s657
  %659 = vst [vmem:[%s658] sm:$0xff] %v403
  %660 = vst [vmem:[%s658 + $0x8] sm:$0xff] %v406
  %661 = vst [vmem:[%s658 + $0x10] sm:$0xff] %v411
  %662 = vst [vmem:[%s658 + $0x18] sm:$0xff] %v414
  %663 = vst [vmem:[%s658 + $0x20] sm:$0xff] %v419
  %664 = vst [vmem:[%s658 + $0x28] sm:$0xff] %v422
  %665 = vst [vmem:[%s658 + $0x30] sm:$0xff] %v427
  %666 = vst [vmem:[%s658 + $0x38] sm:$0xff] %v430
  %667 = vst [vmem:[%s658 + $0x40] sm:$0xff] %v435
  %668 = vst [vmem:[%s658 + $0x48] sm:$0xff] %v438
  %669 = vst [vmem:[%s658 + $0x50] sm:$0xff] %v443
  %670 = vst [vmem:[%s658 + $0x58] sm:$0xff] %v446
  %671 = vst [vmem:[%s658 + $0x60] sm:$0xff] %v451
  %672 = vst [vmem:[%s658 + $0x68] sm:$0xff] %v454
  %673 = vst [vmem:[%s658 + $0x70] sm:$0xff] %v459
  %674 = vst [vmem:[%s658 + $0x78] sm:$0xff] %v462
  %675 = vst [vmem:[%s658 + $0x80] sm:$0xff] %v467
  %676 = vst [vmem:[%s658 + $0x88] sm:$0xff] %v470
  %677 = vst [vmem:[%s658 + $0x90] sm:$0xff] %v475
  %678 = vst [vmem:[%s658 + $0x98] sm:$0xff] %v478
  %679 = vst [vmem:[%s658 + $0xa0] sm:$0xff] %v483
  %680 = vst [vmem:[%s658 + $0xa8] sm:$0xff] %v486
  %681 = vst [vmem:[%s658 + $0xb0] sm:$0xff] %v491
  %682 = vst [vmem:[%s658 + $0xb8] sm:$0xff] %v494
  %683 = vst [vmem:[%s658 + $0xc0] sm:$0xff] %v499
  %684 = vst [vmem:[%s658 + $0xc8] sm:$0xff] %v502
  %685 = vst [vmem:[%s658 + $0xd0] sm:$0xff] %v507
  %686 = vst [vmem:[%s658 + $0xd8] sm:$0xff] %v510
  %687 = vst [vmem:[%s658 + $0xe0] sm:$0xff] %v515
  %688 = vst [vmem:[%s658 + $0xe8] sm:$0xff] %v518
  %689 = vst [vmem:[%s658 + $0xf0] sm:$0xff] %v523
  %690 = vst [vmem:[%s658 + $0xf8] sm:$0xff] %v526
  %691 = vst [vmem:[%s658 + $0x100] sm:$0xff] %v531
  %692 = vst [vmem:[%s658 + $0x108] sm:$0xff] %v534
  %693 = vst [vmem:[%s658 + $0x110] sm:$0xff] %v539
  %694 = vst [vmem:[%s658 + $0x118] sm:$0xff] %v542
  %695 = vst [vmem:[%s658 + $0x120] sm:$0xff] %v547
  %696 = vst [vmem:[%s658 + $0x128] sm:$0xff] %v550
  %697 = vst [vmem:[%s658 + $0x130] sm:$0xff] %v555
  %698 = vst [vmem:[%s658 + $0x138] sm:$0xff] %v558
  %699 = vst [vmem:[%s658 + $0x140] sm:$0xff] %v563
  %700 = vst [vmem:[%s658 + $0x148] sm:$0xff] %v566
  %701 = vst [vmem:[%s658 + $0x150] sm:$0xff] %v571
  %702 = vst [vmem:[%s658 + $0x158] sm:$0xff] %v574
  %703 = vst [vmem:[%s658 + $0x160] sm:$0xff] %v579
  %704 = vst [vmem:[%s658 + $0x168] sm:$0xff] %v582
  %705 = vst [vmem:[%s658 + $0x170] sm:$0xff] %v587
  %706 = vst [vmem:[%s658 + $0x178] sm:$0xff] %v590
  %707 = vst [vmem:[%s658 + $0x180] sm:$0xff] %v595
  %708 = vst [vmem:[%s658 + $0x188] sm:$0xff] %v598
  %709 = vst [vmem:[%s658 + $0x190] sm:$0xff] %v603
  %710 = vst [vmem:[%s658 + $0x198] sm:$0xff] %v606
  %711 = vst [vmem:[%s658 + $0x1a0] sm:$0xff] %v611
  %712 = vst [vmem:[%s658 + $0x1a8] sm:$0xff] %v614
  %713 = vst [vmem:[%s658 + $0x1b0] sm:$0xff] %v619
  %714 = vst [vmem:[%s658 + $0x1b8] sm:$0xff] %v622
  %715 = vst [vmem:[%s658 + $0x1c0] sm:$0xff] %v627
  %716 = vst [vmem:[%s658 + $0x1c8] sm:$0xff] %v630
  %717 = vst [vmem:[%s658 + $0x1d0] sm:$0xff] %v635
  %718 = vst [vmem:[%s658 + $0x1d8] sm:$0xff] %v638
  %719 = vst [vmem:[%s658 + $0x1e0] sm:$0xff] %v643
  %720 = vst [vmem:[%s658 + $0x1e8] sm:$0xff] %v646
  %721 = vst [vmem:[%s658 + $0x1f0] sm:$0xff] %v651
  %722 = vst [vmem:[%s658 + $0x1f8] sm:$0xff] %v654
  %v723 = vld [vmem:[#allocation3] sm:$0x3]
  %v724 = vadd.f32 %v403, %v406
  %v725 = vadd.f32 %v724, %v411
  %v726 = vadd.f32 %v725, %v414
  %v727 = vadd.f32 %v726, %v419
  %v728 = vadd.f32 %v727, %v422
  %v729 = vadd.f32 %v728, %v427
  %v730 = vadd.f32 %v729, %v430
  %v731 = vadd.f32 %v730, %v435
  %v732 = vadd.f32 %v731, %v438
  %v733 = vadd.f32 %v732, %v443
  %v734 = vadd.f32 %v733, %v446
  %v735 = vadd.f32 %v734, %v451
  %v736 = vadd.f32 %v735, %v454
  %v737 = vadd.f32 %v736, %v459
  %v738 = vadd.f32 %v737, %v462
  %v739 = vadd.f32 %v738, %v467
  %v740 = vadd.f32 %v739, %v470
  %v741 = vadd.f32 %v740, %v475
  %v742 = vadd.f32 %v741, %v478
  %v743 = vadd.f32 %v742, %v483
  %v744 = vadd.f32 %v743, %v486
  %v745 = vadd.f32 %v744, %v491
  %v746 = vadd.f32 %v745, %v494
  %v747 = vadd.f32 %v746, %v499
  %v748 = vadd.f32 %v747, %v502
  %v749 = vadd.f32 %v748, %v507
  %v750 = vadd.f32 %v749, %v510
  %v751 = vadd.f32 %v750, %v515
  %v752 = vadd.f32 %v751, %v518
  %v753 = vadd.f32 %v752, %v523
  %v754 = vadd.f32 %v753, %v526
  %v755 = vadd.f32 %v754, %v531
  %v756 = vadd.f32 %v755, %v534
  %v757 = vadd.f32 %v756, %v539
  %v758 = vadd.f32 %v757, %v542
  %v759 = vadd.f32 %v758, %v547
  %v760 = vadd.f32 %v759, %v550
  %v761 = vadd.f32 %v760, %v555
  %v762 = vadd.f32 %v761, %v558
  %v763 = vadd.f32 %v762, %v563
  %v764 = vadd.f32 %v763, %v566
  %v765 = vadd.f32 %v764, %v571
  %v766 = vadd.f32 %v765, %v574
  %v767 = vadd.f32 %v766, %v579
  %v768 = vadd.f32 %v767, %v582
  %v769 = vadd.f32 %v768, %v587
  %v770 = vadd.f32 %v769, %v590
  %v771 = vadd.f32 %v770, %v595
  %v772 = vadd.f32 %v771, %v598
  %v773 = vadd.f32 %v772, %v603
  %v774 = vadd.f32 %v773, %v606
  %v775 = vadd.f32 %v774, %v611
  %v776 = vadd.f32 %v775, %v614
  %v777 = vadd.f32 %v776, %v619
  %v778 = vadd.f32 %v777, %v622
  %v779 = vadd.f32 %v778, %v627
  %v780 = vadd.f32 %v779, %v630
  %v781 = vadd.f32 %v780, %v635
  %v782 = vadd.f32 %v781, %v638
  %v783 = vadd.f32 %v782, %v643
  %v784 = vadd.f32 %v783, %v646
  %v785 = vadd.f32 %v784, %v651
  %v786 = vadd.f32 %v785, %v654
  %v787 = vrot.slane %v786, 4
  %v788 = vadd.f32 %v786, %v787
  %v789 = vrot.slane %v788, 2
  %v790 = vadd.f32 %v788, %v789
  %v791 = vrot.slane %v790, 1
  %v792 = vadd.f32 %v790, %v791
  %v793 = vmul.f32 %v403, %v403
  %v794 = vmul.f32 %v406, %v406
  %v795 = vmul.f32 %v411, %v411
  %v796 = vmul.f32 %v414, %v414
  %v797 = vmul.f32 %v419, %v419
  %v798 = vmul.f32 %v422, %v422
  %v799 = vmul.f32 %v427, %v427
  %v800 = vmul.f32 %v430, %v430
  %v801 = vmul.f32 %v435, %v435
  %v802 = vmul.f32 %v438, %v438
  %v803 = vmul.f32 %v443, %v443
  %v804 = vmul.f32 %v446, %v446
  %v805 = vmul.f32 %v451, %v451
  %v806 = vmul.f32 %v454, %v454
  %v807 = vmul.f32 %v459, %v459
  %v808 = vmul.f32 %v462, %v462
  %v809 = vmul.f32 %v467, %v467
  %v810 = vmul.f32 %v470, %v470
  %v811 = vmul.f32 %v475, %v475
  %v812 = vmul.f32 %v478, %v478
  %v813 = vmul.f32 %v483, %v483
  %v814 = vmul.f32 %v486, %v486
  %v815 = vmul.f32 %v491, %v491
  %v816 = vmul.f32 %v494, %v494
  %v817 = vmul.f32 %v499, %v499
  %v818 = vmul.f32 %v502, %v502
  %v819 = vmul.f32 %v507, %v507
  %v820 = vmul.f32 %v510, %v510
  %v821 = vmul.f32 %v515, %v515
  %v822 = vmul.f32 %v518, %v518
  %v823 = vmul.f32 %v523, %v523
  %v824 = vmul.f32 %v526, %v526
  %v825 = vmul.f32 %v531, %v531
  %v826 = vmul.f32 %v534, %v534
  %v827 = vmul.f32 %v539, %v539
  %v828 = vmul.f32 %v542, %v542
  %v829 = vmul.f32 %v547, %v547
  %v830 = vmul.f32 %v550, %v550
  %v831 = vmul.f32 %v555, %v555
  %v832 = vmul.f32 %v558, %v558
  %v833 = vmul.f32 %v563, %v563
  %v834 = vmul.f32 %v566, %v566
  %v835 = vmul.f32 %v571, %v571
  %v836 = vmul.f32 %v574, %v574
  %v837 = vmul.f32 %v579, %v579
  %v838 = vmul.f32 %v582, %v582
  %v839 = vmul.f32 %v587, %v587
  %v840 = vmul.f32 %v590, %v590
  %v841 = vmul.f32 %v595, %v595
  %v842 = vmul.f32 %v598, %v598
  %v843 = vmul.f32 %v603, %v603
  %v844 = vmul.f32 %v606, %v606
  %v845 = vmul.f32 %v611, %v611
  %v846 = vmul.f32 %v614, %v614
  %v847 = vmul.f32 %v619, %v619
  %v848 = vmul.f32 %v622, %v622
  %v849 = vmul.f32 %v627, %v627
  %v850 = vmul.f32 %v630, %v630
  %v851 = vmul.f32 %v635, %v635
  %v852 = vmul.f32 %v638, %v638
  %v853 = vmul.f32 %v643, %v643
  %v854 = vmul.f32 %v646, %v646
  %v855 = vmul.f32 %v651, %v651
  %v856 = vmul.f32 %v654, %v654
  %v857 = vadd.f32 %v793, %v794
  %v858 = vadd.f32 %v857, %v795
  %v859 = vadd.f32 %v858, %v796
  %v860 = vadd.f32 %v859, %v797
  %v861 = vadd.f32 %v860, %v798
  %v862 = vadd.f32 %v861, %v799
  %v863 = vadd.f32 %v862, %v800
  %v864 = vadd.f32 %v863, %v801
  %v865 = vadd.f32 %v864, %v802
  %v866 = vadd.f32 %v865, %v803
  %v867 = vadd.f32 %v866, %v804
  %v868 = vadd.f32 %v867, %v805
  %v869 = vadd.f32 %v868, %v806
  %v870 = vadd.f32 %v869, %v807
  %v871 = vadd.f32 %v870, %v808
  %v872 = vadd.f32 %v871, %v809
  %v873 = vadd.f32 %v872, %v810
  %v874 = vadd.f32 %v873, %v811
  %v875 = vadd.f32 %v874, %v812
  %v876 = vadd.f32 %v875, %v813
  %v877 = vadd.f32 %v876, %v814
  %v878 = vadd.f32 %v877, %v815
  %v879 = vadd.f32 %v878, %v816
  %v880 = vadd.f32 %v879, %v817
  %v881 = vadd.f32 %v880, %v818
  %v882 = vadd.f32 %v881, %v819
  %v883 = vadd.f32 %v882, %v820
  %v884 = vadd.f32 %v883, %v821
  %v885 = vadd.f32 %v884, %v822
  %v886 = vadd.f32 %v885, %v823
  %v887 = vadd.f32 %v886, %v824
  %v888 = vadd.f32 %v887, %v825
  %v889 = vadd.f32 %v888, %v826
  %v890 = vadd.f32 %v889, %v827
  %v891 = vadd.f32 %v890, %v828
  %v892 = vadd.f32 %v891, %v829
  %v893 = vadd.f32 %v892, %v830
  %v894 = vadd.f32 %v893, %v831
  %v895 = vadd.f32 %v894, %v832
  %v896 = vadd.f32 %v895, %v833
  %v897 = vadd.f32 %v896, %v834
  %v898 = vadd.f32 %v897, %v835
  %v899 = vadd.f32 %v898, %v836
  %v900 = vadd.f32 %v899, %v837
  %v901 = vadd.f32 %v900, %v838
  %v902 = vadd.f32 %v901, %v839
  %v903 = vadd.f32 %v902, %v840
  %v904 = vadd.f32 %v903, %v841
  %v905 = vadd.f32 %v904, %v842
  %v906 = vadd.f32 %v905, %v843
  %v907 = vadd.f32 %v906, %v844
  %v908 = vadd.f32 %v907, %v845
  %v909 = vadd.f32 %v908, %v846
  %v910 = vadd.f32 %v909, %v847
  %v911 = vadd.f32 %v910, %v848
  %v912 = vadd.f32 %v911, %v849
  %v913 = vadd.f32 %v912, %v850
  %v914 = vadd.f32 %v913, %v851
  %v915 = vadd.f32 %v914, %v852
  %v916 = vadd.f32 %v915, %v853
  %v917 = vadd.f32 %v916, %v854
  %v918 = vadd.f32 %v917, %v855
  %v919 = vadd.f32 %v918, %v856
  %v920 = vrot.slane %v919, 4
  %v921 = vadd.f32 %v919, %v920
  %v922 = vrot.slane %v921, 2
  %v923 = vadd.f32 %v921, %v922
  %v924 = vrot.slane %v923, 1
  %v925 = vadd.f32 %v923, %v924
  %vm926 = vcmask 1040384
  %v927 = vsel %vm926, %v792, %v925
  %v928 = vadd.f32 %v723, %v927
  %929 = vst [vmem:[#allocation3] sm:$0x3] %v928
  // Predicated region
  $region22: #{discriminator_forward.4} parent=0 // pred_check
    %p930 = pneg %p18
  $region23: #{discriminator_forward.4} parent=0 // pred_check_branch
    %932 = sbr.rel (%p930) target = $region25
  $region24: #{discriminator_forward.4} parent=0 // pred_region
    %v933 = vld [vmem:[#allocation3] sm:$0x3]
    %v934 = vmul.f32 %v933, 0.001953125
    %v935 = vmul.f32 %v934, %v934
    %v937 = vrot.slane %v935, 7
    %v939 = vsub.f32 %v934, %v937
    %v940 = vmax.f32 %v939, 0.0
    %v941 = vld [vmem:[%s2] sm:$0x1]
    %v942 = vadd.f32 %v940, 1e-05
    %v943 = vrsqrt.pop %v942
    %v946 = vunpack.c.l.s4 1966171168
    %v947 = vunpack.c.0.s8 %v946
    %v948 = vlaneseq
    %v949 = vshrl.u32 %v948, 7
    %v950 = vsub.s32 %v947, %v949
    %v951 = vrot.slane %v943, %v950
    %v952 = vcombine.high %v951, %v951
    %v954 = vunpack.c.l.s4 1966171168
    %v955 = vunpack.c.0.s8 %v954
    %v956 = vlaneseq
    %v957 = vshrl.u32 %v956, 7
    %v958 = vsub.s32 %v955, %v957
    %v959 = vrot.slane %v952, %v958
    %v961 = vmul.f32 %v941, %v959
    %v962 = vld [vmem:[%s3] sm:$0x1]
    %v963 = vmul.f32 %v934, %v961
    %v964 = vsub.f32 %v962, %v963
    %v965 = vld [vmem:[#allocation2] sm:$0xff]
    %v966 = vld [vmem:[#allocation2 + $0x8] sm:$0xff]
    %v967 = vld [vmem:[#allocation2 + $0x10] sm:$0xff]
    %v968 = vld [vmem:[#allocation2 + $0x18] sm:$0xff]
    %v969 = vld [vmem:[#allocation2 + $0x20] sm:$0xff]
    %v970 = vld [vmem:[#allocation2 + $0x28] sm:$0xff]
    %v971 = vld [vmem:[#allocation2 + $0x30] sm:$0xff]
    %v972 = vld [vmem:[#allocation2 + $0x38] sm:$0xff]
    %v973 = vld [vmem:[#allocation2 + $0x40] sm:$0xff]
    %v974 = vld [vmem:[#allocation2 + $0x48] sm:$0xff]
    %v975 = vld [vmem:[#allocation2 + $0x50] sm:$0xff]
    %v976 = vld [vmem:[#allocation2 + $0x58] sm:$0xff]
    %v977 = vld [vmem:[#allocation2 + $0x60] sm:$0xff]
    %v978 = vld [vmem:[#allocation2 + $0x68] sm:$0xff]
    %v979 = vld [vmem:[#allocation2 + $0x70] sm:$0xff]
    %v980 = vld [vmem:[#allocation2 + $0x78] sm:$0xff]
    %v981 = vld [vmem:[#allocation2 + $0x80] sm:$0xff]
    %v982 = vld [vmem:[#allocation2 + $0x88] sm:$0xff]
    %v983 = vld [vmem:[#allocation2 + $0x90] sm:$0xff]
    %v984 = vld [vmem:[#allocation2 + $0x98] sm:$0xff]
    %v985 = vld [vmem:[#allocation2 + $0xa0] sm:$0xff]
    %v986 = vld [vmem:[#allocation2 + $0xa8] sm:$0xff]
    %v987 = vld [vmem:[#allocation2 + $0xb0] sm:$0xff]
    %v988 = vld [vmem:[#allocation2 + $0xb8] sm:$0xff]
    %v989 = vld [vmem:[#allocation2 + $0xc0] sm:$0xff]
    %v990 = vld [vmem:[#allocation2 + $0xc8] sm:$0xff]
    %v991 = vld [vmem:[#allocation2 + $0xd0] sm:$0xff]
    %v992 = vld [vmem:[#allocation2 + $0xd8] sm:$0xff]
    %v993 = vld [vmem:[#allocation2 + $0xe0] sm:$0xff]
    %v994 = vld [vmem:[#allocation2 + $0xe8] sm:$0xff]
    %v995 = vld [vmem:[#allocation2 + $0xf0] sm:$0xff]
    %v996 = vld [vmem:[#allocation2 + $0xf8] sm:$0xff]
    %v997 = vld [vmem:[#allocation2 + $0x100] sm:$0xff]
    %v998 = vld [vmem:[#allocation2 + $0x108] sm:$0xff]
    %v999 = vld [vmem:[#allocation2 + $0x110] sm:$0xff]
    %v1000 = vld [vmem:[#allocation2 + $0x118] sm:$0xff]
    %v1001 = vld [vmem:[#allocation2 + $0x120] sm:$0xff]
    %v1002 = vld [vmem:[#allocation2 + $0x128] sm:$0xff]
    %v1003 = vld [vmem:[#allocation2 + $0x130] sm:$0xff]
    %v1004 = vld [vmem:[#allocation2 + $0x138] sm:$0xff]
    %v1005 = vld [vmem:[#allocation2 + $0x140] sm:$0xff]
    %v1006 = vld [vmem:[#allocation2 + $0x148] sm:$0xff]
    %v1007 = vld [vmem:[#allocation2 + $0x150] sm:$0xff]
    %v1008 = vld [vmem:[#allocation2 + $0x158] sm:$0xff]
    %v1009 = vld [vmem:[#allocation2 + $0x160] sm:$0xff]
    %v1010 = vld [vmem:[#allocation2 + $0x168] sm:$0xff]
    %v1011 = vld [vmem:[#allocation2 + $0x170] sm:$0xff]
    %v1012 = vld [vmem:[#allocation2 + $0x178] sm:$0xff]
    %v1013 = vld [vmem:[#allocation2 + $0x180] sm:$0xff]
    %v1014 = vld [vmem:[#allocation2 + $0x188] sm:$0xff]
    %v1015 = vld [vmem:[#allocation2 + $0x190] sm:$0xff]
    %v1016 = vld [vmem:[#allocation2 + $0x198] sm:$0xff]
    %v1017 = vld [vmem:[#allocation2 + $0x1a0] sm:$0xff]
    %v1018 = vld [vmem:[#allocation2 + $0x1a8] sm:$0xff]
    %v1019 = vld [vmem:[#allocation2 + $0x1b0] sm:$0xff]
    %v1020 = vld [vmem:[#allocation2 + $0x1b8] sm:$0xff]
    %v1021 = vld [vmem:[#allocation2 + $0x1c0] sm:$0xff]
    %v1022 = vld [vmem:[#allocation2 + $0x1c8] sm:$0xff]
    %v1023 = vld [vmem:[#allocation2 + $0x1d0] sm:$0xff]
    %v1024 = vld [vmem:[#allocation2 + $0x1d8] sm:$0xff]
    %v1025 = vld [vmem:[#allocation2 + $0x1e0] sm:$0xff]
    %v1026 = vld [vmem:[#allocation2 + $0x1e8] sm:$0xff]
    %v1027 = vld [vmem:[#allocation2 + $0x1f0] sm:$0xff]
    %v1028 = vld [vmem:[#allocation2 + $0x1f8] sm:$0xff]
    %v1030 = vlaneseq
    %v1031 = vshrl.u32 %v1030, 7
    %v1032 = vsub.s32 0, %v1031
    %v1033 = vrot.slane %v961, %v1032
    %v1035 = vmul.f32 %v965, %v1033
    %v1036 = vmul.f32 %v966, %v1033
    %v1037 = vmul.f32 %v967, %v1033
    %v1038 = vmul.f32 %v968, %v1033
    %v1039 = vmul.f32 %v969, %v1033
    %v1040 = vmul.f32 %v970, %v1033
    %v1041 = vmul.f32 %v971, %v1033
    %v1042 = vmul.f32 %v972, %v1033
    %v1043 = vmul.f32 %v973, %v1033
    %v1044 = vmul.f32 %v974, %v1033
    %v1045 = vmul.f32 %v975, %v1033
    %v1046 = vmul.f32 %v976, %v1033
    %v1047 = vmul.f32 %v977, %v1033
    %v1048 = vmul.f32 %v978, %v1033
    %v1049 = vmul.f32 %v979, %v1033
    %v1050 = vmul.f32 %v980, %v1033
    %v1051 = vmul.f32 %v981, %v1033
    %v1052 = vmul.f32 %v982, %v1033
    %v1053 = vmul.f32 %v983, %v1033
    %v1054 = vmul.f32 %v984, %v1033
    %v1055 = vmul.f32 %v985, %v1033
    %v1056 = vmul.f32 %v986, %v1033
    %v1057 = vmul.f32 %v987, %v1033
    %v1058 = vmul.f32 %v988, %v1033
    %v1059 = vmul.f32 %v989, %v1033
    %v1060 = vmul.f32 %v990, %v1033
    %v1061 = vmul.f32 %v991, %v1033
    %v1062 = vmul.f32 %v992, %v1033
    %v1063 = vmul.f32 %v993, %v1033
    %v1064 = vmul.f32 %v994, %v1033
    %v1065 = vmul.f32 %v995, %v1033
    %v1066 = vmul.f32 %v996, %v1033
    %v1067 = vmul.f32 %v997, %v1033
    %v1068 = vmul.f32 %v998, %v1033
    %v1069 = vmul.f32 %v999, %v1033
    %v1070 = vmul.f32 %v1000, %v1033
    %v1071 = vmul.f32 %v1001, %v1033
    %v1072 = vmul.f32 %v1002, %v1033
    %v1073 = vmul.f32 %v1003, %v1033
    %v1074 = vmul.f32 %v1004, %v1033
    %v1075 = vmul.f32 %v1005, %v1033
    %v1076 = vmul.f32 %v1006, %v1033
    %v1077 = vmul.f32 %v1007, %v1033
    %v1078 = vmul.f32 %v1008, %v1033
    %v1079 = vmul.f32 %v1009, %v1033
    %v1080 = vmul.f32 %v1010, %v1033
    %v1081 = vmul.f32 %v1011, %v1033
    %v1082 = vmul.f32 %v1012, %v1033
    %v1083 = vmul.f32 %v1013, %v1033
    %v1084 = vmul.f32 %v1014, %v1033
    %v1085 = vmul.f32 %v1015, %v1033
    %v1086 = vmul.f32 %v1016, %v1033
    %v1087 = vmul.f32 %v1017, %v1033
    %v1088 = vmul.f32 %v1018, %v1033
    %v1089 = vmul.f32 %v1019, %v1033
    %v1090 = vmul.f32 %v1020, %v1033
    %v1091 = vmul.f32 %v1021, %v1033
    %v1092 = vmul.f32 %v1022, %v1033
    %v1093 = vmul.f32 %v1023, %v1033
    %v1094 = vmul.f32 %v1024, %v1033
    %v1095 = vmul.f32 %v1025, %v1033
    %v1096 = vmul.f32 %v1026, %v1033
    %v1097 = vmul.f32 %v1027, %v1033
    %v1098 = vmul.f32 %v1028, %v1033
    %v1100 = vlaneseq
    %v1101 = vshrl.u32 %v1100, 7
    %v1102 = vsub.s32 0, %v1101
    %v1103 = vrot.slane %v964, %v1102
    %v1105 = vadd.f32 %v1035, %v1103
    %v1106 = vadd.f32 %v1036, %v1103
    %v1107 = vadd.f32 %v1037, %v1103
    %v1108 = vadd.f32 %v1038, %v1103
    %v1109 = vadd.f32 %v1039, %v1103
    %v1110 = vadd.f32 %v1040, %v1103
    %v1111 = vadd.f32 %v1041, %v1103
    %v1112 = vadd.f32 %v1042, %v1103
    %v1113 = vadd.f32 %v1043, %v1103
    %v1114 = vadd.f32 %v1044, %v1103
    %v1115 = vadd.f32 %v1045, %v1103
    %v1116 = vadd.f32 %v1046, %v1103
    %v1117 = vadd.f32 %v1047, %v1103
    %v1118 = vadd.f32 %v1048, %v1103
    %v1119 = vadd.f32 %v1049, %v1103
    %v1120 = vadd.f32 %v1050, %v1103
    %v1121 = vadd.f32 %v1051, %v1103
    %v1122 = vadd.f32 %v1052, %v1103
    %v1123 = vadd.f32 %v1053, %v1103
    %v1124 = vadd.f32 %v1054, %v1103
    %v1125 = vadd.f32 %v1055, %v1103
    %v1126 = vadd.f32 %v1056, %v1103
    %v1127 = vadd.f32 %v1057, %v1103
    %v1128 = vadd.f32 %v1058, %v1103
    %v1129 = vadd.f32 %v1059, %v1103
    %v1130 = vadd.f32 %v1060, %v1103
    %v1131 = vadd.f32 %v1061, %v1103
    %v1132 = vadd.f32 %v1062, %v1103
    %v1133 = vadd.f32 %v1063, %v1103
    %v1134 = vadd.f32 %v1064, %v1103
    %v1135 = vadd.f32 %v1065, %v1103
    %v1136 = vadd.f32 %v1066, %v1103
    %v1137 = vadd.f32 %v1067, %v1103
    %v1138 = vadd.f32 %v1068, %v1103
    %v1139 = vadd.f32 %v1069, %v1103
    %v1140 = vadd.f32 %v1070, %v1103
    %v1141 = vadd.f32 %v1071, %v1103
    %v1142 = vadd.f32 %v1072, %v1103
    %v1143 = vadd.f32 %v1073, %v1103
    %v1144 = vadd.f32 %v1074, %v1103
    %v1145 = vadd.f32 %v1075, %v1103
    %v1146 = vadd.f32 %v1076, %v1103
    %v1147 = vadd.f32 %v1077, %v1103
    %v1148 = vadd.f32 %v1078, %v1103
    %v1149 = vadd.f32 %v1079, %v1103
    %v1150 = vadd.f32 %v1080, %v1103
    %v1151 = vadd.f32 %v1081, %v1103
    %v1152 = vadd.f32 %v1082, %v1103
    %v1153 = vadd.f32 %v1083, %v1103
    %v1154 = vadd.f32 %v1084, %v1103
    %v1155 = vadd.f32 %v1085, %v1103
    %v1156 = vadd.f32 %v1086, %v1103
    %v1157 = vadd.f32 %v1087, %v1103
    %v1158 = vadd.f32 %v1088, %v1103
    %v1159 = vadd.f32 %v1089, %v1103
    %v1160 = vadd.f32 %v1090, %v1103
    %v1161 = vadd.f32 %v1091, %v1103
    %v1162 = vadd.f32 %v1092, %v1103
    %v1163 = vadd.f32 %v1093, %v1103
    %v1164 = vadd.f32 %v1094, %v1103
    %v1165 = vadd.f32 %v1095, %v1103
    %v1166 = vadd.f32 %v1096, %v1103
    %v1167 = vadd.f32 %v1097, %v1103
    %v1168 = vadd.f32 %v1098, %v1103
    %v1169 = vmul.f32 %v1105, 0.2
    %v1170 = vmul.f32 %v1106, 0.2
    %v1171 = vmul.f32 %v1107, 0.2
    %v1172 = vmul.f32 %v1108, 0.2
    %v1173 = vmul.f32 %v1109, 0.2
    %v1174 = vmul.f32 %v1110, 0.2
    %v1175 = vmul.f32 %v1111, 0.2
    %v1176 = vmul.f32 %v1112, 0.2
    %v1177 = vmul.f32 %v1113, 0.2
    %v1178 = vmul.f32 %v1114, 0.2
    %v1179 = vmul.f32 %v1115, 0.2
    %v1180 = vmul.f32 %v1116, 0.2
    %v1181 = vmul.f32 %v1117, 0.2
    %v1182 = vmul.f32 %v1118, 0.2
    %v1183 = vmul.f32 %v1119, 0.2
    %v1184 = vmul.f32 %v1120, 0.2
    %v1185 = vmul.f32 %v1121, 0.2
    %v1186 = vmul.f32 %v1122, 0.2
    %v1187 = vmul.f32 %v1123, 0.2
    %v1188 = vmul.f32 %v1124, 0.2
    %v1189 = vmul.f32 %v1125, 0.2
    %v1190 = vmul.f32 %v1126, 0.2
    %v1191 = vmul.f32 %v1127, 0.2
    %v1192 = vmul.f32 %v1128, 0.2
    %v1193 = vmul.f32 %v1129, 0.2
    %v1194 = vmul.f32 %v1130, 0.2
    %v1195 = vmul.f32 %v1131, 0.2
    %v1196 = vmul.f32 %v1132, 0.2
    %v1197 = vmul.f32 %v1133, 0.2
    %v1198 = vmul.f32 %v1134, 0.2
    %v1199 = vmul.f32 %v1135, 0.2
    %v1200 = vmul.f32 %v1136, 0.2
    %v1201 = vmul.f32 %v1137, 0.2
    %v1202 = vmul.f32 %v1138, 0.2
    %v1203 = vmul.f32 %v1139, 0.2
    %v1204 = vmul.f32 %v1140, 0.2
    %v1205 = vmul.f32 %v1141, 0.2
    %v1206 = vmul.f32 %v1142, 0.2
    %v1207 = vmul.f32 %v1143, 0.2
    %v1208 = vmul.f32 %v1144, 0.2
    %v1209 = vmul.f32 %v1145, 0.2
    %v1210 = vmul.f32 %v1146, 0.2
    %v1211 = vmul.f32 %v1147, 0.2
    %v1212 = vmul.f32 %v1148, 0.2
    %v1213 = vmul.f32 %v1149, 0.2
    %v1214 = vmul.f32 %v1150, 0.2
    %v1215 = vmul.f32 %v1151, 0.2
    %v1216 = vmul.f32 %v1152, 0.2
    %v1217 = vmul.f32 %v1153, 0.2
    %v1218 = vmul.f32 %v1154, 0.2
    %v1219 = vmul.f32 %v1155, 0.2
    %v1220 = vmul.f32 %v1156, 0.2
    %v1221 = vmul.f32 %v1157, 0.2
    %v1222 = vmul.f32 %v1158, 0.2
    %v1223 = vmul.f32 %v1159, 0.2
    %v1224 = vmul.f32 %v1160, 0.2
    %v1225 = vmul.f32 %v1161, 0.2
    %v1226 = vmul.f32 %v1162, 0.2
    %v1227 = vmul.f32 %v1163, 0.2
    %v1228 = vmul.f32 %v1164, 0.2
    %v1229 = vmul.f32 %v1165, 0.2
    %v1230 = vmul.f32 %v1166, 0.2
    %v1231 = vmul.f32 %v1167, 0.2
    %v1232 = vmul.f32 %v1168, 0.2
    %v1233 = vmax.f32 %v1105, %v1169
    %v1234 = vmax.f32 %v1106, %v1170
    %v1235 = vmax.f32 %v1107, %v1171
    %v1236 = vmax.f32 %v1108, %v1172
    %v1237 = vmax.f32 %v1109, %v1173
    %v1238 = vmax.f32 %v1110, %v1174
    %v1239 = vmax.f32 %v1111, %v1175
    %v1240 = vmax.f32 %v1112, %v1176
    %v1241 = vmax.f32 %v1113, %v1177
    %v1242 = vmax.f32 %v1114, %v1178
    %v1243 = vmax.f32 %v1115, %v1179
    %v1244 = vmax.f32 %v1116, %v1180
    %v1245 = vmax.f32 %v1117, %v1181
    %v1246 = vmax.f32 %v1118, %v1182
    %v1247 = vmax.f32 %v1119, %v1183
    %v1248 = vmax.f32 %v1120, %v1184
    %v1249 = vmax.f32 %v1121, %v1185
    %v1250 = vmax.f32 %v1122, %v1186
    %v1251 = vmax.f32 %v1123, %v1187
    %v1252 = vmax.f32 %v1124, %v1188
    %v1253 = vmax.f32 %v1125, %v1189
    %v1254 = vmax.f32 %v1126, %v1190
    %v1255 = vmax.f32 %v1127, %v1191
    %v1256 = vmax.f32 %v1128, %v1192
    %v1257 = vmax.f32 %v1129, %v1193
    %v1258 = vmax.f32 %v1130, %v1194
    %v1259 = vmax.f32 %v1131, %v1195
    %v1260 = vmax.f32 %v1132, %v1196
    %v1261 = vmax.f32 %v1133, %v1197
    %v1262 = vmax.f32 %v1134, %v1198
    %v1263 = vmax.f32 %v1135, %v1199
    %v1264 = vmax.f32 %v1136, %v1200
    %v1265 = vmax.f32 %v1137, %v1201
    %v1266 = vmax.f32 %v1138, %v1202
    %v1267 = vmax.f32 %v1139, %v1203
    %v1268 = vmax.f32 %v1140, %v1204
    %v1269 = vmax.f32 %v1141, %v1205
    %v1270 = vmax.f32 %v1142, %v1206
    %v1271 = vmax.f32 %v1143, %v1207
    %v1272 = vmax.f32 %v1144, %v1208
    %v1273 = vmax.f32 %v1145, %v1209
    %v1274 = vmax.f32 %v1146, %v1210
    %v1275 = vmax.f32 %v1147, %v1211
    %v1276 = vmax.f32 %v1148, %v1212
    %v1277 = vmax.f32 %v1149, %v1213
    %v1278 = vmax.f32 %v1150, %v1214
    %v1279 = vmax.f32 %v1151, %v1215
    %v1280 = vmax.f32 %v1152, %v1216
    %v1281 = vmax.f32 %v1153, %v1217
    %v1282 = vmax.f32 %v1154, %v1218
    %v1283 = vmax.f32 %v1155, %v1219
    %v1284 = vmax.f32 %v1156, %v1220
    %v1285 = vmax.f32 %v1157, %v1221
    %v1286 = vmax.f32 %v1158, %v1222
    %v1287 = vmax.f32 %v1159, %v1223
    %v1288 = vmax.f32 %v1160, %v1224
    %v1289 = vmax.f32 %v1161, %v1225
    %v1290 = vmax.f32 %v1162, %v1226
    %v1291 = vmax.f32 %v1163, %v1227
    %v1292 = vmax.f32 %v1164, %v1228
    %v1293 = vmax.f32 %v1165, %v1229
    %v1294 = vmax.f32 %v1166, %v1230
    %v1295 = vmax.f32 %v1167, %v1231
    %v1296 = vmax.f32 %v1168, %v1232
    %v1297 = vpack.c.bf16 %v1234, %v1233
    %v1298 = vpack.c.bf16 %v1236, %v1235
    %v1299 = vpack.c.bf16 %v1238, %v1237
    %v1300 = vpack.c.bf16 %v1240, %v1239
    %v1301 = vpack.c.bf16 %v1242, %v1241
    %v1302 = vpack.c.bf16 %v1244, %v1243
    %v1303 = vpack.c.bf16 %v1246, %v1245
    %v1304 = vpack.c.bf16 %v1248, %v1247
    %v1305 = vpack.c.bf16 %v1250, %v1249
    %v1306 = vpack.c.bf16 %v1252, %v1251
    %v1307 = vpack.c.bf16 %v1254, %v1253
    %v1308 = vpack.c.bf16 %v1256, %v1255
    %v1309 = vpack.c.bf16 %v1258, %v1257
    %v1310 = vpack.c.bf16 %v1260, %v1259
    %v1311 = vpack.c.bf16 %v1262, %v1261
    %v1312 = vpack.c.bf16 %v1264, %v1263
    %v1313 = vpack.c.bf16 %v1266, %v1265
    %v1314 = vpack.c.bf16 %v1268, %v1267
    %v1315 = vpack.c.bf16 %v1270, %v1269
    %v1316 = vpack.c.bf16 %v1272, %v1271
    %v1317 = vpack.c.bf16 %v1274, %v1273
    %v1318 = vpack.c.bf16 %v1276, %v1275
    %v1319 = vpack.c.bf16 %v1278, %v1277
    %v1320 = vpack.c.bf16 %v1280, %v1279
    %v1321 = vpack.c.bf16 %v1282, %v1281
    %v1322 = vpack.c.bf16 %v1284, %v1283
    %v1323 = vpack.c.bf16 %v1286, %v1285
    %v1324 = vpack.c.bf16 %v1288, %v1287
    %v1325 = vpack.c.bf16 %v1290, %v1289
    %v1326 = vpack.c.bf16 %v1292, %v1291
    %v1327 = vpack.c.bf16 %v1294, %v1293
    %v1328 = vpack.c.bf16 %v1296, %v1295
    %v1361 = vunpack.c.l.b16 %v1297
    %v1362 = vunpack.c.h.b16 %v1297
    %v1363 = vunpack.c.l.b16 %v1298
    %v1364 = vunpack.c.h.b16 %v1298
    %v1365 = vunpack.c.l.b16 %v1299
    %v1366 = vunpack.c.h.b16 %v1299
    %v1367 = vunpack.c.l.b16 %v1300
    %v1368 = vunpack.c.h.b16 %v1300
    %v1369 = vunpack.c.l.b16 %v1301
    %v1370 = vunpack.c.h.b16 %v1301
    %v1371 = vunpack.c.l.b16 %v1302
    %v1372 = vunpack.c.h.b16 %v1302
    %v1373 = vunpack.c.l.b16 %v1303
    %v1374 = vunpack.c.h.b16 %v1303
    %v1375 = vunpack.c.l.b16 %v1304
    %v1376 = vunpack.c.h.b16 %v1304
    %v1377 = vunpack.c.l.b16 %v1305
    %v1378 = vunpack.c.h.b16 %v1305
    %v1379 = vunpack.c.l.b16 %v1306
    %v1380 = vunpack.c.h.b16 %v1306
    %v1381 = vunpack.c.l.b16 %v1307
    %v1382 = vunpack.c.h.b16 %v1307
    %v1383 = vunpack.c.l.b16 %v1308
    %v1384 = vunpack.c.h.b16 %v1308
    %v1385 = vunpack.c.l.b16 %v1309
    %v1386 = vunpack.c.h.b16 %v1309
    %v1387 = vunpack.c.l.b16 %v1310
    %v1388 = vunpack.c.h.b16 %v1310
    %v1389 = vunpack.c.l.b16 %v1311
    %v1390 = vunpack.c.h.b16 %v1311
    %v1391 = vunpack.c.l.b16 %v1312
    %v1392 = vunpack.c.h.b16 %v1312
    %v1393 = vunpack.c.l.b16 %v1313
    %v1394 = vunpack.c.h.b16 %v1313
    %v1395 = vunpack.c.l.b16 %v1314
    %v1396 = vunpack.c.h.b16 %v1314
    %v1397 = vunpack.c.l.b16 %v1315
    %v1398 = vunpack.c.h.b16 %v1315
    %v1399 = vunpack.c.l.b16 %v1316
    %v1400 = vunpack.c.h.b16 %v1316
    %v1401 = vunpack.c.l.b16 %v1317
    %v1402 = vunpack.c.h.b16 %v1317
    %v1403 = vunpack.c.l.b16 %v1318
    %v1404 = vunpack.c.h.b16 %v1318
    %v1405 = vunpack.c.l.b16 %v1319
    %v1406 = vunpack.c.h.b16 %v1319
    %v1407 = vunpack.c.l.b16 %v1320
    %v1408 = vunpack.c.h.b16 %v1320
    %v1409 = vunpack.c.l.b16 %v1321
    %v1410 = vunpack.c.h.b16 %v1321
    %v1411 = vunpack.c.l.b16 %v1322
    %v1412 = vunpack.c.h.b16 %v1322
    %v1413 = vunpack.c.l.b16 %v1323
    %v1414 = vunpack.c.h.b16 %v1323
    %v1415 = vunpack.c.l.b16 %v1324
    %v1416 = vunpack.c.h.b16 %v1324
    %v1417 = vunpack.c.l.b16 %v1325
    %v1418 = vunpack.c.h.b16 %v1325
    %v1419 = vunpack.c.l.b16 %v1326
    %v1420 = vunpack.c.h.b16 %v1326
    %v1421 = vunpack.c.l.b16 %v1327
    %v1422 = vunpack.c.h.b16 %v1327
    %v1423 = vunpack.c.l.b16 %v1328
    %v1424 = vunpack.c.h.b16 %v1328
    %v1425 = vpack.c.b16 %v1361, %v1361
    %v1426 = vpack.c.b16 %v1362, %v1362
    %v1427 = vpack.c.b16 %v1363, %v1363
    %v1428 = vpack.c.b16 %v1364, %v1364
    %v1429 = vpack.c.b16 %v1365, %v1365
    %v1430 = vpack.c.b16 %v1366, %v1366
    %v1431 = vpack.c.b16 %v1367, %v1367
    %v1432 = vpack.c.b16 %v1368, %v1368
    %v1433 = vpack.c.b16 %v1369, %v1369
    %v1434 = vpack.c.b16 %v1370, %v1370
    %v1435 = vpack.c.b16 %v1371, %v1371
    %v1436 = vpack.c.b16 %v1372, %v1372
    %v1437 = vpack.c.b16 %v1373, %v1373
    %v1438 = vpack.c.b16 %v1374, %v1374
    %v1439 = vpack.c.b16 %v1375, %v1375
    %v1440 = vpack.c.b16 %v1376, %v1376
    %v1441 = vpack.c.b16 %v1377, %v1377
    %v1442 = vpack.c.b16 %v1378, %v1378
    %v1443 = vpack.c.b16 %v1379, %v1379
    %v1444 = vpack.c.b16 %v1380, %v1380
    %v1445 = vpack.c.b16 %v1381, %v1381
    %v1446 = vpack.c.b16 %v1382, %v1382
    %v1447 = vpack.c.b16 %v1383, %v1383
    %v1448 = vpack.c.b16 %v1384, %v1384
    %v1449 = vpack.c.b16 %v1385, %v1385
    %v1450 = vpack.c.b16 %v1386, %v1386
    %v1451 = vpack.c.b16 %v1387, %v1387
    %v1452 = vpack.c.b16 %v1388, %v1388
    %v1453 = vpack.c.b16 %v1389, %v1389
    %v1454 = vpack.c.b16 %v1390, %v1390
    %v1455 = vpack.c.b16 %v1391, %v1391
    %v1456 = vpack.c.b16 %v1392, %v1392
    %v1457 = vpack.c.b16 %v1393, %v1393
    %v1458 = vpack.c.b16 %v1394, %v1394
    %v1459 = vpack.c.b16 %v1395, %v1395
    %v1460 = vpack.c.b16 %v1396, %v1396
    %v1461 = vpack.c.b16 %v1397, %v1397
    %v1462 = vpack.c.b16 %v1398, %v1398
    %v1463 = vpack.c.b16 %v1399, %v1399
    %v1464 = vpack.c.b16 %v1400, %v1400
    %v1465 = vpack.c.b16 %v1401, %v1401
    %v1466 = vpack.c.b16 %v1402, %v1402
    %v1467 = vpack.c.b16 %v1403, %v1403
    %v1468 = vpack.c.b16 %v1404, %v1404
    %v1469 = vpack.c.b16 %v1405, %v1405
    %v1470 = vpack.c.b16 %v1406, %v1406
    %v1471 = vpack.c.b16 %v1407, %v1407
    %v1472 = vpack.c.b16 %v1408, %v1408
    %v1473 = vpack.c.b16 %v1409, %v1409
    %v1474 = vpack.c.b16 %v1410, %v1410
    %v1475 = vpack.c.b16 %v1411, %v1411
    %v1476 = vpack.c.b16 %v1412, %v1412
    %v1477 = vpack.c.b16 %v1413, %v1413
    %v1478 = vpack.c.b16 %v1414, %v1414
    %v1479 = vpack.c.b16 %v1415, %v1415
    %v1480 = vpack.c.b16 %v1416, %v1416
    %v1481 = vpack.c.b16 %v1417, %v1417
    %v1482 = vpack.c.b16 %v1418, %v1418
    %v1483 = vpack.c.b16 %v1419, %v1419
    %v1484 = vpack.c.b16 %v1420, %v1420
    %v1485 = vpack.c.b16 %v1421, %v1421
    %v1486 = vpack.c.b16 %v1422, %v1422
    %v1487 = vpack.c.b16 %v1423, %v1423
    %v1488 = vpack.c.b16 %v1424, %v1424
    %1553 = vst [vmem:[%s4] sm:$0xf] %v1425
    %1554 = vst [vmem:[%s4 + $0x4] sm:$0xf] %v1426
    %1555 = vst [vmem:[%s4 + $0x8] sm:$0xf] %v1427
    %1556 = vst [vmem:[%s4 + $0xc] sm:$0xf] %v1428
    %1557 = vst [vmem:[%s4 + $0x10] sm:$0xf] %v1429
    %1558 = vst [vmem:[%s4 + $0x14] sm:$0xf] %v1430
    %1559 = vst [vmem:[%s4 + $0x18] sm:$0xf] %v1431
    %1560 = vst [vmem:[%s4 + $0x1c] sm:$0xf] %v1432
    %1561 = vst [vmem:[%s4 + $0x20] sm:$0xf] %v1433
    %1562 = vst [vmem:[%s4 + $0x24] sm:$0xf] %v1434
    %1563 = vst [vmem:[%s4 + $0x28] sm:$0xf] %v1435
    %1564 = vst [vmem:[%s4 + $0x2c] sm:$0xf] %v1436
    %1565 = vst [vmem:[%s4 + $0x30] sm:$0xf] %v1437
    %1566 = vst [vmem:[%s4 + $0x34] sm:$0xf] %v1438
    %1567 = vst [vmem:[%s4 + $0x38] sm:$0xf] %v1439
    %1568 = vst [vmem:[%s4 + $0x3c] sm:$0xf] %v1440
    %1569 = vst [vmem:[%s4 + $0x40] sm:$0xf] %v1441
    %1570 = vst [vmem:[%s4 + $0x44] sm:$0xf] %v1442
    %1571 = vst [vmem:[%s4 + $0x48] sm:$0xf] %v1443
    %1572 = vst [vmem:[%s4 + $0x4c] sm:$0xf] %v1444
    %1573 = vst [vmem:[%s4 + $0x50] sm:$0xf] %v1445
    %1574 = vst [vmem:[%s4 + $0x54] sm:$0xf] %v1446
    %1575 = vst [vmem:[%s4 + $0x58] sm:$0xf] %v1447
    %1576 = vst [vmem:[%s4 + $0x5c] sm:$0xf] %v1448
    %1577 = vst [vmem:[%s4 + $0x60] sm:$0xf] %v1449
    %1578 = vst [vmem:[%s4 + $0x64] sm:$0xf] %v1450
    %1579 = vst [vmem:[%s4 + $0x68] sm:$0xf] %v1451
    %1580 = vst [vmem:[%s4 + $0x6c] sm:$0xf] %v1452
    %1581 = vst [vmem:[%s4 + $0x70] sm:$0xf] %v1453
    %1582 = vst [vmem:[%s4 + $0x74] sm:$0xf] %v1454
    %1583 = vst [vmem:[%s4 + $0x78] sm:$0xf] %v1455
    %1584 = vst [vmem:[%s4 + $0x7c] sm:$0xf] %v1456
    %1585 = vst [vmem:[%s4 + $0x80] sm:$0xf] %v1457
    %1586 = vst [vmem:[%s4 + $0x84] sm:$0xf] %v1458
    %1587 = vst [vmem:[%s4 + $0x88] sm:$0xf] %v1459
    %1588 = vst [vmem:[%s4 + $0x8c] sm:$0xf] %v1460
    %1589 = vst [vmem:[%s4 + $0x90] sm:$0xf] %v1461
    %1590 = vst [vmem:[%s4 + $0x94] sm:$0xf] %v1462
    %1591 = vst [vmem:[%s4 + $0x98] sm:$0xf] %v1463
    %1592 = vst [vmem:[%s4 + $0x9c] sm:$0xf] %v1464
    %1593 = vst [vmem:[%s4 + $0xa0] sm:$0xf] %v1465
    %1594 = vst [vmem:[%s4 + $0xa4] sm:$0xf] %v1466
    %1595 = vst [vmem:[%s4 + $0xa8] sm:$0xf] %v1467
    %1596 = vst [vmem:[%s4 + $0xac] sm:$0xf] %v1468
    %1597 = vst [vmem:[%s4 + $0xb0] sm:$0xf] %v1469
    %1598 = vst [vmem:[%s4 + $0xb4] sm:$0xf] %v1470
    %1599 = vst [vmem:[%s4 + $0xb8] sm:$0xf] %v1471
    %1600 = vst [vmem:[%s4 + $0xbc] sm:$0xf] %v1472
    %1601 = vst [vmem:[%s4 + $0xc0] sm:$0xf] %v1473
    %1602 = vst [vmem:[%s4 + $0xc4] sm:$0xf] %v1474
    %1603 = vst [vmem:[%s4 + $0xc8] sm:$0xf] %v1475
    %1604 = vst [vmem:[%s4 + $0xcc] sm:$0xf] %v1476
    %1605 = vst [vmem:[%s4 + $0xd0] sm:$0xf] %v1477
    %1606 = vst [vmem:[%s4 + $0xd4] sm:$0xf] %v1478
    %1607 = vst [vmem:[%s4 + $0xd8] sm:$0xf] %v1479
    %1608 = vst [vmem:[%s4 + $0xdc] sm:$0xf] %v1480
    %1609 = vst [vmem:[%s4 + $0xe0] sm:$0xf] %v1481
    %1610 = vst [vmem:[%s4 + $0xe4] sm:$0xf] %v1482
    %1611 = vst [vmem:[%s4 + $0xe8] sm:$0xf] %v1483
    %1612 = vst [vmem:[%s4 + $0xec] sm:$0xf] %v1484
    %1613 = vst [vmem:[%s4 + $0xf0] sm:$0xf] %v1485
    %1614 = vst [vmem:[%s4 + $0xf4] sm:$0xf] %v1486
    %1615 = vst [vmem:[%s4 + $0xf8] sm:$0xf] %v1487
    %1616 = vst [vmem:[%s4 + $0xfc] sm:$0xf] %v1488
  $region25: #{discriminator_forward.4} parent=0 // pred_fallthru
    _
  // Predicated region
  $region26: #{discriminator_forward.4} parent=0 // pred_check
    _
  $region27: #{discriminator_forward.4} parent=0 // pred_check_branch
    %1618 = sbr.rel (0) target = $region29
  $region28: #{discriminator_forward.4} parent=0 // pred_region
    _
  $region29: #{discriminator_forward.4} parent=0 // pred_fallthru
    _
  // Predicated region
  $region30: #{discriminator_forward.4} parent=0 // pred_check
    _
  $region31: #{discriminator_forward.4} parent=0 // pred_check_branch
    %1620 = sbr.rel (0) target = $region33
  $region32: #{discriminator_forward.4} parent=0 // pred_region
    _
  $region33: #{discriminator_forward.4} parent=0 // pred_fallthru
    _

// kernel: discriminator_forward.5
$region0: #{discriminator_forward.5}
  #allocation0 [shape = 'u32[]', space=smem, size = 0x4, offset = 0x4, fixed_abs, tag = 'smem constant byte address 0x4 - core index']
  #allocation1 [shape = 'u32[144,128]{1,0:T(1,128)}', space=vmem, size = 0x12000, scoped, tag = 'internal scratch']
  #allocation2 [shape = 'f32[128,128]{1,0:T(8,128)}', space=vmem, size = 0x10000, scoped, tag = 'scratch operand']
  #allocation3 [shape = 'f32[2,128]{1,0:T(2,128)}', space=vmem, size = 0x400, scoped, tag = 'scratch operand']
  %s0 = inlined_call_operand.vmem [shape: bf16[128,256], index: 0, kind: input, shape index: {}]
  %s1 = inlined_call_operand.vmem [shape: bf16[256,128], index: 1, kind: input, shape index: {}]
  %s2 = inlined_call_operand.vmem [shape: f32[1,128], index: 2, kind: input, shape index: {}]
  %s3 = inlined_call_operand.vmem [shape: f32[1,128], index: 3, kind: input, shape index: {}]
  %s4 = inlined_call_operand.vmem [shape: bf16[128,128], index: 4, kind: output, shape index: {}]
  %s5 = sld [smem:[#allocation0]]
  $region34: #{discriminator_forward.5} parent=0
    _
  %s7 = ssub.s32 1, %s5
  %s8 = scalar_select 0, %s7, %s5
  // Predicated region
  $region2: #{discriminator_forward.5} parent=0 // pred_check
    _
  $region3: #{discriminator_forward.5} parent=0 // pred_check_branch
    %10 = sbr.rel (0) target = $region5
  $region4: #{discriminator_forward.5} parent=0 // pred_region
    _
  $region5: #{discriminator_forward.5} parent=0 // pred_fallthru
    _
  // Predicated region
  $region6: #{discriminator_forward.5} parent=0 // pred_check
    _
  $region7: #{discriminator_forward.5} parent=0 // pred_check_branch
    %12 = sbr.rel (0) target = $region9
  $region8: #{discriminator_forward.5} parent=0 // pred_region
    _
  $region9: #{discriminator_forward.5} parent=0 // pred_fallthru
    _
  // Predicated region
  $region10: #{discriminator_forward.5} parent=0 // pred_check
    _
  $region11: #{discriminator_forward.5} parent=0 // pred_check_branch
    %14 = sbr.rel (0) target = $region13
  $region12: #{discriminator_forward.5} parent=0 // pred_region
    _
  $region13: #{discriminator_forward.5} parent=0 // pred_fallthru
    _
  // Predicated region
  $region14: #{discriminator_forward.5} parent=0 // pred_check
    _
  $region15: #{discriminator_forward.5} parent=0 // pred_check_branch
    %16 = sbr.rel (0) target = $region17
  $region16: #{discriminator_forward.5} parent=0 // pred_region
    _
  $region17: #{discriminator_forward.5} parent=0 // pred_fallthru
    _
  %p18 = scmp.eq.s32.totalorder 0, 0
  // Predicated region
  $region18: #{discriminator_forward.5} parent=0 // pred_check
    %p19 = pneg %p18
  $region19: #{discriminator_forward.5} parent=0 // pred_check_branch
    %21 = sbr.rel (%p19) target = $region21
  $region20: #{discriminator_forward.5} parent=0 // pred_region
    %22 = vst [vmem:[#allocation3] sm:$0x3] 0.0
  $region21: #{discriminator_forward.5} parent=0 // pred_fallthru
    _
  %v23 = vld [vmem:[%s0] sm:$0xff]
  %v24 = vld [vmem:[%s0 + $0x8] sm:$0xff]
  %v25 = vld [vmem:[%s0 + $0x10] sm:$0xff]
  %v26 = vld [vmem:[%s0 + $0x18] sm:$0xff]
  %v27 = vld [vmem:[%s0 + $0x20] sm:$0xff]
  %v28 = vld [vmem:[%s0 + $0x28] sm:$0xff]
  %v29 = vld [vmem:[%s0 + $0x30] sm:$0xff]
  %v30 = vld [vmem:[%s0 + $0x38] sm:$0xff]
  %v31 = vld [vmem:[%s0 + $0x40] sm:$0xff]
  %v32 = vld [vmem:[%s0 + $0x48] sm:$0xff]
  %v33 = vld [vmem:[%s0 + $0x50] sm:$0xff]
  %v34 = vld [vmem:[%s0 + $0x58] sm:$0xff]
  %v35 = vld [vmem:[%s0 + $0x60] sm:$0xff]
  %v36 = vld [vmem:[%s0 + $0x68] sm:$0xff]
  %v37 = vld [vmem:[%s0 + $0x70] sm:$0xff]
  %v38 = vld [vmem:[%s0 + $0x78] sm:$0xff]
  %v39 = vld [vmem:[%s1] sm:$0xf]
  %v40 = vld [vmem:[%s1 + $0x4] sm:$0xf]
  %v41 = vld [vmem:[%s1 + $0x8] sm:$0xf]
  %v42 = vld [vmem:[%s1 + $0xc] sm:$0xf]
  %v43 = vld [vmem:[%s1 + $0x10] sm:$0xf]
  %v44 = vld [vmem:[%s1 + $0x14] sm:$0xf]
  %v45 = vld [vmem:[%s1 + $0x18] sm:$0xf]
  %v46 = vld [vmem:[%s1 + $0x1c] sm:$0xf]
  %v47 = vld [vmem:[%s1 + $0x20] sm:$0xf]
  %v48 = vld [vmem:[%s1 + $0x24] sm:$0xf]
  %v49 = vld [vmem:[%s1 + $0x28] sm:$0xf]
  %v50 = vld [vmem:[%s1 + $0x2c] sm:$0xf]
  %v51 = vld [vmem:[%s1 + $0x30] sm:$0xf]
  %v52 = vld [vmem:[%s1 + $0x34] sm:$0xf]
  %v53 = vld [vmem:[%s1 + $0x38] sm:$0xf]
  %v54 = vld [vmem:[%s1 + $0x3c] sm:$0xf]
  %v55 = vld [vmem:[%s1 + $0x40] sm:$0xf]
  %v56 = vld [vmem:[%s1 + $0x44] sm:$0xf]
  %v57 = vld [vmem:[%s1 + $0x48] sm:$0xf]
  %v58 = vld [vmem:[%s1 + $0x4c] sm:$0xf]
  %v59 = vld [vmem:[%s1 + $0x50] sm:$0xf]
  %v60 = vld [vmem:[%s1 + $0x54] sm:$0xf]
  %v61 = vld [vmem:[%s1 + $0x58] sm:$0xf]
  %v62 = vld [vmem:[%s1 + $0x5c] sm:$0xf]
  %v63 = vld [vmem:[%s1 + $0x60] sm:$0xf]
  %v64 = vld [vmem:[%s1 + $0x64] sm:$0xf]
  %v65 = vld [vmem:[%s1 + $0x68] sm:$0xf]
  %v66 = vld [vmem:[%s1 + $0x6c] sm:$0xf]
  %v67 = vld [vmem:[%s1 + $0x70] sm:$0xf]
  %v68 = vld [vmem:[%s1 + $0x74] sm:$0xf]
  %v69 = vld [vmem:[%s1 + $0x78] sm:$0xf]
  %v70 = vld [vmem:[%s1 + $0x7c] sm:$0xf]
  %v87 = vunpack.c.l.b16 %v23
  %v88 = vunpack.c.h.b16 %v23
  %v89 = vunpack.c.l.b16 %v24
  %v90 = vunpack.c.h.b16 %v24
  %v91 = vunpack.c.l.b16 %v25
  %v92 = vunpack.c.h.b16 %v25
  %v93 = vunpack.c.l.b16 %v26
  %v94 = vunpack.c.h.b16 %v26
  %v95 = vunpack.c.l.b16 %v27
  %v96 = vunpack.c.h.b16 %v27
  %v97 = vunpack.c.l.b16 %v28
  %v98 = vunpack.c.h.b16 %v28
  %v99 = vunpack.c.l.b16 %v29
  %v100 = vunpack.c.h.b16 %v29
  %v101 = vunpack.c.l.b16 %v30
  %v102 = vunpack.c.h.b16 %v30
  %v103 = vunpack.c.l.b16 %v31
  %v104 = vunpack.c.h.b16 %v31
  %v105 = vunpack.c.l.b16 %v32
  %v106 = vunpack.c.h.b16 %v32
  %v107 = vunpack.c.l.b16 %v33
  %v108 = vunpack.c.h.b16 %v33
  %v109 = vunpack.c.l.b16 %v34
  %v110 = vunpack.c.h.b16 %v34
  %v111 = vunpack.c.l.b16 %v35
  %v112 = vunpack.c.h.b16 %v35
  %v113 = vunpack.c.l.b16 %v36
  %v114 = vunpack.c.h.b16 %v36
  %v115 = vunpack.c.l.b16 %v37
  %v116 = vunpack.c.h.b16 %v37
  %v117 = vunpack.c.l.b16 %v38
  %v118 = vunpack.c.h.b16 %v38
  %v119 = vpack.c.b16 %v89, %v87
  %v120 = vpack.c.b16 %v90, %v88
  %v121 = vpack.c.b16 %v93, %v91
  %v122 = vpack.c.b16 %v94, %v92
  %v123 = vpack.c.b16 %v97, %v95
  %v124 = vpack.c.b16 %v98, %v96
  %v125 = vpack.c.b16 %v101, %v99
  %v126 = vpack.c.b16 %v102, %v100
  %v127 = vpack.c.b16 %v105, %v103
  %v128 = vpack.c.b16 %v106, %v104
  %v129 = vpack.c.b16 %v109, %v107
  %v130 = vpack.c.b16 %v110, %v108
  %v131 = vpack.c.b16 %v113, %v111
  %v132 = vpack.c.b16 %v114, %v112
  %v133 = vpack.c.b16 %v117, %v115
  %v134 = vpack.c.b16 %v118, %v116
  %v183 = vunpack.c.l.b16 %v39
  %v184 = vunpack.c.l.b16 %v40
  %v185 = vunpack.c.l.b16 %v41
  %v186 = vunpack.c.l.b16 %v42
  %v187 = vunpack.c.l.b16 %v43
  %v188 = vunpack.c.l.b16 %v44
  %v189 = vunpack.c.l.b16 %v45
  %v190 = vunpack.c.l.b16 %v46
  %v191 = vunpack.c.l.b16 %v47
  %v192 = vunpack.c.l.b16 %v48
  %v193 = vunpack.c.l.b16 %v49
  %v194 = vunpack.c.l.b16 %v50
  %v195 = vunpack.c.l.b16 %v51
  %v196 = vunpack.c.l.b16 %v52
  %v197 = vunpack.c.l.b16 %v53
  %v198 = vunpack.c.l.b16 %v54
  %v199 = vunpack.c.l.b16 %v55
  %v200 = vunpack.c.l.b16 %v56
  %v201 = vunpack.c.l.b16 %v57
  %v202 = vunpack.c.l.b16 %v58
  %v203 = vunpack.c.l.b16 %v59
  %v204 = vunpack.c.l.b16 %v60
  %v205 = vunpack.c.l.b16 %v61
  %v206 = vunpack.c.l.b16 %v62
  %v207 = vunpack.c.l.b16 %v63
  %v208 = vunpack.c.l.b16 %v64
  %v209 = vunpack.c.l.b16 %v65
  %v210 = vunpack.c.l.b16 %v66
  %v211 = vunpack.c.l.b16 %v67
  %v212 = vunpack.c.l.b16 %v68
  %v213 = vunpack.c.l.b16 %v69
  %v214 = vunpack.c.l.b16 %v70
  %v215 = vpack.c.b16 %v184, %v183
  %v216 = vpack.c.b16 %v186, %v185
  %v217 = vpack.c.b16 %v188, %v187
  %v218 = vpack.c.b16 %v190, %v189
  %v219 = vpack.c.b16 %v192, %v191
  %v220 = vpack.c.b16 %v194, %v193
  %v221 = vpack.c.b16 %v196, %v195
  %v222 = vpack.c.b16 %v198, %v197
  %v223 = vpack.c.b16 %v200, %v199
  %v224 = vpack.c.b16 %v202, %v201
  %v225 = vpack.c.b16 %v204, %v203
  %v226 = vpack.c.b16 %v206, %v205
  %v227 = vpack.c.b16 %v208, %v207
  %v228 = vpack.c.b16 %v210, %v209
  %v229 = vpack.c.b16 %v212, %v211
  %v230 = vpack.c.b16 %v214, %v213
  %247 = vmatprep.subr.bf16.mxu0 0
  %248 = vmatpush1.bf16.msra.mxu0 %v215
  %249 = vmatprep.subr.bf16.mxu0 0
  %250 = vmatpush1.bf16.msra.mxu0 %v216
  %251 = vmatprep.subr.bf16.mxu0 0
  %252 = vmatpush1.bf16.msra.mxu0 %v217
  %253 = vmatprep.subr.bf16.mxu0 0
  %254 = vmatpush1.bf16.msra.mxu0 %v218
  %255 = vmatprep.subr.bf16.mxu0 0
  %256 = vmatpush1.bf16.msra.mxu0 %v219
  %257 = vmatprep.subr.bf16.mxu0 0
  %258 = vmatpush1.bf16.msra.mxu0 %v220
  %259 = vmatprep.subr.bf16.mxu0 0
  %260 = vmatpush1.bf16.msra.mxu0 %v221
  %261 = vmatprep.subr.bf16.mxu0 0
  %262 = vmatpush1.bf16.msra.mxu0 %v222
  %263 = vmatprep.subr.bf16.mxu0 0
  %264 = vmatpush1.bf16.msra.mxu0 %v223
  %265 = vmatprep.subr.bf16.mxu0 0
  %266 = vmatpush1.bf16.msra.mxu0 %v224
  %267 = vmatprep.subr.bf16.mxu0 0
  %268 = vmatpush1.bf16.msra.mxu0 %v225
  %269 = vmatprep.subr.bf16.mxu0 0
  %270 = vmatpush1.bf16.msra.mxu0 %v226
  %271 = vmatprep.subr.bf16.mxu0 0
  %272 = vmatpush1.bf16.msra.mxu0 %v227
  %273 = vmatprep.subr.bf16.mxu0 0
  %274 = vmatpush1.bf16.msra.mxu0 %v228
  %275 = vmatprep.subr.bf16.mxu0 0
  %276 = vmatpush1.bf16.msra.mxu0 %v229
  %277 = vmatprep.subr.bf16.mxu0 0
  %278 = vmatpush1.bf16.msra.mxu0 %v230
  %279 = vmatprep.mubr.bf16.mxu0 %v120
  %280 = vmatmul.mubr.bf16.gmra.mrb[0].mxu0 %v119
  %v281 = vpop.f32.mrb[0].mxu0
  %v282 = vadd.f32 0.0, %v281
  %v283 = vpop.f32.mrb[0].mxu0
  %v284 = vpop.f32.mrb[0].mxu0
  %v285 = vadd.f32 0.0, %v284
  %v286 = vpop.f32.mrb[0].mxu0
  %287 = vmatprep.mubr.bf16.mxu0 %v122
  %288 = vmatmul.mubr.bf16.gmra.mrb[0].mxu0 %v121
  %v289 = vpop.f32.mrb[0].mxu0
  %v290 = vadd.f32 0.0, %v289
  %v291 = vpop.f32.mrb[0].mxu0
  %v292 = vpop.f32.mrb[0].mxu0
  %v293 = vadd.f32 0.0, %v292
  %v294 = vpop.f32.mrb[0].mxu0
  %295 = vmatprep.mubr.bf16.mxu0 %v124
  %296 = vmatmul.mubr.bf16.gmra.mrb[0].mxu0 %v123
  %v297 = vpop.f32.mrb[0].mxu0
  %v298 = vadd.f32 0.0, %v297
  %v299 = vpop.f32.mrb[0].mxu0
  %v300 = vpop.f32.mrb[0].mxu0
  %v301 = vadd.f32 0.0, %v300
  %v302 = vpop.f32.mrb[0].mxu0
  %303 = vmatprep.mubr.bf16.mxu0 %v126
  %304 = vmatmul.mubr.bf16.gmra.mrb[0].mxu0 %v125
  %v305 = vpop.f32.mrb[0].mxu0
  %v306 = vadd.f32 0.0, %v305
  %v307 = vpop.f32.mrb[0].mxu0
  %v308 = vpop.f32.mrb[0].mxu0
  %v309 = vadd.f32 0.0, %v308
  %v310 = vpop.f32.mrb[0].mxu0
  %311 = vmatprep.mubr.bf16.mxu0 %v128
  %312 = vmatmul.mubr.bf16.gmra.mrb[0].mxu0 %v127
  %v313 = vpop.f32.mrb[0].mxu0
  %v314 = vadd.f32 0.0, %v313
  %v315 = vpop.f32.mrb[0].mxu0
  %v316 = vpop.f32.mrb[0].mxu0
  %v317 = vadd.f32 0.0, %v316
  %v318 = vpop.f32.mrb[0].mxu0
  %319 = vmatprep.mubr.bf16.mxu0 %v130
  %320 = vmatmul.mubr.bf16.gmra.mrb[0].mxu0 %v129
  %v321 = vpop.f32.mrb[0].mxu0
  %v322 = vadd.f32 0.0, %v321
  %v323 = vpop.f32.mrb[0].mxu0
  %v324 = vpop.f32.mrb[0].mxu0
  %v325 = vadd.f32 0.0, %v324
  %v326 = vpop.f32.mrb[0].mxu0
  %327 = vmatprep.mubr.bf16.mxu0 %v132
  %328 = vmatmul.mubr.bf16.gmra.mrb[0].mxu0 %v131
  %v329 = vpop.f32.mrb[0].mxu0
  %v330 = vadd.f32 0.0, %v329
  %v331 = vpop.f32.mrb[0].mxu0
  %v332 = vpop.f32.mrb[0].mxu0
  %v333 = vadd.f32 0.0, %v332
  %v334 = vpop.f32.mrb[0].mxu0
  %335 = vmatprep.mubr.bf16.mxu0 %v134
  %336 = vmatmul.mubr.bf16.gmra.mrb[0].mxu0 %v133
  %v337 = vpop.f32.mrb[0].mxu0
  %v338 = vadd.f32 0.0, %v337
  %v339 = vpop.f32.mrb[0].mxu0
  %v340 = vpop.f32.mrb[0].mxu0
  %v341 = vadd.f32 0.0, %v340
  %v342 = vpop.f32.mrb[0].mxu0
  %343 = vdwg.mxu0
  %s344 = smul.u32 0, 128
  %s345 = scalar_lea.vmem [#allocation2], %s344
  %346 = vst [vmem:[%s345] sm:$0xff] %v282
  %347 = vst [vmem:[%s345 + $0x8] sm:$0xff] %v285
  %348 = vst [vmem:[%s345 + $0x10] sm:$0xff] %v290
  %349 = vst [vmem:[%s345 + $0x18] sm:$0xff] %v293
  %350 = vst [vmem:[%s345 + $0x20] sm:$0xff] %v298
  %351 = vst [vmem:[%s345 + $0x28] sm:$0xff] %v301
  %352 = vst [vmem:[%s345 + $0x30] sm:$0xff] %v306
  %353 = vst [vmem:[%s345 + $0x38] sm:$0xff] %v309
  %354 = vst [vmem:[%s345 + $0x40] sm:$0xff] %v314
  %355 = vst [vmem:[%s345 + $0x48] sm:$0xff] %v317
  %356 = vst [vmem:[%s345 + $0x50] sm:$0xff] %v322
  %357 = vst [vmem:[%s345 + $0x58] sm:$0xff] %v325
  %358 = vst [vmem:[%s345 + $0x60] sm:$0xff] %v330
  %359 = vst [vmem:[%s345 + $0x68] sm:$0xff] %v333
  %360 = vst [vmem:[%s345 + $0x70] sm:$0xff] %v338
  %361 = vst [vmem:[%s345 + $0x78] sm:$0xff] %v341
  %v362 = vld [vmem:[#allocation3] sm:$0x3]
  %v363 = vadd.f32 %v282, %v285
  %v364 = vadd.f32 %v363, %v290
  %v365 = vadd.f32 %v364, %v293
  %v366 = vadd.f32 %v365, %v298
  %v367 = vadd.f32 %v366, %v301
  %v368 = vadd.f32 %v367, %v306
  %v369 = vadd.f32 %v368, %v309
  %v370 = vadd.f32 %v369, %v314
  %v371 = vadd.f32 %v370, %v317
  %v372 = vadd.f32 %v371, %v322
  %v373 = vadd.f32 %v372, %v325
  %v374 = vadd.f32 %v373, %v330
  %v375 = vadd.f32 %v374, %v333
  %v376 = vadd.f32 %v375, %v338
  %v377 = vadd.f32 %v376, %v341
  %v378 = vrot.slane %v377, 4
  %v379 = vadd.f32 %v377, %v378
  %v380 = vrot.slane %v379, 2
  %v381 = vadd.f32 %v379, %v380
  %v382 = vrot.slane %v381, 1
  %v383 = vadd.f32 %v381, %v382
  %v384 = vmul.f32 %v282, %v282
  %v385 = vmul.f32 %v285, %v285
  %v386 = vmul.f32 %v290, %v290
  %v387 = vmul.f32 %v293, %v293
  %v388 = vmul.f32 %v298, %v298
  %v389 = vmul.f32 %v301, %v301
  %v390 = vmul.f32 %v306, %v306
  %v391 = vmul.f32 %v309, %v309
  %v392 = vmul.f32 %v314, %v314
  %v393 = vmul.f32 %v317, %v317
  %v394 = vmul.f32 %v322, %v322
  %v395 = vmul.f32 %v325, %v325
  %v396 = vmul.f32 %v330, %v330
  %v397 = vmul.f32 %v333, %v333
  %v398 = vmul.f32 %v338, %v338
  %v399 = vmul.f32 %v341, %v341
  %v400 = vadd.f32 %v384, %v385
  %v401 = vadd.f32 %v400, %v386
  %v402 = vadd.f32 %v401, %v387
  %v403 = vadd.f32 %v402, %v388
  %v404 = vadd.f32 %v403, %v389
  %v405 = vadd.f32 %v404, %v390
  %v406 = vadd.f32 %v405, %v391
  %v407 = vadd.f32 %v406, %v392
  %v408 = vadd.f32 %v407, %v393
  %v409 = vadd.f32 %v408, %v394
  %v410 = vadd.f32 %v409, %v395
  %v411 = vadd.f32 %v410, %v396
  %v412 = vadd.f32 %v411, %v397
  %v413 = vadd.f32 %v412, %v398
  %v414 = vadd.f32 %v413, %v399
  %v415 = vrot.slane %v414, 4
  %v416 = vadd.f32 %v414, %v415
  %v417 = vrot.slane %v416, 2
  %v418 = vadd.f32 %v416, %v417
  %v419 = vrot.slane %v418, 1
  %v420 = vadd.f32 %v418, %v419
  %vm421 = vcmask 1040384
  %v422 = vsel %vm421, %v383, %v420
  %v423 = vadd.f32 %v362, %v422
  %424 = vst [vmem:[#allocation3] sm:$0x3] %v423
  // Predicated region
  $region22: #{discriminator_forward.5} parent=0 // pred_check
    %p425 = pneg %p18
  $region23: #{discriminator_forward.5} parent=0 // pred_check_branch
    %427 = sbr.rel (%p425) target = $region25
  $region24: #{discriminator_forward.5} parent=0 // pred_region
    %v428 = vld [vmem:[#allocation3] sm:$0x3]
    %v429 = vmul.f32 %v428, 0.0078125
    %v430 = vmul.f32 %v429, %v429
    %v432 = vrot.slane %v430, 7
    %v434 = vsub.f32 %v429, %v432
    %v435 = vmax.f32 %v434, 0.0
    %v436 = vld [vmem:[%s2] sm:$0x1]
    %v437 = vadd.f32 %v435, 1e-05
    %v438 = vrsqrt.pop %v437
    %v441 = vunpack.c.l.s4 1966171168
    %v442 = vunpack.c.0.s8 %v441
    %v443 = vlaneseq
    %v444 = vshrl.u32 %v443, 7
    %v445 = vsub.s32 %v442, %v444
    %v446 = vrot.slane %v438, %v445
    %v447 = vcombine.high %v446, %v446
    %v449 = vunpack.c.l.s4 1966171168
    %v450 = vunpack.c.0.s8 %v449
    %v451 = vlaneseq
    %v452 = vshrl.u32 %v451, 7
    %v453 = vsub.s32 %v450, %v452
    %v454 = vrot.slane %v447, %v453
    %v456 = vmul.f32 %v436, %v454
    %v457 = vld [vmem:[%s3] sm:$0x1]
    %v458 = vmul.f32 %v429, %v456
    %v459 = vsub.f32 %v457, %v458
    %v460 = vld [vmem:[#allocation2] sm:$0xff]
    %v461 = vld [vmem:[#allocation2 + $0x8] sm:$0xff]
    %v462 = vld [vmem:[#allocation2 + $0x10] sm:$0xff]
    %v463 = vld [vmem:[#allocation2 + $0x18] sm:$0xff]
    %v464 = vld [vmem:[#allocation2 + $0x20] sm:$0xff]
    %v465 = vld [vmem:[#allocation2 + $0x28] sm:$0xff]
    %v466 = vld [vmem:[#allocation2 + $0x30] sm:$0xff]
    %v467 = vld [vmem:[#allocation2 + $0x38] sm:$0xff]
    %v468 = vld [vmem:[#allocation2 + $0x40] sm:$0xff]
    %v469 = vld [vmem:[#allocation2 + $0x48] sm:$0xff]
    %v470 = vld [vmem:[#allocation2 + $0x50] sm:$0xff]
    %v471 = vld [vmem:[#allocation2 + $0x58] sm:$0xff]
    %v472 = vld [vmem:[#allocation2 + $0x60] sm:$0xff]
    %v473 = vld [vmem:[#allocation2 + $0x68] sm:$0xff]
    %v474 = vld [vmem:[#allocation2 + $0x70] sm:$0xff]
    %v475 = vld [vmem:[#allocation2 + $0x78] sm:$0xff]
    %v477 = vlaneseq
    %v478 = vshrl.u32 %v477, 7
    %v479 = vsub.s32 0, %v478
    %v480 = vrot.slane %v456, %v479
    %v482 = vmul.f32 %v460, %v480
    %v483 = vmul.f32 %v461, %v480
    %v484 = vmul.f32 %v462, %v480
    %v485 = vmul.f32 %v463, %v480
    %v486 = vmul.f32 %v464, %v480
    %v487 = vmul.f32 %v465, %v480
    %v488 = vmul.f32 %v466, %v480
    %v489 = vmul.f32 %v467, %v480
    %v490 = vmul.f32 %v468, %v480
    %v491 = vmul.f32 %v469, %v480
    %v492 = vmul.f32 %v470, %v480
    %v493 = vmul.f32 %v471, %v480
    %v494 = vmul.f32 %v472, %v480
    %v495 = vmul.f32 %v473, %v480
    %v496 = vmul.f32 %v474, %v480
    %v497 = vmul.f32 %v475, %v480
    %v499 = vlaneseq
    %v500 = vshrl.u32 %v499, 7
    %v501 = vsub.s32 0, %v500
    %v502 = vrot.slane %v459, %v501
    %v504 = vadd.f32 %v482, %v502
    %v505 = vadd.f32 %v483, %v502
    %v506 = vadd.f32 %v484, %v502
    %v507 = vadd.f32 %v485, %v502
    %v508 = vadd.f32 %v486, %v502
    %v509 = vadd.f32 %v487, %v502
    %v510 = vadd.f32 %v488, %v502
    %v511 = vadd.f32 %v489, %v502
    %v512 = vadd.f32 %v490, %v502
    %v513 = vadd.f32 %v491, %v502
    %v514 = vadd.f32 %v492, %v502
    %v515 = vadd.f32 %v493, %v502
    %v516 = vadd.f32 %v494, %v502
    %v517 = vadd.f32 %v495, %v502
    %v518 = vadd.f32 %v496, %v502
    %v519 = vadd.f32 %v497, %v502
    %v520 = vmul.f32 %v504, 0.2
    %v521 = vmul.f32 %v505, 0.2
    %v522 = vmul.f32 %v506, 0.2
    %v523 = vmul.f32 %v507, 0.2
    %v524 = vmul.f32 %v508, 0.2
    %v525 = vmul.f32 %v509, 0.2
    %v526 = vmul.f32 %v510, 0.2
    %v527 = vmul.f32 %v511, 0.2
    %v528 = vmul.f32 %v512, 0.2
    %v529 = vmul.f32 %v513, 0.2
    %v530 = vmul.f32 %v514, 0.2
    %v531 = vmul.f32 %v515, 0.2
    %v532 = vmul.f32 %v516, 0.2
    %v533 = vmul.f32 %v517, 0.2
    %v534 = vmul.f32 %v518, 0.2
    %v535 = vmul.f32 %v519, 0.2
    %v536 = vmax.f32 %v504, %v520
    %v537 = vmax.f32 %v505, %v521
    %v538 = vmax.f32 %v506, %v522
    %v539 = vmax.f32 %v507, %v523
    %v540 = vmax.f32 %v508, %v524
    %v541 = vmax.f32 %v509, %v525
    %v542 = vmax.f32 %v510, %v526
    %v543 = vmax.f32 %v511, %v527
    %v544 = vmax.f32 %v512, %v528
    %v545 = vmax.f32 %v513, %v529
    %v546 = vmax.f32 %v514, %v530
    %v547 = vmax.f32 %v515, %v531
    %v548 = vmax.f32 %v516, %v532
    %v549 = vmax.f32 %v517, %v533
    %v550 = vmax.f32 %v518, %v534
    %v551 = vmax.f32 %v519, %v535
    %v552 = vpack.c.bf16 %v537, %v536
    %v553 = vpack.c.bf16 %v539, %v538
    %v554 = vpack.c.bf16 %v541, %v540
    %v555 = vpack.c.bf16 %v543, %v542
    %v556 = vpack.c.bf16 %v545, %v544
    %v557 = vpack.c.bf16 %v547, %v546
    %v558 = vpack.c.bf16 %v549, %v548
    %v559 = vpack.c.bf16 %v551, %v550
    %v568 = vunpack.c.l.b16 %v552
    %v569 = vunpack.c.h.b16 %v552
    %v570 = vunpack.c.l.b16 %v553
    %v571 = vunpack.c.h.b16 %v553
    %v572 = vunpack.c.l.b16 %v554
    %v573 = vunpack.c.h.b16 %v554
    %v574 = vunpack.c.l.b16 %v555
    %v575 = vunpack.c.h.b16 %v555
    %v576 = vunpack.c.l.b16 %v556
    %v577 = vunpack.c.h.b16 %v556
    %v578 = vunpack.c.l.b16 %v557
    %v579 = vunpack.c.h.b16 %v557
    %v580 = vunpack.c.l.b16 %v558
    %v581 = vunpack.c.h.b16 %v558
    %v582 = vunpack.c.l.b16 %v559
    %v583 = vunpack.c.h.b16 %v559
    %v584 = vpack.c.b16 %v568, %v568
    %v585 = vpack.c.b16 %v569, %v569
    %v586 = vpack.c.b16 %v570, %v570
    %v587 = vpack.c.b16 %v571, %v571
    %v588 = vpack.c.b16 %v572, %v572
    %v589 = vpack.c.b16 %v573, %v573
    %v590 = vpack.c.b16 %v574, %v574
    %v591 = vpack.c.b16 %v575, %v575
    %v592 = vpack.c.b16 %v576, %v576
    %v593 = vpack.c.b16 %v577, %v577
    %v594 = vpack.c.b16 %v578, %v578
    %v595 = vpack.c.b16 %v579, %v579
    %v596 = vpack.c.b16 %v580, %v580
    %v597 = vpack.c.b16 %v581, %v581
    %v598 = vpack.c.b16 %v582, %v582
    %v599 = vpack.c.b16 %v583, %v583
    %616 = vst [vmem:[%s4] sm:$0xf] %v584
    %617 = vst [vmem:[%s4 + $0x4] sm:$0xf] %v585
    %618 = vst [vmem:[%s4 + $0x8] sm:$0xf] %v586
    %619 = vst [vmem:[%s4 + $0xc] sm:$0xf] %v587
    %620 = vst [vmem:[%s4 + $0x10] sm:$0xf] %v588
    %621 = vst [vmem:[%s4 + $0x14] sm:$0xf] %v589
    %622 = vst [vmem:[%s4 + $0x18] sm:$0xf] %v590
    %623 = vst [vmem:[%s4 + $0x1c] sm:$0xf] %v591
    %624 = vst [vmem:[%s4 + $0x20] sm:$0xf] %v592
    %625 = vst [vmem:[%s4 + $0x24] sm:$0xf] %v593
    %626 = vst [vmem:[%s4 + $0x28] sm:$0xf] %v594
    %627 = vst [vmem:[%s4 + $0x2c] sm:$0xf] %v595
    %628 = vst [vmem:[%s4 + $0x30] sm:$0xf] %v596
    %629 = vst [vmem:[%s4 + $0x34] sm:$0xf] %v597
    %630 = vst [vmem:[%s4 + $0x38] sm:$0xf] %v598
    %631 = vst [vmem:[%s4 + $0x3c] sm:$0xf] %v599
  $region25: #{discriminator_forward.5} parent=0 // pred_fallthru
    _
  // Predicated region
  $region26: #{discriminator_forward.5} parent=0 // pred_check
    _
  $region27: #{discriminator_forward.5} parent=0 // pred_check_branch
    %633 = sbr.rel (0) target = $region29
  $region28: #{discriminator_forward.5} parent=0 // pred_region
    _
  $region29: #{discriminator_forward.5} parent=0 // pred_fallthru
    _
  // Predicated region
  $region30: #{discriminator_forward.5} parent=0 // pred_check
    _
  $region31: #{discriminator_forward.5} parent=0 // pred_check_branch
    %635 = sbr.rel (0) target = $region33
  $region32: #{discriminator_forward.5} parent=0 // pred_region
    _
  $region33: #{discriminator_forward.5} parent=0 // pred_fallthru
    _

// kernel: discriminator_forward.6
$region0: #{discriminator_forward.6}
  #allocation0 [shape = 'u32[]', space=smem, size = 0x4, offset = 0x4, fixed_abs, tag = 'smem constant byte address 0x4 - core index']
  #allocation1 [shape = 'u32[144,128]{1,0:T(1,128)}', space=vmem, size = 0x12000, scoped, tag = 'internal scratch']
  #allocation2 [shape = 'f32[32,128]{1,0:T(8,128)}', space=vmem, size = 0x4000, scoped, tag = 'scratch operand']
  #allocation3 [shape = 'f32[2,128]{1,0:T(2,128)}', space=vmem, size = 0x400, scoped, tag = 'scratch operand']
  %s0 = inlined_call_operand.vmem [shape: bf16[32,512], index: 0, kind: input, shape index: {}]
  %s1 = inlined_call_operand.vmem [shape: bf16[512,128], index: 1, kind: input, shape index: {}]
  %s2 = inlined_call_operand.vmem [shape: f32[1,128], index: 2, kind: input, shape index: {}]
  %s3 = inlined_call_operand.vmem [shape: f32[1,128], index: 3, kind: input, shape index: {}]
  %s4 = inlined_call_operand.vmem [shape: bf16[32,128], index: 4, kind: output, shape index: {}]
  %s5 = sld [smem:[#allocation0]]
  $region34: #{discriminator_forward.6} parent=0
    _
  %s7 = ssub.s32 1, %s5
  %s8 = scalar_select 0, %s7, %s5
  // Predicated region
  $region2: #{discriminator_forward.6} parent=0 // pred_check
    _
  $region3: #{discriminator_forward.6} parent=0 // pred_check_branch
    %10 = sbr.rel (0) target = $region5
  $region4: #{discriminator_forward.6} parent=0 // pred_region
    _
  $region5: #{discriminator_forward.6} parent=0 // pred_fallthru
    _
  // Predicated region
  $region6: #{discriminator_forward.6} parent=0 // pred_check
    _
  $region7: #{discriminator_forward.6} parent=0 // pred_check_branch
    %12 = sbr.rel (0) target = $region9
  $region8: #{discriminator_forward.6} parent=0 // pred_region
    _
  $region9: #{discriminator_forward.6} parent=0 // pred_fallthru
    _
  // Predicated region
  $region10: #{discriminator_forward.6} parent=0 // pred_check
    _
  $region11: #{discriminator_forward.6} parent=0 // pred_check_branch
    %14 = sbr.rel (0) target = $region13
  $region12: #{discriminator_forward.6} parent=0 // pred_region
    _
  $region13: #{discriminator_forward.6} parent=0 // pred_fallthru
    _
  // Predicated region
  $region14: #{discriminator_forward.6} parent=0 // pred_check
    _
  $region15: #{discriminator_forward.6} parent=0 // pred_check_branch
    %16 = sbr.rel (0) target = $region17
  $region16: #{discriminator_forward.6} parent=0 // pred_region
    _
  $region17: #{discriminator_forward.6} parent=0 // pred_fallthru
    _
  %p18 = scmp.eq.s32.totalorder 0, 0
  // Predicated region
  $region18: #{discriminator_forward.6} parent=0 // pred_check
    %p19 = pneg %p18
  $region19: #{discriminator_forward.6} parent=0 // pred_check_branch
    %21 = sbr.rel (%p19) target = $region21
  $region20: #{discriminator_forward.6} parent=0 // pred_region
    %22 = vst [vmem:[#allocation3] sm:$0x3] 0.0
  $region21: #{discriminator_forward.6} parent=0 // pred_fallthru
    _
  %v23 = vld [vmem:[%s0] sm:$0xff]
  %v24 = vld [vmem:[%s0 + $0x8] sm:$0xff]
  %v25 = vld [vmem:[%s0 + $0x10] sm:$0xff]
  %v26 = vld [vmem:[%s0 + $0x18] sm:$0xff]
  %v27 = vld [vmem:[%s0 + $0x20] sm:$0xff]
  %v28 = vld [vmem:[%s0 + $0x28] sm:$0xff]
  %v29 = vld [vmem:[%s0 + $0x30] sm:$0xff]
  %v30 = vld [vmem:[%s0 + $0x38] sm:$0xff]
  %v31 = vld [vmem:[%s1] sm:$0xf]
  %v32 = vld [vmem:[%s1 + $0x4] sm:$0xf]
  %v33 = vld [vmem:[%s1 + $0x8] sm:$0xf]
  %v34 = vld [vmem:[%s1 + $0xc] sm:$0xf]
  %v35 = vld [vmem:[%s1 + $0x10] sm:$0xf]
  %v36 = vld [vmem:[%s1 + $0x14] sm:$0xf]
  %v37 = vld [vmem:[%s1 + $0x18] sm:$0xf]
  %v38 = vld [vmem:[%s1 + $0x1c] sm:$0xf]
  %v39 = vld [vmem:[%s1 + $0x20] sm:$0xf]
  %v40 = vld [vmem:[%s1 + $0x24] sm:$0xf]
  %v41 = vld [vmem:[%s1 + $0x28] sm:$0xf]
  %v42 = vld [vmem:[%s1 + $0x2c] sm:$0xf]
  %v43 = vld [vmem:[%s1 + $0x30] sm:$0xf]
  %v44 = vld [vmem:[%s1 + $0x34] sm:$0xf]
  %v45 = vld [vmem:[%s1 + $0x38] sm:$0xf]
  %v46 = vld [vmem:[%s1 + $0x3c] sm:$0xf]
  %v47 = vld [vmem:[%s1 + $0x40] sm:$0xf]
  %v48 = vld [vmem:[%s1 + $0x44] sm:$0xf]
  %v49 = vld [vmem:[%s1 + $0x48] sm:$0xf]
  %v50 = vld [vmem:[%s1 + $0x4c] sm:$0xf]
  %v51 = vld [vmem:[%s1 + $0x50] sm:$0xf]
  %v52 = vld [vmem:[%s1 + $0x54] sm:$0xf]
  %v53 = vld [vmem:[%s1 + $0x58] sm:$0xf]
  %v54 = vld [vmem:[%s1 + $0x5c] sm:$0xf]
  %v55 = vld [vmem:[%s1 + $0x60] sm:$0xf]
  %v56 = vld [vmem:[%s1 + $0x64] sm:$0xf]
  %v57 = vld [vmem:[%s1 + $0x68] sm:$0xf]
  %v58 = vld [vmem:[%s1 + $0x6c] sm:$0xf]
  %v59 = vld [vmem:[%s1 + $0x70] sm:$0xf]
  %v60 = vld [vmem:[%s1 + $0x74] sm:$0xf]
  %v61 = vld [vmem:[%s1 + $0x78] sm:$0xf]
  %v62 = vld [vmem:[%s1 + $0x7c] sm:$0xf]
  %v63 = vld [vmem:[%s1 + $0x80] sm:$0xf]
  %v64 = vld [vmem:[%s1 + $0x84] sm:$0xf]
  %v65 = vld [vmem:[%s1 + $0x88] sm:$0xf]
  %v66 = vld [vmem:[%s1 + $0x8c] sm:$0xf]
  %v67 = vld [vmem:[%s1 + $0x90] sm:$0xf]
  %v68 = vld [vmem:[%s1 + $0x94] sm:$0xf]
  %v69 = vld [vmem:[%s1 + $0x98] sm:$0xf]
  %v70 = vld [vmem:[%s1 + $0x9c] sm:$0xf]
  %v71 = vld [vmem:[%s1 + $0xa0] sm:$0xf]
  %v72 = vld [vmem:[%s1 + $0xa4] sm:$0xf]
  %v73 = vld [vmem:[%s1 + $0xa8] sm:$0xf]
  %v74 = vld [vmem:[%s1 + $0xac] sm:$0xf]
  %v75 = vld [vmem:[%s1 + $0xb0] sm:$0xf]
  %v76 = vld [vmem:[%s1 + $0xb4] sm:$0xf]
  %v77 = vld [vmem:[%s1 + $0xb8] sm:$0xf]
  %v78 = vld [vmem:[%s1 + $0xbc] sm:$0xf]
  %v79 = vld [vmem:[%s1 + $0xc0] sm:$0xf]
  %v80 = vld [vmem:[%s1 + $0xc4] sm:$0xf]
  %v81 = vld [vmem:[%s1 + $0xc8] sm:$0xf]
  %v82 = vld [vmem:[%s1 + $0xcc] sm:$0xf]
  %v83 = vld [vmem:[%s1 + $0xd0] sm:$0xf]
  %v84 = vld [vmem:[%s1 + $0xd4] sm:$0xf]
  %v85 = vld [vmem:[%s1 + $0xd8] sm:$0xf]
  %v86 = vld [vmem:[%s1 + $0xdc] sm:$0xf]
  %v87 = vld [vmem:[%s1 + $0xe0] sm:$0xf]
  %v88 = vld [vmem:[%s1 + $0xe4] sm:$0xf]
  %v89 = vld [vmem:[%s1 + $0xe8] sm:$0xf]
  %v90 = vld [vmem:[%s1 + $0xec] sm:$0xf]
  %v91 = vld [vmem:[%s1 + $0xf0] sm:$0xf]
  %v92 = vld [vmem:[%s1 + $0xf4] sm:$0xf]
  %v93 = vld [vmem:[%s1 + $0xf8] sm:$0xf]
  %v94 = vld [vmem:[%s1 + $0xfc] sm:$0xf]
  %v103 = vunpack.c.l.b16 %v23
  %v104 = vunpack.c.h.b16 %v23
  %v105 = vunpack.c.l.b16 %v24
  %v106 = vunpack.c.h.b16 %v24
  %v107 = vunpack.c.l.b16 %v25
  %v108 = vunpack.c.h.b16 %v25
  %v109 = vunpack.c.l.b16 %v26
  %v110 = vunpack.c.h.b16 %v26
  %v111 = vunpack.c.l.b16 %v27
  %v112 = vunpack.c.h.b16 %v27
  %v113 = vunpack.c.l.b16 %v28
  %v114 = vunpack.c.h.b16 %v28
  %v115 = vunpack.c.l.b16 %v29
  %v116 = vunpack.c.h.b16 %v29
  %v117 = vunpack.c.l.b16 %v30
  %v118 = vunpack.c.h.b16 %v30
  %v119 = vpack.c.b16 %v107, %v103
  %v120 = vpack.c.b16 %v108, %v104
  %v121 = vpack.c.b16 %v109, %v105
  %v122 = vpack.c.b16 %v110, %v106
  %v123 = vpack.c.b16 %v115, %v111
  %v124 = vpack.c.b16 %v116, %v112
  %v125 = vpack.c.b16 %v117, %v113
  %v126 = vpack.c.b16 %v118, %v114
  %v199 = vunpack.c.l.b16 %v31
  %v200 = vunpack.c.l.b16 %v32
  %v201 = vunpack.c.l.b16 %v33
  %v202 = vunpack.c.l.b16 %v34
  %v203 = vunpack.c.l.b16 %v35
  %v204 = vunpack.c.l.b16 %v36
  %v205 = vunpack.c.l.b16 %v37
  %v206 = vunpack.c.l.b16 %v38
  %v207 = vunpack.c.l.b16 %v39
  %v208 = vunpack.c.l.b16 %v40
  %v209 = vunpack.c.l.b16 %v41
  %v210 = vunpack.c.l.b16 %v42
  %v211 = vunpack.c.l.b16 %v43
  %v212 = vunpack.c.l.b16 %v44
  %v213 = vunpack.c.l.b16 %v45
  %v214 = vunpack.c.l.b16 %v46
  %v215 = vunpack.c.l.b16 %v47
  %v216 = vunpack.c.l.b16 %v48
  %v217 = vunpack.c.l.b16 %v49
  %v218 = vunpack.c.l.b16 %v50
  %v219 = vunpack.c.l.b16 %v51
  %v220 = vunpack.c.l.b16 %v52
  %v221 = vunpack.c.l.b16 %v53
  %v222 = vunpack.c.l.b16 %v54
  %v223 = vunpack.c.l.b16 %v55
  %v224 = vunpack.c.l.b16 %v56
  %v225 = vunpack.c.l.b16 %v57
  %v226 = vunpack.c.l.b16 %v58
  %v227 = vunpack.c.l.b16 %v59
  %v228 = vunpack.c.l.b16 %v60
  %v229 = vunpack.c.l.b16 %v61
  %v230 = vunpack.c.l.b16 %v62
  %v231 = vunpack.c.l.b16 %v63
  %v232 = vunpack.c.l.b16 %v64
  %v233 = vunpack.c.l.b16 %v65
  %v234 = vunpack.c.l.b16 %v66
  %v235 = vunpack.c.l.b16 %v67
  %v236 = vunpack.c.l.b16 %v68
  %v237 = vunpack.c.l.b16 %v69
  %v238 = vunpack.c.l.b16 %v70
  %v239 = vunpack.c.l.b16 %v71
  %v240 = vunpack.c.l.b16 %v72
  %v241 = vunpack.c.l.b16 %v73
  %v242 = vunpack.c.l.b16 %v74
  %v243 = vunpack.c.l.b16 %v75
  %v244 = vunpack.c.l.b16 %v76
  %v245 = vunpack.c.l.b16 %v77
  %v246 = vunpack.c.l.b16 %v78
  %v247 = vunpack.c.l.b16 %v79
  %v248 = vunpack.c.l.b16 %v80
  %v249 = vunpack.c.l.b16 %v81
  %v250 = vunpack.c.l.b16 %v82
  %v251 = vunpack.c.l.b16 %v83
  %v252 = vunpack.c.l.b16 %v84
  %v253 = vunpack.c.l.b16 %v85
  %v254 = vunpack.c.l.b16 %v86
  %v255 = vunpack.c.l.b16 %v87
  %v256 = vunpack.c.l.b16 %v88
  %v257 = vunpack.c.l.b16 %v89
  %v258 = vunpack.c.l.b16 %v90
  %v259 = vunpack.c.l.b16 %v91
  %v260 = vunpack.c.l.b16 %v92
  %v261 = vunpack.c.l.b16 %v93
  %v262 = vunpack.c.l.b16 %v94
  %v263 = vpack.c.b16 %v200, %v199
  %v264 = vpack.c.b16 %v202, %v201
  %v265 = vpack.c.b16 %v204, %v203
  %v266 = vpack.c.b16 %v206, %v205
  %v267 = vpack.c.b16 %v208, %v207
  %v268 = vpack.c.b16 %v210, %v209
  %v269 = vpack.c.b16 %v212, %v211
  %v270 = vpack.c.b16 %v214, %v213
  %v271 = vpack.c.b16 %v216, %v215
  %v272 = vpack.c.b16 %v218, %v217
  %v273 = vpack.c.b16 %v220, %v219
  %v274 = vpack.c.b16 %v222, %v221
  %v275 = vpack.c.b16 %v224, %v223
  %v276 = vpack.c.b16 %v226, %v225
  %v277 = vpack.c.b16 %v228, %v227
  %v278 = vpack.c.b16 %v230, %v229
  %v279 = vpack.c.b16 %v232, %v231
  %v280 = vpack.c.b16 %v234, %v233
  %v281 = vpack.c.b16 %v236, %v235
  %v282 = vpack.c.b16 %v238, %v237
  %v283 = vpack.c.b16 %v240, %v239
  %v284 = vpack.c.b16 %v242, %v241
  %v285 = vpack.c.b16 %v244, %v243
  %v286 = vpack.c.b16 %v246, %v245
  %v287 = vpack.c.b16 %v248, %v247
  %v288 = vpack.c.b16 %v250, %v249
  %v289 = vpack.c.b16 %v252, %v251
  %v290 = vpack.c.b16 %v254, %v253
  %v291 = vpack.c.b16 %v256, %v255
  %v292 = vpack.c.b16 %v258, %v257
  %v293 = vpack.c.b16 %v260, %v259
  %v294 = vpack.c.b16 %v262, %v261
  %327 = vmatprep.subr.bf16.mxu0 0
  %328 = vmatpush1.bf16.msra.mxu0 %v263
  %329 = vmatprep.subr.bf16.mxu0 0
  %330 = vmatpush1.bf16.msra.mxu0 %v264
  %331 = vmatprep.subr.bf16.mxu0 0
  %332 = vmatpush1.bf16.msra.mxu0 %v265
  %333 = vmatprep.subr.bf16.mxu0 0
  %334 = vmatpush1.bf16.msra.mxu0 %v266
  %335 = vmatprep.subr.bf16.mxu0 0
  %336 = vmatpush1.bf16.msra.mxu0 %v267
  %337 = vmatprep.subr.bf16.mxu0 0
  %338 = vmatpush1.bf16.msra.mxu0 %v268
  %339 = vmatprep.subr.bf16.mxu0 0
  %340 = vmatpush1.bf16.msra.mxu0 %v269
  %341 = vmatprep.subr.bf16.mxu0 0
  %342 = vmatpush1.bf16.msra.mxu0 %v270
  %343 = vmatprep.subr.bf16.mxu0 0
  %344 = vmatpush1.bf16.msra.mxu0 %v271
  %345 = vmatprep.subr.bf16.mxu0 0
  %346 = vmatpush1.bf16.msra.mxu0 %v272
  %347 = vmatprep.subr.bf16.mxu0 0
  %348 = vmatpush1.bf16.msra.mxu0 %v273
  %349 = vmatprep.subr.bf16.mxu0 0
  %350 = vmatpush1.bf16.msra.mxu0 %v274
  %351 = vmatprep.subr.bf16.mxu0 0
  %352 = vmatpush1.bf16.msra.mxu0 %v275
  %353 = vmatprep.subr.bf16.mxu0 0
  %354 = vmatpush1.bf16.msra.mxu0 %v276
  %355 = vmatprep.subr.bf16.mxu0 0
  %356 = vmatpush1.bf16.msra.mxu0 %v277
  %357 = vmatprep.subr.bf16.mxu0 0
  %358 = vmatpush1.bf16.msra.mxu0 %v278
  %359 = vmatprep.mubr.bf16.mxu0 %v120
  %360 = vmatmul.mubr.bf16.gmra.mrb[0].mxu0 %v119
  %v361 = vpop.f32.mrb[0].mxu0
  %v362 = vadd.f32 0.0, %v361
  %v363 = vpop.f32.mrb[0].mxu0
  %v364 = vpop.f32.mrb[0].mxu0
  %v365 = vadd.f32 0.0, %v364
  %v366 = vpop.f32.mrb[0].mxu0
  %367 = vmatprep.mubr.bf16.mxu0 %v124
  %368 = vmatmul.mubr.bf16.gmra.mrb[0].mxu0 %v123
  %v369 = vpop.f32.mrb[0].mxu0
  %v370 = vadd.f32 0.0, %v369
  %v371 = vpop.f32.mrb[0].mxu0
  %v372 = vpop.f32.mrb[0].mxu0
  %v373 = vadd.f32 0.0, %v372
  %v374 = vpop.f32.mrb[0].mxu0
  %375 = vdwg.mxu0
  %376 = vmatprep.subr.bf16.mxu0 0
  %377 = vmatpush1.bf16.msra.mxu0 %v279
  %378 = vmatprep.subr.bf16.mxu0 0
  %379 = vmatpush1.bf16.msra.mxu0 %v280
  %380 = vmatprep.subr.bf16.mxu0 0
  %381 = vmatpush1.bf16.msra.mxu0 %v281
  %382 = vmatprep.subr.bf16.mxu0 0
  %383 = vmatpush1.bf16.msra.mxu0 %v282
  %384 = vmatprep.subr.bf16.mxu0 0
  %385 = vmatpush1.bf16.msra.mxu0 %v283
  %386 = vmatprep.subr.bf16.mxu0 0
  %387 = vmatpush1.bf16.msra.mxu0 %v284
  %388 = vmatprep.subr.bf16.mxu0 0
  %389 = vmatpush1.bf16.msra.mxu0 %v285
  %390 = vmatprep.subr.bf16.mxu0 0
  %391 = vmatpush1.bf16.msra.mxu0 %v286
  %392 = vmatprep.subr.bf16.mxu0 0
  %393 = vmatpush1.bf16.msra.mxu0 %v287
  %394 = vmatprep.subr.bf16.mxu0 0
  %395 = vmatpush1.bf16.msra.mxu0 %v288
  %396 = vmatprep.subr.bf16.mxu0 0
  %397 = vmatpush1.bf16.msra.mxu0 %v289
  %398 = vmatprep.subr.bf16.mxu0 0
  %399 = vmatpush1.bf16.msra.mxu0 %v290
  %400 = vmatprep.subr.bf16.mxu0 0
  %401 = vmatpush1.bf16.msra.mxu0 %v291
  %402 = vmatprep.subr.bf16.mxu0 0
  %403 = vmatpush1.bf16.msra.mxu0 %v292
  %404 = vmatprep.subr.bf16.mxu0 0
  %405 = vmatpush1.bf16.msra.mxu0 %v293
  %406 = vmatprep.subr.bf16.mxu0 0
  %407 = vmatpush1.bf16.msra.mxu0 %v294
  %408 = vmatprep.mubr.bf16.mxu0 %v122
  %409 = vmatmul.mubr.bf16.gmra.mrb[0].mxu0 %v121
  %v410 = vpop.f32.mrb[0].mxu0
  %v411 = vadd.f32 %v362, %v410
  %v412 = vpop.f32.mrb[0].mxu0
  %v413 = vpop.f32.mrb[0].mxu0
  %v414 = vadd.f32 %v365, %v413
  %v415 = vpop.f32.mrb[0].mxu0
  %416 = vmatprep.mubr.bf16.mxu0 %v126
  %417 = vmatmul.mubr.bf16.gmra.mrb[0].mxu0 %v125
  %v418 = vpop.f32.mrb[0].mxu0
  %v419 = vadd.f32 %v370, %v418
  %v420 = vpop.f32.mrb[0].mxu0
  %v421 = vpop.f32.mrb[0].mxu0
  %v422 = vadd.f32 %v373, %v421
  %v423 = vpop.f32.mrb[0].mxu0
  %424 = vdwg.mxu0
  %s425 = smul.u32 0, 32
  %s426 = scalar_lea.vmem [#allocation2], %s425
  %427 = vst [vmem:[%s426] sm:$0xff] %v411
  %428 = vst [vmem:[%s426 + $0x8] sm:$0xff] %v414
  %429 = vst [vmem:[%s426 + $0x10] sm:$0xff] %v419
  %430 = vst [vmem:[%s426 + $0x18] sm:$0xff] %v422
  %v431 = vld [vmem:[#allocation3] sm:$0x3]
  %v432 = vadd.f32 %v411, %v414
  %v433 = vadd.f32 %v432, %v419
  %v434 = vadd.f32 %v433, %v422
  %v435 = vrot.slane %v434, 4
  %v436 = vadd.f32 %v434, %v435
  %v437 = vrot.slane %v436, 2
  %v438 = vadd.f32 %v436, %v437
  %v439 = vrot.slane %v438, 1
  %v440 = vadd.f32 %v438, %v439
  %v441 = vmul.f32 %v411, %v411
  %v442 = vmul.f32 %v414, %v414
  %v443 = vmul.f32 %v419, %v419
  %v444 = vmul.f32 %v422, %v422
  %v445 = vadd.f32 %v441, %v442
  %v446 = vadd.f32 %v445, %v443
  %v447 = vadd.f32 %v446, %v444
  %v448 = vrot.slane %v447, 4
  %v449 = vadd.f32 %v447, %v448
  %v450 = vrot.slane %v449, 2
  %v451 = vadd.f32 %v449, %v450
  %v452 = vrot.slane %v451, 1
  %v453 = vadd.f32 %v451, %v452
  %vm454 = vcmask 1040384
  %v455 = vsel %vm454, %v440, %v453
  %v456 = vadd.f32 %v431, %v455
  %457 = vst [vmem:[#allocation3] sm:$0x3] %v456
  // Predicated region
  $region22: #{discriminator_forward.6} parent=0 // pred_check
    %p458 = pneg %p18
  $region23: #{discriminator_forward.6} parent=0 // pred_check_branch
    %460 = sbr.rel (%p458) target = $region25
  $region24: #{discriminator_forward.6} parent=0 // pred_region
    %v461 = vld [vmem:[#allocation3] sm:$0x3]
    %v462 = vmul.f32 %v461, 0.03125
    %v463 = vmul.f32 %v462, %v462
    %v465 = vrot.slane %v463, 7
    %v467 = vsub.f32 %v462, %v465
    %v468 = vmax.f32 %v467, 0.0
    %v469 = vld [vmem:[%s2] sm:$0x1]
    %v470 = vadd.f32 %v468, 1e-05
    %v471 = vrsqrt.pop %v470
    %v474 = vunpack.c.l.s4 1966171168
    %v475 = vunpack.c.0.s8 %v474
    %v476 = vlaneseq
    %v477 = vshrl.u32 %v476, 7
    %v478 = vsub.s32 %v475, %v477
    %v479 = vrot.slane %v471, %v478
    %v480 = vcombine.high %v479, %v479
    %v482 = vunpack.c.l.s4 1966171168
    %v483 = vunpack.c.0.s8 %v482
    %v484 = vlaneseq
    %v485 = vshrl.u32 %v484, 7
    %v486 = vsub.s32 %v483, %v485
    %v487 = vrot.slane %v480, %v486
    %v489 = vmul.f32 %v469, %v487
    %v490 = vld [vmem:[%s3] sm:$0x1]
    %v491 = vmul.f32 %v462, %v489
    %v492 = vsub.f32 %v490, %v491
    %v493 = vld [vmem:[#allocation2] sm:$0xff]
    %v494 = vld [vmem:[#allocation2 + $0x8] sm:$0xff]
    %v495 = vld [vmem:[#allocation2 + $0x10] sm:$0xff]
    %v496 = vld [vmem:[#allocation2 + $0x18] sm:$0xff]
    %v498 = vlaneseq
    %v499 = vshrl.u32 %v498, 7
    %v500 = vsub.s32 0, %v499
    %v501 = vrot.slane %v489, %v500
    %v503 = vmul.f32 %v493, %v501
    %v504 = vmul.f32 %v494, %v501
    %v505 = vmul.f32 %v495, %v501
    %v506 = vmul.f32 %v496, %v501
    %v508 = vlaneseq
    %v509 = vshrl.u32 %v508, 7
    %v510 = vsub.s32 0, %v509
    %v511 = vrot.slane %v492, %v510
    %v513 = vadd.f32 %v503, %v511
    %v514 = vadd.f32 %v504, %v511
    %v515 = vadd.f32 %v505, %v511
    %v516 = vadd.f32 %v506, %v511
    %v517 = vmul.f32 %v513, 0.2
    %v518 = vmul.f32 %v514, 0.2
    %v519 = vmul.f32 %v515, 0.2
    %v520 = vmul.f32 %v516, 0.2
    %v521 = vmax.f32 %v513, %v517
    %v522 = vmax.f32 %v514, %v518
    %v523 = vmax.f32 %v515, %v519
    %v524 = vmax.f32 %v516, %v520
    %v525 = vpack.c.bf16 %v522, %v521
    %v526 = vpack.c.bf16 %v524, %v523
    %v529 = vunpack.c.l.b16 %v525
    %v530 = vunpack.c.h.b16 %v525
    %v531 = vunpack.c.l.b16 %v526
    %v532 = vunpack.c.h.b16 %v526
    %v533 = vpack.c.b16 %v529, %v529
    %v534 = vpack.c.b16 %v530, %v530
    %v535 = vpack.c.b16 %v531, %v531
    %v536 = vpack.c.b16 %v532, %v532
    %541 = vst [vmem:[%s4] sm:$0xf] %v533
    %542 = vst [vmem:[%s4 + $0x4] sm:$0xf] %v534
    %543 = vst [vmem:[%s4 + $0x8] sm:$0xf] %v535
    %544 = vst [vmem:[%s4 + $0xc] sm:$0xf] %v536
  $region25: #{discriminator_forward.6} parent=0 // pred_fallthru
    _
  // Predicated region
  $region26: #{discriminator_forward.6} parent=0 // pred_check
    _
  $region27: #{discriminator_forward.6} parent=0 // pred_check_branch
    %546 = sbr.rel (0) target = $region29
  $region28: #{discriminator_forward.6} parent=0 // pred_region
    _
  $region29: #{discriminator_forward.6} parent=0 // pred_fallthru
    _
  // Predicated region
  $region30: #{discriminator_forward.6} parent=0 // pred_check
    _
  $region31: #{discriminator_forward.6} parent=0 // pred_check_branch
    %548 = sbr.rel (0) target = $region33
  $region32: #{discriminator_forward.6} parent=0 // pred_region
    _
  $region33: #{discriminator_forward.6} parent=0 // pred_fallthru
    _

// kernel: discriminator_forward.7
$region0: #{discriminator_forward.7}
  #allocation0 [shape = 'u32[]', space=smem, size = 0x4, offset = 0x4, fixed_abs, tag = 'smem constant byte address 0x4 - core index']
  #allocation1 [shape = 'u32[144,128]{1,0:T(1,128)}', space=vmem, size = 0x12000, scoped, tag = 'internal scratch']
  #allocation2 [shape = 'f32[1,1]{1,0:T(1,128)S(1)}', space=vmem, size = 0x200, scoped, tag = 'scoped memory for discriminator_forward.7']
  %s0 = inlined_call_operand.vmem [shape: bf16[8,1024], index: 0, kind: input, shape index: {}]
  %s1 = inlined_call_operand.vmem [shape: bf16[1024,128], index: 1, kind: input, shape index: {}]
  %s2 = inlined_call_operand.vmem [shape: f32[1,128], index: 2, kind: input, shape index: {}]
  %s3 = inlined_call_operand.vmem [shape: f32[1,128], index: 3, kind: input, shape index: {}]
  %s4 = inlined_call_operand.vmem [shape: f32[8,128], index: 4, kind: input, shape index: {}]
  %s5 = inlined_call_operand.<no memory space> [shape: f32[1,1], index: 5, kind: input, shape index: {}]
  %s6 = inlined_call_operand.vmem [shape: f32[2,1], index: 6, kind: output, shape index: {}]
  %s7 = sld [smem:[#allocation0]]
  $region34: #{discriminator_forward.7} parent=0
    _
  %s9 = ssub.s32 1, %s7
  %s10 = scalar_select 0, %s9, %s7
  %v11 = vstv %s5
  %12 = vst [vmem:[#allocation2] sm:$0x1] %v11
  // Predicated region
  $region2: #{discriminator_forward.7} parent=0 // pred_check
    _
  $region3: #{discriminator_forward.7} parent=0 // pred_check_branch
    %14 = sbr.rel (0) target = $region5
  $region4: #{discriminator_forward.7} parent=0 // pred_region
    _
  $region5: #{discriminator_forward.7} parent=0 // pred_fallthru
    _
  // Predicated region
  $region6: #{discriminator_forward.7} parent=0 // pred_check
    _
  $region7: #{discriminator_forward.7} parent=0 // pred_check_branch
    %16 = sbr.rel (0) target = $region9
  $region8: #{discriminator_forward.7} parent=0 // pred_region
    _
  $region9: #{discriminator_forward.7} parent=0 // pred_fallthru
    _
  // Predicated region
  $region10: #{discriminator_forward.7} parent=0 // pred_check
    _
  $region11: #{discriminator_forward.7} parent=0 // pred_check_branch
    %18 = sbr.rel (0) target = $region13
  $region12: #{discriminator_forward.7} parent=0 // pred_region
    _
  $region13: #{discriminator_forward.7} parent=0 // pred_fallthru
    _
  // Predicated region
  $region14: #{discriminator_forward.7} parent=0 // pred_check
    _
  $region15: #{discriminator_forward.7} parent=0 // pred_check_branch
    %20 = sbr.rel (0) target = $region17
  $region16: #{discriminator_forward.7} parent=0 // pred_region
    _
  $region17: #{discriminator_forward.7} parent=0 // pred_fallthru
    _
  // Predicated region
  $region18: #{discriminator_forward.7} parent=0 // pred_check
    _
  $region19: #{discriminator_forward.7} parent=0 // pred_check_branch
    %22 = sbr.rel (0) target = $region21
  $region20: #{discriminator_forward.7} parent=0 // pred_region
    _
  $region21: #{discriminator_forward.7} parent=0 // pred_fallthru
    _
  // Predicated region
  $region22: #{discriminator_forward.7} parent=0 // pred_check
    _
  $region23: #{discriminator_forward.7} parent=0 // pred_check_branch
    %24 = sbr.rel (0) target = $region25
  $region24: #{discriminator_forward.7} parent=0 // pred_region
    _
  $region25: #{discriminator_forward.7} parent=0 // pred_fallthru
    _
  %v26 = vld [vmem:[%s0] sm:$0xff]
  %v27 = vld [vmem:[%s0 + $0x8] sm:$0xff]
  %v28 = vld [vmem:[%s0 + $0x10] sm:$0xff]
  %v29 = vld [vmem:[%s0 + $0x18] sm:$0xff]
  %v30 = vld [vmem:[%s1] sm:$0xf]
  %v31 = vld [vmem:[%s1 + $0x4] sm:$0xf]
  %v32 = vld [vmem:[%s1 + $0x8] sm:$0xf]
  %v33 = vld [vmem:[%s1 + $0xc] sm:$0xf]
  %v34 = vld [vmem:[%s1 + $0x10] sm:$0xf]
  %v35 = vld [vmem:[%s1 + $0x14] sm:$0xf]
  %v36 = vld [vmem:[%s1 + $0x18] sm:$0xf]
  %v37 = vld [vmem:[%s1 + $0x1c] sm:$0xf]
  %v38 = vld [vmem:[%s1 + $0x20] sm:$0xf]
  %v39 = vld [vmem:[%s1 + $0x24] sm:$0xf]
  %v40 = vld [vmem:[%s1 + $0x28] sm:$0xf]
  %v41 = vld [vmem:[%s1 + $0x2c] sm:$0xf]
  %v42 = vld [vmem:[%s1 + $0x30] sm:$0xf]
  %v43 = vld [vmem:[%s1 + $0x34] sm:$0xf]
  %v44 = vld [vmem:[%s1 + $0x38] sm:$0xf]
  %v45 = vld [vmem:[%s1 + $0x3c] sm:$0xf]
  %v46 = vld [vmem:[%s1 + $0x40] sm:$0xf]
  %v47 = vld [vmem:[%s1 + $0x44] sm:$0xf]
  %v48 = vld [vmem:[%s1 + $0x48] sm:$0xf]
  %v49 = vld [vmem:[%s1 + $0x4c] sm:$0xf]
  %v50 = vld [vmem:[%s1 + $0x50] sm:$0xf]
  %v51 = vld [vmem:[%s1 + $0x54] sm:$0xf]
  %v52 = vld [vmem:[%s1 + $0x58] sm:$0xf]
  %v53 = vld [vmem:[%s1 + $0x5c] sm:$0xf]
  %v54 = vld [vmem:[%s1 + $0x60] sm:$0xf]
  %v55 = vld [vmem:[%s1 + $0x64] sm:$0xf]
  %v56 = vld [vmem:[%s1 + $0x68] sm:$0xf]
  %v57 = vld [vmem:[%s1 + $0x6c] sm:$0xf]
  %v58 = vld [vmem:[%s1 + $0x70] sm:$0xf]
  %v59 = vld [vmem:[%s1 + $0x74] sm:$0xf]
  %v60 = vld [vmem:[%s1 + $0x78] sm:$0xf]
  %v61 = vld [vmem:[%s1 + $0x7c] sm:$0xf]
  %v62 = vld [vmem:[%s1 + $0x80] sm:$0xf]
  %v63 = vld [vmem:[%s1 + $0x84] sm:$0xf]
  %v64 = vld [vmem:[%s1 + $0x88] sm:$0xf]
  %v65 = vld [vmem:[%s1 + $0x8c] sm:$0xf]
  %v66 = vld [vmem:[%s1 + $0x90] sm:$0xf]
  %v67 = vld [vmem:[%s1 + $0x94] sm:$0xf]
  %v68 = vld [vmem:[%s1 + $0x98] sm:$0xf]
  %v69 = vld [vmem:[%s1 + $0x9c] sm:$0xf]
  %v70 = vld [vmem:[%s1 + $0xa0] sm:$0xf]
  %v71 = vld [vmem:[%s1 + $0xa4] sm:$0xf]
  %v72 = vld [vmem:[%s1 + $0xa8] sm:$0xf]
  %v73 = vld [vmem:[%s1 + $0xac] sm:$0xf]
  %v74 = vld [vmem:[%s1 + $0xb0] sm:$0xf]
  %v75 = vld [vmem:[%s1 + $0xb4] sm:$0xf]
  %v76 = vld [vmem:[%s1 + $0xb8] sm:$0xf]
  %v77 = vld [vmem:[%s1 + $0xbc] sm:$0xf]
  %v78 = vld [vmem:[%s1 + $0xc0] sm:$0xf]
  %v79 = vld [vmem:[%s1 + $0xc4] sm:$0xf]
  %v80 = vld [vmem:[%s1 + $0xc8] sm:$0xf]
  %v81 = vld [vmem:[%s1 + $0xcc] sm:$0xf]
  %v82 = vld [vmem:[%s1 + $0xd0] sm:$0xf]
  %v83 = vld [vmem:[%s1 + $0xd4] sm:$0xf]
  %v84 = vld [vmem:[%s1 + $0xd8] sm:$0xf]
  %v85 = vld [vmem:[%s1 + $0xdc] sm:$0xf]
  %v86 = vld [vmem:[%s1 + $0xe0] sm:$0xf]
  %v87 = vld [vmem:[%s1 + $0xe4] sm:$0xf]
  %v88 = vld [vmem:[%s1 + $0xe8] sm:$0xf]
  %v89 = vld [vmem:[%s1 + $0xec] sm:$0xf]
  %v90 = vld [vmem:[%s1 + $0xf0] sm:$0xf]
  %v91 = vld [vmem:[%s1 + $0xf4] sm:$0xf]
  %v92 = vld [vmem:[%s1 + $0xf8] sm:$0xf]
  %v93 = vld [vmem:[%s1 + $0xfc] sm:$0xf]
  %v94 = vld [vmem:[%s1 + $0x100] sm:$0xf]
  %v95 = vld [vmem:[%s1 + $0x104] sm:$0xf]
  %v96 = vld [vmem:[%s1 + $0x108] sm:$0xf]
  %v97 = vld [vmem:[%s1 + $0x10c] sm:$0xf]
  %v98 = vld [vmem:[%s1 + $0x110] sm:$0xf]
  %v99 = vld [vmem:[%s1 + $0x114] sm:$0xf]
  %v100 = vld [vmem:[%s1 + $0x118] sm:$0xf]
  %v101 = vld [vmem:[%s1 + $0x11c] sm:$0xf]
  %v102 = vld [vmem:[%s1 + $0x120] sm:$0xf]
  %v103 = vld [vmem:[%s1 + $0x124] sm:$0xf]
  %v104 = vld [vmem:[%s1 + $0x128] sm:$0xf]
  %v105 = vld [vmem:[%s1 + $0x12c] sm:$0xf]
  %v106 = vld [vmem:[%s1 + $0x130] sm:$0xf]
  %v107 = vld [vmem:[%s1 + $0x134] sm:$0xf]
  %v108 = vld [vmem:[%s1 + $0x138] sm:$0xf]
  %v109 = vld [vmem:[%s1 + $0x13c] sm:$0xf]
  %v110 = vld [vmem:[%s1 + $0x140] sm:$0xf]
  %v111 = vld [vmem:[%s1 + $0x144] sm:$0xf]
  %v112 = vld [vmem:[%s1 + $0x148] sm:$0xf]
  %v113 = vld [vmem:[%s1 + $0x14c] sm:$0xf]
  %v114 = vld [vmem:[%s1 + $0x150] sm:$0xf]
  %v115 = vld [vmem:[%s1 + $0x154] sm:$0xf]
  %v116 = vld [vmem:[%s1 + $0x158] sm:$0xf]
  %v117 = vld [vmem:[%s1 + $0x15c] sm:$0xf]
  %v118 = vld [vmem:[%s1 + $0x160] sm:$0xf]
  %v119 = vld [vmem:[%s1 + $0x164] sm:$0xf]
  %v120 = vld [vmem:[%s1 + $0x168] sm:$0xf]
  %v121 = vld [vmem:[%s1 + $0x16c] sm:$0xf]
  %v122 = vld [vmem:[%s1 + $0x170] sm:$0xf]
  %v123 = vld [vmem:[%s1 + $0x174] sm:$0xf]
  %v124 = vld [vmem:[%s1 + $0x178] sm:$0xf]
  %v125 = vld [vmem:[%s1 + $0x17c] sm:$0xf]
  %v126 = vld [vmem:[%s1 + $0x180] sm:$0xf]
  %v127 = vld [vmem:[%s1 + $0x184] sm:$0xf]
  %v128 = vld [vmem:[%s1 + $0x188] sm:$0xf]
  %v129 = vld [vmem:[%s1 + $0x18c] sm:$0xf]
  %v130 = vld [vmem:[%s1 + $0x190] sm:$0xf]
  %v131 = vld [vmem:[%s1 + $0x194] sm:$0xf]
  %v132 = vld [vmem:[%s1 + $0x198] sm:$0xf]
  %v133 = vld [vmem:[%s1 + $0x19c] sm:$0xf]
  %v134 = vld [vmem:[%s1 + $0x1a0] sm:$0xf]
  %v135 = vld [vmem:[%s1 + $0x1a4] sm:$0xf]
  %v136 = vld [vmem:[%s1 + $0x1a8] sm:$0xf]
  %v137 = vld [vmem:[%s1 + $0x1ac] sm:$0xf]
  %v138 = vld [vmem:[%s1 + $0x1b0] sm:$0xf]
  %v139 = vld [vmem:[%s1 + $0x1b4] sm:$0xf]
  %v140 = vld [vmem:[%s1 + $0x1b8] sm:$0xf]
  %v141 = vld [vmem:[%s1 + $0x1bc] sm:$0xf]
  %v142 = vld [vmem:[%s1 + $0x1c0] sm:$0xf]
  %v143 = vld [vmem:[%s1 + $0x1c4] sm:$0xf]
  %v144 = vld [vmem:[%s1 + $0x1c8] sm:$0xf]
  %v145 = vld [vmem:[%s1 + $0x1cc] sm:$0xf]
  %v146 = vld [vmem:[%s1 + $0x1d0] sm:$0xf]
  %v147 = vld [vmem:[%s1 + $0x1d4] sm:$0xf]
  %v148 = vld [vmem:[%s1 + $0x1d8] sm:$0xf]
  %v149 = vld [vmem:[%s1 + $0x1dc] sm:$0xf]
  %v150 = vld [vmem:[%s1 + $0x1e0] sm:$0xf]
  %v151 = vld [vmem:[%s1 + $0x1e4] sm:$0xf]
  %v152 = vld [vmem:[%s1 + $0x1e8] sm:$0xf]
  %v153 = vld [vmem:[%s1 + $0x1ec] sm:$0xf]
  %v154 = vld [vmem:[%s1 + $0x1f0] sm:$0xf]
  %v155 = vld [vmem:[%s1 + $0x1f4] sm:$0xf]
  %v156 = vld [vmem:[%s1 + $0x1f8] sm:$0xf]
  %v157 = vld [vmem:[%s1 + $0x1fc] sm:$0xf]
  %v162 = vunpack.c.l.b16 %v26
  %v163 = vunpack.c.h.b16 %v26
  %v164 = vunpack.c.l.b16 %v27
  %v165 = vunpack.c.h.b16 %v27
  %v166 = vunpack.c.l.b16 %v28
  %v167 = vunpack.c.h.b16 %v28
  %v168 = vunpack.c.l.b16 %v29
  %v169 = vunpack.c.h.b16 %v29
  %v170 = vpack.c.b16 %v162, %v162
  %v171 = vpack.c.b16 %v163, %v163
  %v172 = vpack.c.b16 %v164, %v164
  %v173 = vpack.c.b16 %v165, %v165
  %v174 = vpack.c.b16 %v166, %v166
  %v175 = vpack.c.b16 %v167, %v167
  %v176 = vpack.c.b16 %v168, %v168
  %v177 = vpack.c.b16 %v169, %v169
  %v314 = vunpack.c.l.b16 %v30
  %v315 = vunpack.c.l.b16 %v31
  %v316 = vunpack.c.l.b16 %v32
  %v317 = vunpack.c.l.b16 %v33
  %v318 = vunpack.c.l.b16 %v34
  %v319 = vunpack.c.l.b16 %v35
  %v320 = vunpack.c.l.b16 %v36
  %v321 = vunpack.c.l.b16 %v37
  %v322 = vunpack.c.l.b16 %v38
  %v323 = vunpack.c.l.b16 %v39
  %v324 = vunpack.c.l.b16 %v40
  %v325 = vunpack.c.l.b16 %v41
  %v326 = vunpack.c.l.b16 %v42
  %v327 = vunpack.c.l.b16 %v43
  %v328 = vunpack.c.l.b16 %v44
  %v329 = vunpack.c.l.b16 %v45
  %v330 = vunpack.c.l.b16 %v46
  %v331 = vunpack.c.l.b16 %v47
  %v332 = vunpack.c.l.b16 %v48
  %v333 = vunpack.c.l.b16 %v49
  %v334 = vunpack.c.l.b16 %v50
  %v335 = vunpack.c.l.b16 %v51
  %v336 = vunpack.c.l.b16 %v52
  %v337 = vunpack.c.l.b16 %v53
  %v338 = vunpack.c.l.b16 %v54
  %v339 = vunpack.c.l.b16 %v55
  %v340 = vunpack.c.l.b16 %v56
  %v341 = vunpack.c.l.b16 %v57
  %v342 = vunpack.c.l.b16 %v58
  %v343 = vunpack.c.l.b16 %v59
  %v344 = vunpack.c.l.b16 %v60
  %v345 = vunpack.c.l.b16 %v61
  %v346 = vunpack.c.l.b16 %v62
  %v347 = vunpack.c.l.b16 %v63
  %v348 = vunpack.c.l.b16 %v64
  %v349 = vunpack.c.l.b16 %v65
  %v350 = vunpack.c.l.b16 %v66
  %v351 = vunpack.c.l.b16 %v67
  %v352 = vunpack.c.l.b16 %v68
  %v353 = vunpack.c.l.b16 %v69
  %v354 = vunpack.c.l.b16 %v70
  %v355 = vunpack.c.l.b16 %v71
  %v356 = vunpack.c.l.b16 %v72
  %v357 = vunpack.c.l.b16 %v73
  %v358 = vunpack.c.l.b16 %v74
  %v359 = vunpack.c.l.b16 %v75
  %v360 = vunpack.c.l.b16 %v76
  %v361 = vunpack.c.l.b16 %v77
  %v362 = vunpack.c.l.b16 %v78
  %v363 = vunpack.c.l.b16 %v79
  %v364 = vunpack.c.l.b16 %v80
  %v365 = vunpack.c.l.b16 %v81
  %v366 = vunpack.c.l.b16 %v82
  %v367 = vunpack.c.l.b16 %v83
  %v368 = vunpack.c.l.b16 %v84
  %v369 = vunpack.c.l.b16 %v85
  %v370 = vunpack.c.l.b16 %v86
  %v371 = vunpack.c.l.b16 %v87
  %v372 = vunpack.c.l.b16 %v88
  %v373 = vunpack.c.l.b16 %v89
  %v374 = vunpack.c.l.b16 %v90
  %v375 = vunpack.c.l.b16 %v91
  %v376 = vunpack.c.l.b16 %v92
  %v377 = vunpack.c.l.b16 %v93
  %v378 = vunpack.c.l.b16 %v94
  %v379 = vunpack.c.l.b16 %v95
  %v380 = vunpack.c.l.b16 %v96
  %v381 = vunpack.c.l.b16 %v97
  %v382 = vunpack.c.l.b16 %v98
  %v383 = vunpack.c.l.b16 %v99
  %v384 = vunpack.c.l.b16 %v100
  %v385 = vunpack.c.l.b16 %v101
  %v386 = vunpack.c.l.b16 %v102
  %v387 = vunpack.c.l.b16 %v103
  %v388 = vunpack.c.l.b16 %v104
  %v389 = vunpack.c.l.b16 %v105
  %v390 = vunpack.c.l.b16 %v106
  %v391 = vunpack.c.l.b16 %v107
  %v392 = vunpack.c.l.b16 %v108
  %v393 = vunpack.c.l.b16 %v109
  %v394 = vunpack.c.l.b16 %v110
  %v395 = vunpack.c.l.b16 %v111
  %v396 = vunpack.c.l.b16 %v112
  %v397 = vunpack.c.l.b16 %v113
  %v398 = vunpack.c.l.b16 %v114
  %v399 = vunpack.c.l.b16 %v115
  %v400 = vunpack.c.l.b16 %v116
  %v401 = vunpack.c.l.b16 %v117
  %v402 = vunpack.c.l.b16 %v118
  %v403 = vunpack.c.l.b16 %v119
  %v404 = vunpack.c.l.b16 %v120
  %v405 = vunpack.c.l.b16 %v121
  %v406 = vunpack.c.l.b16 %v122
  %v407 = vunpack.c.l.b16 %v123
  %v408 = vunpack.c.l.b16 %v124
  %v409 = vunpack.c.l.b16 %v125
  %v410 = vunpack.c.l.b16 %v126
  %v411 = vunpack.c.l.b16 %v127
  %v412 = vunpack.c.l.b16 %v128
  %v413 = vunpack.c.l.b16 %v129
  %v414 = vunpack.c.l.b16 %v130
  %v415 = vunpack.c.l.b16 %v131
  %v416 = vunpack.c.l.b16 %v132
  %v417 = vunpack.c.l.b16 %v133
  %v418 = vunpack.c.l.b16 %v134
  %v419 = vunpack.c.l.b16 %v135
  %v420 = vunpack.c.l.b16 %v136
  %v421 = vunpack.c.l.b16 %v137
  %v422 = vunpack.c.l.b16 %v138
  %v423 = vunpack.c.l.b16 %v139
  %v424 = vunpack.c.l.b16 %v140
  %v425 = vunpack.c.l.b16 %v141
  %v426 = vunpack.c.l.b16 %v142
  %v427 = vunpack.c.l.b16 %v143
  %v428 = vunpack.c.l.b16 %v144
  %v429 = vunpack.c.l.b16 %v145
  %v430 = vunpack.c.l.b16 %v146
  %v431 = vunpack.c.l.b16 %v147
  %v432 = vunpack.c.l.b16 %v148
  %v433 = vunpack.c.l.b16 %v149
  %v434 = vunpack.c.l.b16 %v150
  %v435 = vunpack.c.l.b16 %v151
  %v436 = vunpack.c.l.b16 %v152
  %v437 = vunpack.c.l.b16 %v153
  %v438 = vunpack.c.l.b16 %v154
  %v439 = vunpack.c.l.b16 %v155
  %v440 = vunpack.c.l.b16 %v156
  %v441 = vunpack.c.l.b16 %v157
  %v442 = vpack.c.b16 %v315, %v314
  %v443 = vpack.c.b16 %v317, %v316
  %v444 = vpack.c.b16 %v319, %v318
  %v445 = vpack.c.b16 %v321, %v320
  %v446 = vpack.c.b16 %v323, %v322
  %v447 = vpack.c.b16 %v325, %v324
  %v448 = vpack.c.b16 %v327, %v326
  %v449 = vpack.c.b16 %v329, %v328
  %v450 = vpack.c.b16 %v331, %v330
  %v451 = vpack.c.b16 %v333, %v332
  %v452 = vpack.c.b16 %v335, %v334
  %v453 = vpack.c.b16 %v337, %v336
  %v454 = vpack.c.b16 %v339, %v338
  %v455 = vpack.c.b16 %v341, %v340
  %v456 = vpack.c.b16 %v343, %v342
  %v457 = vpack.c.b16 %v345, %v344
  %v458 = vpack.c.b16 %v347, %v346
  %v459 = vpack.c.b16 %v349, %v348
  %v460 = vpack.c.b16 %v351, %v350
  %v461 = vpack.c.b16 %v353, %v352
  %v462 = vpack.c.b16 %v355, %v354
  %v463 = vpack.c.b16 %v357, %v356
  %v464 = vpack.c.b16 %v359, %v358
  %v465 = vpack.c.b16 %v361, %v360
  %v466 = vpack.c.b16 %v363, %v362
  %v467 = vpack.c.b16 %v365, %v364
  %v468 = vpack.c.b16 %v367, %v366
  %v469 = vpack.c.b16 %v369, %v368
  %v470 = vpack.c.b16 %v371, %v370
  %v471 = vpack.c.b16 %v373, %v372
  %v472 = vpack.c.b16 %v375, %v374
  %v473 = vpack.c.b16 %v377, %v376
  %v474 = vpack.c.b16 %v379, %v378
  %v475 = vpack.c.b16 %v381, %v380
  %v476 = vpack.c.b16 %v383, %v382
  %v477 = vpack.c.b16 %v385, %v384
  %v478 = vpack.c.b16 %v387, %v386
  %v479 = vpack.c.b16 %v389, %v388
  %v480 = vpack.c.b16 %v391, %v390
  %v481 = vpack.c.b16 %v393, %v392
  %v482 = vpack.c.b16 %v395, %v394
  %v483 = vpack.c.b16 %v397, %v396
  %v484 = vpack.c.b16 %v399, %v398
  %v485 = vpack.c.b16 %v401, %v400
  %v486 = vpack.c.b16 %v403, %v402
  %v487 = vpack.c.b16 %v405, %v404
  %v488 = vpack.c.b16 %v407, %v406
  %v489 = vpack.c.b16 %v409, %v408
  %v490 = vpack.c.b16 %v411, %v410
  %v491 = vpack.c.b16 %v413, %v412
  %v492 = vpack.c.b16 %v415, %v414
  %v493 = vpack.c.b16 %v417, %v416
  %v494 = vpack.c.b16 %v419, %v418
  %v495 = vpack.c.b16 %v421, %v420
  %v496 = vpack.c.b16 %v423, %v422
  %v497 = vpack.c.b16 %v425, %v424
  %v498 = vpack.c.b16 %v427, %v426
  %v499 = vpack.c.b16 %v429, %v428
  %v500 = vpack.c.b16 %v431, %v430
  %v501 = vpack.c.b16 %v433, %v432
  %v502 = vpack.c.b16 %v435, %v434
  %v503 = vpack.c.b16 %v437, %v436
  %v504 = vpack.c.b16 %v439, %v438
  %v505 = vpack.c.b16 %v441, %v440
  %570 = vmatprep.subr.bf16.mxu0 0
  %571 = vmatpush1.bf16.msra.mxu0 %v442
  %572 = vmatprep.subr.bf16.mxu0 0
  %573 = vmatpush1.bf16.msra.mxu0 %v443
  %574 = vmatprep.subr.bf16.mxu0 0
  %575 = vmatpush1.bf16.msra.mxu0 %v444
  %576 = vmatprep.subr.bf16.mxu0 0
  %577 = vmatpush1.bf16.msra.mxu0 %v445
  %578 = vmatprep.subr.bf16.mxu0 0
  %579 = vmatpush1.bf16.msra.mxu0 %v446
  %580 = vmatprep.subr.bf16.mxu0 0
  %581 = vmatpush1.bf16.msra.mxu0 %v447
  %582 = vmatprep.subr.bf16.mxu0 0
  %583 = vmatpush1.bf16.msra.mxu0 %v448
  %584 = vmatprep.subr.bf16.mxu0 0
  %585 = vmatpush1.bf16.msra.mxu0 %v449
  %586 = vmatprep.subr.bf16.mxu0 0
  %587 = vmatpush1.bf16.msra.mxu0 %v450
  %588 = vmatprep.subr.bf16.mxu0 0
  %589 = vmatpush1.bf16.msra.mxu0 %v451
  %590 = vmatprep.subr.bf16.mxu0 0
  %591 = vmatpush1.bf16.msra.mxu0 %v452
  %592 = vmatprep.subr.bf16.mxu0 0
  %593 = vmatpush1.bf16.msra.mxu0 %v453
  %594 = vmatprep.subr.bf16.mxu0 0
  %595 = vmatpush1.bf16.msra.mxu0 %v454
  %596 = vmatprep.subr.bf16.mxu0 0
  %597 = vmatpush1.bf16.msra.mxu0 %v455
  %598 = vmatprep.subr.bf16.mxu0 0
  %599 = vmatpush1.bf16.msra.mxu0 %v456
  %600 = vmatprep.subr.bf16.mxu0 0
  %601 = vmatpush1.bf16.msra.mxu0 %v457
  %602 = vmatprep.mubr.bf16.mxu0 %v171
  %603 = vmatmul.mubr.bf16.gmra.mrb[0].mxu0 %v170
  %v604 = vpop.f32.mrb[0].mxu0
  %v605 = vadd.f32 0.0, %v604
  %v606 = vpop.f32.mrb[0].mxu0
  %v607 = vpop.f32.mrb[0].mxu0
  %v608 = vpop.f32.mrb[0].mxu0
  %609 = vdwg.mxu0
  %610 = vmatprep.subr.bf16.mxu0 0
  %611 = vmatpush1.bf16.msra.mxu0 %v458
  %612 = vmatprep.subr.bf16.mxu0 0
  %613 = vmatpush1.bf16.msra.mxu0 %v459
  %614 = vmatprep.subr.bf16.mxu0 0
  %615 = vmatpush1.bf16.msra.mxu0 %v460
  %616 = vmatprep.subr.bf16.mxu0 0
  %617 = vmatpush1.bf16.msra.mxu0 %v461
  %618 = vmatprep.subr.bf16.mxu0 0
  %619 = vmatpush1.bf16.msra.mxu0 %v462
  %620 = vmatprep.subr.bf16.mxu0 0
  %621 = vmatpush1.bf16.msra.mxu0 %v463
  %622 = vmatprep.subr.bf16.mxu0 0
  %623 = vmatpush1.bf16.msra.mxu0 %v464
  %624 = vmatprep.subr.bf16.mxu0 0
  %625 = vmatpush1.bf16.msra.mxu0 %v465
  %626 = vmatprep.subr.bf16.mxu0 0
  %627 = vmatpush1.bf16.msra.mxu0 %v466
  %628 = vmatprep.subr.bf16.mxu0 0
  %629 = vmatpush1.bf16.msra.mxu0 %v467
  %630 = vmatprep.subr.bf16.mxu0 0
  %631 = vmatpush1.bf16.msra.mxu0 %v468
  %632 = vmatprep.subr.bf16.mxu0 0
  %633 = vmatpush1.bf16.msra.mxu0 %v469
  %634 = vmatprep.subr.bf16.mxu0 0
  %635 = vmatpush1.bf16.msra.mxu0 %v470
  %636 = vmatprep.subr.bf16.mxu0 0
  %637 = vmatpush1.bf16.msra.mxu0 %v471
  %638 = vmatprep.subr.bf16.mxu0 0
  %639 = vmatpush1.bf16.msra.mxu0 %v472
  %640 = vmatprep.subr.bf16.mxu0 0
  %641 = vmatpush1.bf16.msra.mxu0 %v473
  %642 = vmatprep.mubr.bf16.mxu0 %v173
  %643 = vmatmul.mubr.bf16.gmra.mrb[0].mxu0 %v172
  %v644 = vpop.f32.mrb[0].mxu0
  %v645 = vadd.f32 %v605, %v644
  %v646 = vpop.f32.mrb[0].mxu0
  %v647 = vpop.f32.mrb[0].mxu0
  %v648 = vpop.f32.mrb[0].mxu0
  %649 = vdwg.mxu0
  %650 = vmatprep.subr.bf16.mxu0 0
  %651 = vmatpush1.bf16.msra.mxu0 %v474
  %652 = vmatprep.subr.bf16.mxu0 0
  %653 = vmatpush1.bf16.msra.mxu0 %v475
  %654 = vmatprep.subr.bf16.mxu0 0
  %655 = vmatpush1.bf16.msra.mxu0 %v476
  %656 = vmatprep.subr.bf16.mxu0 0
  %657 = vmatpush1.bf16.msra.mxu0 %v477
  %658 = vmatprep.subr.bf16.mxu0 0
  %659 = vmatpush1.bf16.msra.mxu0 %v478
  %660 = vmatprep.subr.bf16.mxu0 0
  %661 = vmatpush1.bf16.msra.mxu0 %v479
  %662 = vmatprep.subr.bf16.mxu0 0
  %663 = vmatpush1.bf16.msra.mxu0 %v480
  %664 = vmatprep.subr.bf16.mxu0 0
  %665 = vmatpush1.bf16.msra.mxu0 %v481
  %666 = vmatprep.subr.bf16.mxu0 0
  %667 = vmatpush1.bf16.msra.mxu0 %v482
  %668 = vmatprep.subr.bf16.mxu0 0
  %669 = vmatpush1.bf16.msra.mxu0 %v483
  %670 = vmatprep.subr.bf16.mxu0 0
  %671 = vmatpush1.bf16.msra.mxu0 %v484
  %672 = vmatprep.subr.bf16.mxu0 0
  %673 = vmatpush1.bf16.msra.mxu0 %v485
  %674 = vmatprep.subr.bf16.mxu0 0
  %675 = vmatpush1.bf16.msra.mxu0 %v486
  %676 = vmatprep.subr.bf16.mxu0 0
  %677 = vmatpush1.bf16.msra.mxu0 %v487
  %678 = vmatprep.subr.bf16.mxu0 0
  %679 = vmatpush1.bf16.msra.mxu0 %v488
  %680 = vmatprep.subr.bf16.mxu0 0
  %681 = vmatpush1.bf16.msra.mxu0 %v489
  %682 = vmatprep.mubr.bf16.mxu0 %v175
  %683 = vmatmul.mubr.bf16.gmra.mrb[0].mxu0 %v174
  %v684 = vpop.f32.mrb[0].mxu0
  %v685 = vadd.f32 %v645, %v684
  %v686 = vpop.f32.mrb[0].mxu0
  %v687 = vpop.f32.mrb[0].mxu0
  %v688 = vpop.f32.mrb[0].mxu0
  %689 = vdwg.mxu0
  %690 = vmatprep.subr.bf16.mxu0 0
  %691 = vmatpush1.bf16.msra.mxu0 %v490
  %692 = vmatprep.subr.bf16.mxu0 0
  %693 = vmatpush1.bf16.msra.mxu0 %v491
  %694 = vmatprep.subr.bf16.mxu0 0
  %695 = vmatpush1.bf16.msra.mxu0 %v492
  %696 = vmatprep.subr.bf16.mxu0 0
  %697 = vmatpush1.bf16.msra.mxu0 %v493
  %698 = vmatprep.subr.bf16.mxu0 0
  %699 = vmatpush1.bf16.msra.mxu0 %v494
  %700 = vmatprep.subr.bf16.mxu0 0
  %701 = vmatpush1.bf16.msra.mxu0 %v495
  %702 = vmatprep.subr.bf16.mxu0 0
  %703 = vmatpush1.bf16.msra.mxu0 %v496
  %704 = vmatprep.subr.bf16.mxu0 0
  %705 = vmatpush1.bf16.msra.mxu0 %v497
  %706 = vmatprep.subr.bf16.mxu0 0
  %707 = vmatpush1.bf16.msra.mxu0 %v498
  %708 = vmatprep.subr.bf16.mxu0 0
  %709 = vmatpush1.bf16.msra.mxu0 %v499
  %710 = vmatprep.subr.bf16.mxu0 0
  %711 = vmatpush1.bf16.msra.mxu0 %v500
  %712 = vmatprep.subr.bf16.mxu0 0
  %713 = vmatpush1.bf16.msra.mxu0 %v501
  %714 = vmatprep.subr.bf16.mxu0 0
  %715 = vmatpush1.bf16.msra.mxu0 %v502
  %716 = vmatprep.subr.bf16.mxu0 0
  %717 = vmatpush1.bf16.msra.mxu0 %v503
  %718 = vmatprep.subr.bf16.mxu0 0
  %719 = vmatpush1.bf16.msra.mxu0 %v504
  %720 = vmatprep.subr.bf16.mxu0 0
  %721 = vmatpush1.bf16.msra.mxu0 %v505
  %722 = vmatprep.mubr.bf16.mxu0 %v177
  %723 = vmatmul.mubr.bf16.gmra.mrb[0].mxu0 %v176
  %v724 = vpop.f32.mrb[0].mxu0
  %v725 = vadd.f32 %v685, %v724
  %v726 = vpop.f32.mrb[0].mxu0
  %v727 = vpop.f32.mrb[0].mxu0
  %v728 = vpop.f32.mrb[0].mxu0
  %729 = vdwg.mxu0
  %v730 = vrot.slane %v725, 4
  %v731 = vadd.f32 %v725, %v730
  %v732 = vrot.slane %v731, 2
  %v733 = vadd.f32 %v731, %v732
  %v734 = vrot.slane %v733, 1
  %v735 = vadd.f32 %v733, %v734
  %v736 = vmul.f32 %v725, %v725
  %v737 = vrot.slane %v736, 4
  %v738 = vadd.f32 %v736, %v737
  %v739 = vrot.slane %v738, 2
  %v740 = vadd.f32 %v738, %v739
  %v741 = vrot.slane %v740, 1
  %v742 = vadd.f32 %v740, %v741
  %v743 = vmul.f32 %v735, 0.125
  %v744 = vmul.f32 %v742, 0.125
  %v745 = vmul.f32 %v743, %v743
  %v746 = vsub.f32 %v744, %v745
  %v747 = vmax.f32 %v746, 0.0
  %v748 = vld [vmem:[%s2] sm:$0x1]
  %v749 = vadd.f32 %v747, 1e-05
  %v750 = vrsqrt.pop %v749
  %v751 = vmul.f32 %v748, %v750
  %v752 = vld [vmem:[%s3] sm:$0x1]
  %v753 = vmul.f32 %v743, %v751
  %v754 = vsub.f32 %v752, %v753
  %v756 = vlaneseq
  %v757 = vshrl.u32 %v756, 7
  %v758 = vsub.s32 0, %v757
  %v759 = vrot.slane %v751, %v758
  %v761 = vmul.f32 %v725, %v759
  %v763 = vlaneseq
  %v764 = vshrl.u32 %v763, 7
  %v765 = vsub.s32 0, %v764
  %v766 = vrot.slane %v754, %v765
  %v768 = vadd.f32 %v761, %v766
  %v769 = vmul.f32 %v768, 0.2
  %v770 = vmax.f32 %v768, %v769
  %v771 = vld [vmem:[%s4] sm:$0xff]
  %v772 = vmul.f32 %v770, %v771
  %v773 = vlaneseq
  %v774 = vand.u32 %v773, 127
  %v775 = vlaneseq
  %v776 = vshrl.u32 %v775, 7
  %v777 = vmul.u32 %v776, 4
  %vm778 = vcmp.ge.s32.totalorder %v774, %v777
  %v779 = vadd.s32 %v776, 1
  %v780 = vmul.u32 %v779, 4
  %vm781 = vcmp.lt.s32.totalorder %v774, %v780
  %vm782 = vmand %vm778, %vm781
  %v783 = vsel %vm782, 1, 0
  %v784 = vcvt.s32.f32 %v783
  %vm785 = vcmask 64512
  %v787 = vsel %vm785, %v784, 0
  %789 = vmatprep.subr.mxu0 0.0
  %790 = vmatpush1.msra.mxu0 %v772
  %791 = vmatprep.subr.mxu0 0.0
  %792 = vmatpush1.msra.mxu0 0.0
  %793 = vmatprep.subr.mxu0 0.0
  %794 = vmatpush1.msra.mxu0 0.0
  %795 = vmatprep.subr.mxu0 0.0
  %796 = vmatpush1.msra.mxu0 0.0
  %797 = vmatprep.subr.mxu0 0.0
  %798 = vmatpush1.msra.mxu0 0.0
  %799 = vmatprep.subr.mxu0 0.0
  %800 = vmatpush1.msra.mxu0 0.0
  %801 = vmatprep.subr.mxu0 0.0
  %802 = vmatpush1.msra.mxu0 0.0
  %803 = vmatprep.subr.mxu0 0.0
  %804 = vmatpush1.msra.mxu0 0.0
  %805 = vmatprep.subr.mxu0 0.0
  %806 = vmatpush1.msra.mxu0 0.0
  %807 = vmatprep.subr.mxu0 0.0
  %808 = vmatpush1.msra.mxu0 0.0
  %809 = vmatprep.subr.mxu0 0.0
  %810 = vmatpush1.msra.mxu0 0.0
  %811 = vmatprep.subr.mxu0 0.0
  %812 = vmatpush1.msra.mxu0 0.0
  %813 = vmatprep.subr.mxu0 0.0
  %814 = vmatpush1.msra.mxu0 0.0
  %815 = vmatprep.subr.mxu0 0.0
  %816 = vmatpush1.msra.mxu0 0.0
  %817 = vmatprep.subr.mxu0 0.0
  %818 = vmatpush1.msra.mxu0 0.0
  %819 = vmatprep.subr.mxu0 0.0
  %820 = vmatpush1.msra.mxu0 0.0
  %821 = vmatprep.subr.mxu0 0.0
  %822 = vmatpush1.msra.mxu0 0.0
  %823 = vmatprep.subr.mxu0 0.0
  %824 = vmatpush1.msra.mxu0 0.0
  %825 = vmatprep.subr.mxu0 0.0
  %826 = vmatpush1.msra.mxu0 0.0
  %827 = vmatprep.subr.mxu0 0.0
  %828 = vmatpush1.msra.mxu0 0.0
  %829 = vmatprep.subr.mxu0 0.0
  %830 = vmatpush1.msra.mxu0 0.0
  %831 = vmatprep.subr.mxu0 0.0
  %832 = vmatpush1.msra.mxu0 0.0
  %833 = vmatprep.subr.mxu0 0.0
  %834 = vmatpush1.msra.mxu0 0.0
  %835 = vmatprep.subr.mxu0 0.0
  %836 = vmatpush1.msra.mxu0 0.0
  %837 = vmatprep.subr.mxu0 0.0
  %838 = vmatpush1.msra.mxu0 0.0
  %839 = vmatprep.subr.mxu0 0.0
  %840 = vmatpush1.msra.mxu0 0.0
  %841 = vmatprep.subr.mxu0 0.0
  %842 = vmatpush1.msra.mxu0 0.0
  %843 = vmatprep.subr.mxu0 0.0
  %844 = vmatpush1.msra.mxu0 0.0
  %845 = vmatprep.subr.mxu0 0.0
  %846 = vmatpush1.msra.mxu0 0.0
  %847 = vmatprep.subr.mxu0 0.0
  %848 = vmatpush1.msra.mxu0 0.0
  %849 = vmatprep.subr.mxu0 0.0
  %850 = vmatpush1.msra.mxu0 0.0
  %851 = vmatprep.subr.mxu0 0.0
  %852 = vmatpush1.msra.mxu0 0.0
  %853 = vmatprep.mubr.f32.mxu0 0.0
  %854 = vmatmul.mubr.f32.gmra.mrb[0].mxu0 %v787
  %v855 = vpop.f32.mrb[0].mxu0
  %v856 = vadd.f32 0.0, %v855
  %v857 = vpop.f32.mrb[0].mxu0
  %858 = vdwg.mxu0
  %vm859 = vcmask 1041408
  %v860 = vsel %vm859, %v856, 0.0
  %861 = vadd.xlane.f32.xlu0 %v860
  %v862 = vpop.xlane.xlu0 %861
  %v863 = vld [vmem:[#allocation2] sm:$0x1]
  %v865 = vlaneseq
  %v866 = vshrl.u32 %v865, 7
  %v867 = vsub.s32 0, %v866
  %v868 = vrot.slane %v863, %v867
  %v870 = vadd.f32 %v862, %v868
  %vm871 = vcmask 1024
  %872 = vst.msk [vmem:[%s6] sm:$0x3] %vm871, %v870
  // Predicated region
  $region26: #{discriminator_forward.7} parent=0 // pred_check
    _
  $region27: #{discriminator_forward.7} parent=0 // pred_check_branch
    %874 = sbr.rel (0) target = $region29
  $region28: #{discriminator_forward.7} parent=0 // pred_region
    _
  $region29: #{discriminator_forward.7} parent=0 // pred_fallthru
    _
  // Predicated region
  $region30: #{discriminator_forward.7} parent=0 // pred_check
    _
  $region31: #{discriminator_forward.7} parent=0 // pred_check_branch
    %876 = sbr.rel (0) target = $region33
  $region32: #{discriminator_forward.7} parent=0 // pred_region
    _
  $region33: #{discriminator_forward.7} parent=0 // pred_fallthru
    _

</llo_original>
